<compile_context>
chip_gen: v7x
topology: tpu7x:2x2x1
jax: 0.10.0
libtpu: 0.0.40
codegen_flags: <defaults>
</compile_context>

<pallas_src>
import functools

import numpy as np
import jax
import jax.numpy as jnp
from jax.experimental import pallas as pl
from jax.experimental.pallas import tpu as pltpu


# ==========================================================================
# Fused decoder conv stack kernel (netOne..netSix + all torch.cat's)
# ==========================================================================

def _stack_kernel(*refs, n_pieces, c0, c0pad, cfg):
    """refs = (piece_0..piece_{n-1}, w0,b0,...,w5,b5, feat_out, flow_out, xb).

    cfg = 6 x (cin_pad, cout, cout_pad, scratch_off|None, feat_off|None, leaky)
    (all static).

    xb is a bf16 VMEM scratch holding the growing feature map in a
    channel-prefix layout with a 1-px zero halo: every layer reads the
    lane-aligned prefix [0, cin_pad) and writes one aligned 128-ch segment.
    feat_out is the final tenFeat (= [o5,o4,o3,o2,o1,feat0]) written directly
    at its channel offsets -> single lane-dense output, no XLA concat after.
    """
    piece_refs = refs[:n_pieces]
    wb_refs = refs[n_pieces:n_pieces + 12]
    feat_ref = refs[n_pieces + 12]
    flow_ref = refs[n_pieces + 13]
    xb = refs[n_pieces + 14]                    # bf16 (1, H+2, W+2, CPAD)

    _, H, W, _ = flow_ref.shape
    M = H * W
    CPAD = xb.shape[-1]
    f0_off = feat_ref.shape[-1] - c0            # feat0 offset inside tenFeat

    # ---- zero only the 1-px halo ring + the feat0 channel-pad gap; the
    # interior 128-ch segments are fully overwritten before being read ----
    zrow = jnp.zeros((1, 1, W + 2, CPAD), xb.dtype)
    zcol = jnp.zeros((1, H, 1, CPAD), xb.dtype)
    xb[:, pl.ds(0, 1), :, :] = zrow
    xb[:, pl.ds(H + 1, 1), :, :] = zrow
    xb[:, pl.ds(1, H), pl.ds(0, 1), :] = zcol
    xb[:, pl.ds(1, H), pl.ds(W + 1, 1), :] = zcol
    if c0pad > c0:
        xb[:, pl.ds(1, H), pl.ds(1, W), pl.ds(c0, c0pad - c0)] = jnp.zeros(
            (1, H, W, c0pad - c0), xb.dtype)

    # ---- assemble feat0 in-kernel: pieces go straight to their tenFeat
    # channel offsets (exact f32 passthrough) and are read back once as a
    # single lane-aligned bf16 copy into the scratch prefix ----
    off = 0
    for p in range(n_pieces):
        wp = piece_refs[p].shape[-1]
        feat_ref[:, :, :, pl.ds(f0_off + off, wp)] = piece_refs[p][...]
        off += wp
    feat0 = feat_ref[:, :, :, pl.ds(f0_off, c0)]
    xb[:, pl.ds(1, H), pl.ds(1, W), pl.ds(0, c0)] = feat0.astype(jnp.bfloat16)

    # ---- conv stack ----
    for idx, (cin_pad, cout, cout_pad, s_off, f_off, leaky) in enumerate(cfg):
        w_ref = wb_refs[2 * idx]                # (9, cin_pad, cout_pad) bf16
        b_ref = wb_refs[2 * idx + 1]            # (1, cout_pad) f32
        acc = jnp.zeros((M, cout_pad), jnp.float32)
        for ky in range(3):
            for kx in range(3):
                # TODO(synk): the kx slice realigns sublanes (W+2 not
                # 8-aligned); an in-VMEM im2col / kx-pre-shifted copies would
                # cut the 9 realigned loads + MXU push/pops per layer to ~1.
                patch = xb[:, pl.ds(ky, H), pl.ds(kx, W), pl.ds(0, cin_pad)]
                acc = acc + jnp.dot(patch.reshape(M, cin_pad),
                                    w_ref[ky * 3 + kx],
                                    preferred_element_type=jnp.float32)
        acc = acc + b_ref[...]                  # f32 epilogue (v5e friendly)
        if leaky:
            acc = jnp.where(acc > 0.0, acc, 0.1 * acc)
        acc4 = acc.reshape(1, H, W, cout_pad)
        if f_off is not None:                   # netOne..netFiv -> tenFeat
            feat_ref[:, :, :, pl.ds(f_off, cout)] = acc4[..., :cout]
        else:                                   # netSix -> flow
            flow_ref[...] = acc4
        if s_off is not None:
            # cout padded to 128 -> the feeding segment store is a full,
            # lane-aligned 128-ch store (no masked tail, no stale garbage).
            xb[:, pl.ds(1, H), pl.ds(1, W), pl.ds(s_off, cout_pad)] = (
                acc4.astype(jnp.bfloat16))


# ==========================================================================
# Small matmul (+bias) kernel -- used by the merged sub-pixel transposed conv
# ==========================================================================

def _matmul_bias_kernel(x_ref, w_ref, b_ref, o_ref, *, leaky):
    acc = jnp.dot(x_ref[...], w_ref[...], preferred_element_type=jnp.float32)
    acc = acc + b_ref[...]
    if leaky:
        acc = jnp.where(acc > 0.0, acc, 0.1 * acc)
    o_ref[...] = acc


def _matmul_bias(x, w, b2d, *, leaky=False):
    M, K = x.shape
    _, N = w.shape
    return pl.pallas_call(
        functools.partial(_matmul_bias_kernel, leaky=leaky),
        out_shape=jax.ShapeDtypeStruct((M, N), jnp.float32),
        grid_spec=pltpu.PrefetchScalarGridSpec(
            num_scalar_prefetch=0,
            grid=(1,),
            in_specs=[pl.BlockSpec((M, K), lambda i: (0, 0)),
                      pl.BlockSpec((K, N), lambda i: (0, 0)),
                      pl.BlockSpec((1, N), lambda i: (0, 0))],
            out_specs=pl.BlockSpec((M, N), lambda i: (0, 0))),
        compiler_params=pltpu.CompilerParams(
            dimension_semantics=("arbitrary",)),
    )(x, w, b2d)


# ==========================================================================
# Correlation (max displacement 4 -> 81 channels) + fused LeakyReLU
# ==========================================================================

def _corr_kernel(one_ref, twop_ref, o_ref):
    _, H, W, C = one_ref.shape
    one = one_ref[...]
    inv_c = 1.0 / float(C)                # matches the reference CUDA package
    lane = jax.lax.broadcasted_iota(jnp.int32, (1, H, W, 81), 3)
    out = jnp.zeros((1, H, W, 81), jnp.float32)
    for dx in range(9):
        # hoist the (sublane-shifting) dx slice out of the dy loop
        slab = twop_ref[:, :, pl.ds(dx, W), :]          # (1, H+8, W, C)
        for dy in range(9):
            sh = slab[:, dy:dy + H, :, :]               # free-axis slice
            s = jnp.sum(one * sh, axis=-1, keepdims=True) * inv_c
            out = jnp.where(lane == (dy * 9 + dx), s, out)
    # ONE lane-dense store instead of 81 single-lane masked stores.
    o_ref[...] = jnp.where(out > 0.0, out, 0.1 * out)


def correlation_leaky(one, two):
    """one, two: (B,H,W,C) -> (B,H,W,81), leaky-relu'd, channels-last."""
    B, H, W, C = one.shape
    two_pad = jnp.pad(two, ((0, 0), (4, 4), (4, 4), (0, 0)))
    return pl.pallas_call(
        _corr_kernel,
        out_shape=jax.ShapeDtypeStruct((B, H, W, 81), jnp.float32),
        grid_spec=pltpu.PrefetchScalarGridSpec(
            num_scalar_prefetch=0,
            grid=(B,),
            in_specs=[pl.BlockSpec((1, H, W, C), lambda b: (b, 0, 0, 0)),
                      pl.BlockSpec((1, H + 8, W + 8, C),
                                   lambda b: (b, 0, 0, 0))],
            out_specs=pl.BlockSpec((1, H, W, 81), lambda b: (b, 0, 0, 0))),
        compiler_params=pltpu.CompilerParams(
            dimension_semantics=("parallel",)),
    )(one, two_pad)


# ==========================================================================
# ConvTranspose2d(k=4, s=2, p=1) via sub-pixel decomposition
# ==========================================================================
# Output (2i+a, 2j+b) is a 2x2 conv of the (pad-1) input with a fixed 2x2
# sub-filter of the 4x4 transposed kernel; the 4 sub-filters are packed into a
# single 3x3-tap weight of 4*Cout output channels, the im2col is done in XLA
# glue and the Pallas kernel is a single matmul.  upflow and upfeat share one
# call via a block-diagonal combined weight.

def _prep_deconv(w_t, b):
    """w_t: (Cin, Cout, 4, 4) torch layout -> ((9*Cin, 4*Cout) bf16, (1,4*Cout) f32)."""
    Cin, Cout = int(w_t.shape[0]), int(w_t.shape[1])
    # parity a (or b) -> {3x3 tap index ty : 4x4 kernel index ky}
    tap_map = {0: {0: 3, 1: 1}, 1: {1: 2, 2: 0}}
    wk = jnp.zeros((9, Cin, 4 * Cout), jnp.float32)
    for a in (0, 1):
        for bb in (0, 1):
            g = a * 2 + bb
            for ty, ky in tap_map[a].items():
                for tx, kx in tap_map[bb].items():
                    wk = wk.at[ty * 3 + tx, :, g * Cout:(g + 1) * Cout].set(
                        w_t[:, :, ky, kx])
    wk = wk.reshape(9 * Cin, 4 * Cout).astype(jnp.bfloat16)
    b4 = jnp.tile(b.reshape(1, Cout), (1, 4)).astype(jnp.float32)
    return wk, b4


def _im2col3(x_pad, h, w):
    cols = jnp.concatenate(
        [x_pad[:, ky:ky + h, kx:kx + w, :]
         for ky in range(3) for kx in range(3)], axis=-1)
    return cols.reshape(-1, cols.shape[-1])


def conv_transpose4x4_s2(x, w_packed, bias2d):
    """x: (B,h,w,Cin) -> (B,2h,2w,Cout)."""
    B, h, w, _ = x.shape
    cout = w_packed.shape[1] // 4
    xp = jnp.pad(x, ((0, 0), (1, 1), (1, 1), (0, 0)))
    cols = _im2col3(xp, h, w).astype(jnp.bfloat16)
    y = _matmul_bias(cols, w_packed, bias2d, leaky=False)    # (B*h*w, 4*cout)
    y = y.reshape(B, h, w, 2, 2, cout)
    y = jnp.transpose(y, (0, 1, 3, 2, 4, 5)).reshape(B, 2 * h, 2 * w, cout)
    return y


# ==========================================================================
# backwarp (grid_sample) -- plain JAX gather
# ==========================================================================
# TODO(synk): data-dependent bilinear gather kept in plain JAX.

def _grid_sample_bilinear_zeros(img, nx, ny):
    B, H, W, C = img.shape
    x = (nx + 1.0) * 0.5 * (W - 1)
    y = (ny + 1.0) * 0.5 * (H - 1)
    x0 = jnp.floor(x)
    y0 = jnp.floor(y)
    x1 = x0 + 1.0
    y1 = y0 + 1.0
    wx1 = x - x0
    wx0 = 1.0 - wx1
    wy1 = y - y0
    wy0 = 1.0 - wy1
    img_flat = img.reshape(B, H * W, C)

    def tap(xi, yi, wgt):
        valid = (xi >= 0) & (xi <= W - 1) & (yi >= 0) & (yi <= H - 1)
        xc = jnp.clip(xi, 0, W - 1).astype(jnp.int32)
        yc = jnp.clip(yi, 0, H - 1).astype(jnp.int32)
        idx = (yc * W + xc).reshape(B, H * W, 1)
        vals = jnp.take_along_axis(img_flat, idx, axis=1).reshape(B, H, W, C)
        return vals * (wgt * valid.astype(img.dtype))[..., None]

    return (tap(x0, y0, wy0 * wx0) + tap(x1, y0, wy0 * wx1)
            + tap(x0, y1, wy1 * wx0) + tap(x1, y1, wy1 * wx1))


def backwarp(ten_input, ten_flow):
    B, H, W, _ = ten_input.shape
    gx = jnp.linspace(-1.0, 1.0, W)[None, None, :]
    gy = jnp.linspace(-1.0, 1.0, H)[None, :, None]
    nx = gx + ten_flow[..., 0] * (2.0 / (W - 1.0))
    ny = gy + ten_flow[..., 1] * (2.0 / (H - 1.0))
    inp = jnp.concatenate(
        [ten_input, jnp.ones((B, H, W, 1), ten_input.dtype)], axis=-1)
    out = _grid_sample_bilinear_zeros(inp, nx, ny)
    mask = jnp.where(out[..., -1:] > 0.999, 1.0, 0.0)
    return out[..., :-1] * mask


# ==========================================================================
# Weight packing helpers for the fused conv stack
# ==========================================================================

def _stack_row_map(l, c0, c0pad, couts):
    """torch in-channel order [out_{l-1},...,out_0, feat0] -> scratch rows."""
    parts = [np.arange(c0pad + 128 * k, c0pad + 128 * k + couts[k])
             for k in range(l - 1, -1, -1)]
    parts.append(np.arange(c0))
    return np.concatenate(parts).astype(np.int32)


def _pack_stack_weight(w_oihw, row_map, cin_pad, cout_pad):
    cout, cin, K, _ = w_oihw.shape
    wkk = jnp.transpose(w_oihw, (2, 3, 1, 0)).reshape(K * K, cin, cout)
    wpad = jnp.zeros((K * K, cin_pad, cout_pad), jnp.float32)
    wpad = wpad.at[:, jnp.asarray(row_map), :cout].set(wkk)
    return wpad.astype(jnp.bfloat16)


def _pad_bias(b, cout_pad):
    cout = int(b.shape[0])
    bp = jnp.zeros((1, cout_pad), jnp.float32)
    return bp.at[:, :cout].set(b.reshape(1, cout))


# ==========================================================================
# Decoder
# ==========================================================================

_CHAN_TABLE = [None, None, 81 + 32 + 2 + 2, 81 + 64 + 2 + 2,
               81 + 96 + 2 + 2, 81 + 128 + 2 + 2, 81, None]
_BACKWARP_TABLE = [None, None, None, 5.0, 2.5, 1.25, 0.625, None]
_COUTS = [128, 128, 96, 64, 32, 2]


class Decoder:
    def __init__(self, intLevel, key):
        self.intLevel = intLevel
        intPrevious = _CHAN_TABLE[intLevel + 1]
        intCurrent = _CHAN_TABLE[intLevel + 0]
        keys = iter(jax.random.split(key, 20))

        def uconv(cin, cout, k):
            bound = 1.0 / float(cin * k * k) ** 0.5
            w = jax.random.uniform(next(keys), (cout, cin, k, k),
                                   jnp.float32, -bound, bound)
            b = jax.random.uniform(next(keys), (cout,), jnp.float32,
                                   -bound, bound)
            return w, b

        self.has_prev = intLevel < 6
        if self.has_prev:
            bnd = 1.0 / float(2 * 16) ** 0.5
            upflow_w = jax.random.uniform(next(keys), (2, 2, 4, 4),
                                          jnp.float32, -bnd, bnd)
            upflow_b = jax.random.uniform(next(keys), (2,), jnp.float32,
                                          -bnd, bnd)
            cin_upfeat = intPrevious + 128 + 128 + 96 + 64 + 32
            bnd = 1.0 / float(cin_upfeat * 16) ** 0.5
            upfeat_w = jax.random.uniform(next(keys), (cin_upfeat, 2, 4, 4),
                                          jnp.float32, -bnd, bnd)
            upfeat_b = jax.random.uniform(next(keys), (2,), jnp.float32,
                                          -bnd, bnd)
            # Merge upflow + upfeat into ONE block-diagonal ConvTranspose so a
            # single sub-pixel matmul pallas_call handles both (2 launches->1).
            w_comb = jnp.zeros((2 + cin_upfeat, 4, 4, 4), jnp.float32)
            w_comb = w_comb.at[0:2, 0:2].set(upflow_w)
            w_comb = w_comb.at[2:, 2:4].set(upfeat_w)
            b_comb = jnp.concatenate([upflow_b, upfeat_b])
            self.updeconv_wk, self.updeconv_b2 = _prep_deconv(w_comb, b_comb)
            self.fltBackwarp = _BACKWARP_TABLE[intLevel + 1]

        c0 = intCurrent
        c0pad = ((c0 + 127) // 128) * 128
        self.c0 = c0
        self.c0pad = c0pad
        self.cpad = c0pad + 128 * 5
        self.stack_width = sum(_COUTS[:5])          # 448

        ws, bs, cfg = [], [], []
        cins = [c0 + sum(_COUTS[:l]) for l in range(6)]
        for l in range(6):
            w, b = uconv(cins[l], _COUTS[l], 3)
            cin_pad = c0pad + 128 * l
            cout = _COUTS[l]
            # Pad small couts to 128: the lanes are wasted in VMEM anyway and
            # it makes the scratch segment stores fully aligned.
            cout_pad = 128 if l < 5 else cout
            row_map = _stack_row_map(l, c0, c0pad, _COUTS)
            ws.append(_pack_stack_weight(w, row_map, cin_pad, cout_pad))
            bs.append(_pad_bias(b, cout_pad))
            s_off = cin_pad if l < 5 else None        # scratch segment offset
            f_off = sum(_COUTS[l + 1:5]) if l < 5 else None  # tenFeat offset
            cfg.append((cin_pad, cout, cout_pad, s_off, f_off, l < 5))
        self.stack_w = ws
        self.stack_b = bs
        self.stack_cfg = tuple(cfg)

    # ------------------------------------------------------------------
    def _run_stack(self, pieces):
        B, H, W, _ = pieces[0].shape
        assert sum(int(p.shape[-1]) for p in pieces) == self.c0

        kern = functools.partial(_stack_kernel,
                                 n_pieces=len(pieces),
                                 c0=self.c0, c0pad=self.c0pad,
                                 cfg=self.stack_cfg)

        in_specs, operands = [], []
        for p in pieces:
            wp = int(p.shape[-1])
            in_specs.append(pl.BlockSpec((1, H, W, wp),
                                         lambda b: (b, 0, 0, 0)))
            operands.append(p)
        for wl, bl in zip(self.stack_w, self.stack_b):
            in_specs.append(pl.BlockSpec(wl.shape, lambda b: (0, 0, 0)))
            in_specs.append(pl.BlockSpec(bl.shape, lambda b: (0, 0)))
            operands += [wl, bl]

        feat_c = self.stack_width + self.c0
        out_shape = (jax.ShapeDtypeStruct((B, H, W, feat_c), jnp.float32),
                     jax.ShapeDtypeStruct((B, H, W, 2), jnp.float32))
        out_specs = (pl.BlockSpec((1, H, W, feat_c), lambda b: (b, 0, 0, 0)),
                     pl.BlockSpec((1, H, W, 2), lambda b: (b, 0, 0, 0)))

        return pl.pallas_call(
            kern,
            out_shape=out_shape,
            grid_spec=pltpu.PrefetchScalarGridSpec(
                num_scalar_prefetch=0,
                grid=(B,),                        # batch-parallel (2 TCs, v7x)
                in_specs=in_specs,
                out_specs=out_specs,
                scratch_shapes=[pltpu.VMEM((1, H + 2, W + 2, self.cpad),
                                           jnp.bfloat16)]),
            compiler_params=pltpu.CompilerParams(
                dimension_semantics=("parallel",),
                vmem_limit_bytes=32 * 1024 * 1024),
        )(*operands)

    # ------------------------------------------------------------------
    def __call__(self, tenOne, tenTwo, objPrevious):
        if objPrevious is None:
            pieces = [correlation_leaky(tenOne, tenTwo)]
        else:
            prev = jnp.concatenate([objPrevious["tenFlow"],
                                    objPrevious["tenFeat"]], axis=-1)
            up = conv_transpose4x4_s2(prev, self.updeconv_wk,
                                      self.updeconv_b2)
            tenFlowUp = up[..., 0:2]
            tenFeatUp = up[..., 2:4]
            warped = backwarp(tenTwo, tenFlowUp * self.fltBackwarp)
            tenVolume = correlation_leaky(tenOne, warped)
            pieces = [tenVolume, tenOne, tenFlowUp, tenFeatUp]

        # The fused kernel emits the complete tenFeat ([o5,o4,o3,o2,o1,feat0])
        # and tenFlow directly -- no concatenation here.
        tenFeat, tenFlow = self._run_stack(pieces)
        return {"tenFlow": tenFlow, "tenFeat": tenFeat}


# ==========================================================================

if __name__ == "__main__":
    key = jax.random.PRNGKey(0)
    k_params, k1, k2, k3, k4 = jax.random.split(key, 5)

    intLevel = 5                     # intCurrent = 213, feature channels = 128
    dec = Decoder(intLevel, k_params)

    B, H, W = 2, 8, 8
    tenOne = jax.random.normal(k1, (B, H, W, 128), jnp.float32)
    tenTwo = jax.random.normal(k2, (B, H, W, 128), jnp.float32)
    objPrevious = {
        "tenFlow": jax.random.normal(k3, (B, H // 2, W // 2, 2), jnp.float32),
        "tenFeat": jax.random.normal(k4, (B, H // 2, W // 2, 529), jnp.float32),
    }

    out = dec(tenOne, tenTwo, objPrevious)
    out = jax.block_until_ready(out)

    assert out["tenFlow"].shape == (B, H, W, 2)
    assert out["tenFeat"].shape == (B, H, W, 81 + 128 + 2 + 2 + 448)
    assert bool(jnp.all(jnp.isfinite(out["tenFlow"])))
    assert bool(jnp.all(jnp.isfinite(out["tenFeat"])))
    print("KERNEL_OK")
</pallas_src>

<mosaic_0001>
module attributes {stable_mosaic.version = 11 : i64} {
  func.func @_matmul_bias_kernel(%arg0: i32, %arg1: memref<32x4779xbf16, #tpu.memory_space<vmem>>, %arg2: memref<4779x16xbf16, #tpu.memory_space<vmem>>, %arg3: memref<1x16xf32, #tpu.memory_space<vmem>>, %arg4: memref<32x16xf32, #tpu.memory_space<vmem>>) attributes {dimension_semantics = [#tpu.dimension_semantics<arbitrary>], iteration_bounds = array<i64: 1>, scalar_prefetch = 0 : i64, scratch_operands = 0 : i64, tpu.core_type = #tpu.core_type<tc>, window_params = [{pipeline_mode = #tpu.pipeline_mode<synchronous>, transform_indices = @transform_0, window_bounds = array<i64: 32, 4779>}, {pipeline_mode = #tpu.pipeline_mode<synchronous>, transform_indices = @transform_1, window_bounds = array<i64: 4779, 16>}, {pipeline_mode = #tpu.pipeline_mode<synchronous>, transform_indices = @transform_2, window_bounds = array<i64: 1, 16>}, {pipeline_mode = #tpu.pipeline_mode<synchronous>, transform_indices = @transform_3, window_bounds = array<i64: 32, 16>}]} {
    %c0 = arith.constant 0 : index
    %c0_0 = arith.constant 0 : index
    %0 = vector.load %arg1[%c0, %c0_0] : memref<32x4779xbf16, #tpu.memory_space<vmem>>, vector<32x4779xbf16>
    %c0_1 = arith.constant 0 : index
    %c0_2 = arith.constant 0 : index
    %1 = vector.load %arg2[%c0_1, %c0_2] : memref<4779x16xbf16, #tpu.memory_space<vmem>>, vector<4779x16xbf16>
    %cst = arith.constant dense<0.000000e+00> : vector<32x16xf32>
    %2 = tpu.matmul %0, %1, %cst {dimension_numbers = #tpu.dot_dimension_numbers<[1], [0], [0], [1], [0, 0, 1, 1], [], []>} : vector<32x4779xbf16>, vector<4779x16xbf16>, vector<32x16xf32> -> vector<32x16xf32>
    %c0_3 = arith.constant 0 : index
    %c0_4 = arith.constant 0 : index
    %3 = vector.load %arg3[%c0_3, %c0_4] : memref<1x16xf32, #tpu.memory_space<vmem>>, vector<1x16xf32>
    %4 = vector.broadcast %3 : vector<1x16xf32> to vector<32x16xf32>
    %5 = arith.addf %2, %4 : vector<32x16xf32>
    %c0_5 = arith.constant 0 : index
    %c0_6 = arith.constant 0 : index
    %6 = vector.load %arg4[%c0_5, %c0_6] : memref<32x16xf32, #tpu.memory_space<vmem>>, vector<32x16xf32>
    tpu.vector_store %arg4[%c0_5, %c0_6], %5 {strides = array<i32>} : memref<32x16xf32, #tpu.memory_space<vmem>>, vector<32x16xf32>,
    return
  }
  func.func @transform_0(%arg0: i32) -> (i32, i32) {
    %c0_i32 = arith.constant 0 : i32
    %c0_i32_0 = arith.constant 0 : i32
    %c0_i32_1 = arith.constant 0 : i32
    return %c0_i32, %c0_i32_0 : i32, i32
  }
  func.func @transform_1(%arg0: i32) -> (i32, i32) {
    %c0_i32 = arith.constant 0 : i32
    %c0_i32_0 = arith.constant 0 : i32
    %c0_i32_1 = arith.constant 0 : i32
    return %c0_i32, %c0_i32_0 : i32, i32
  }
  func.func @transform_2(%arg0: i32) -> (i32, i32) {
    %c0_i32 = arith.constant 0 : i32
    %c0_i32_0 = arith.constant 0 : i32
    %c0_i32_1 = arith.constant 0 : i32
    return %c0_i32, %c0_i32_0 : i32, i32
  }
  func.func @transform_3(%arg0: i32) -> (i32, i32) {
    %c0_i32 = arith.constant 0 : i32
    %c0_i32_0 = arith.constant 0 : i32
    %c0_i32_1 = arith.constant 0 : i32
    return %c0_i32, %c0_i32_0 : i32, i32
  }
}

</mosaic_0001>

<llo_original>
// kernel: tpu_custom_call.1
$region0: #{tpu_custom_call.1}
  #allocation0 [shape = 'u32[]', space=smem, size = 0x4, offset = 0x4, fixed_abs, tag = 'smem constant byte address 0x4 - core index']
  #allocation1 [shape = 'u32[144,128]{1,0:T(1,128)}', space=vmem, size = 0x12000, scoped, tag = 'internal scratch']
  %s0 = inlined_call_operand.vmem [shape: bf16[32,4779], index: 0, kind: input, shape index: {}]
  %s1 = inlined_call_operand.vmem [shape: bf16[4779,16], index: 1, kind: input, shape index: {}]
  %s2 = inlined_call_operand.vmem [shape: f32[1,16], index: 2, kind: input, shape index: {}]
  %s3 = inlined_call_operand.vmem [shape: f32[32,16], index: 3, kind: output, shape index: {}]
  %s4 = sld [smem:[#allocation0]]
  $region22: #{tpu_custom_call.1} parent=0
    _
  %s6 = ssub.s32 1, %s4
  %s7 = scalar_select 0, %s6, %s4
  // Predicated region
  $region2: #{tpu_custom_call.1} parent=0 // pred_check
    _
  $region3: #{tpu_custom_call.1} parent=0 // pred_check_branch
    %9 = sbr.rel (0) target = $region5
  $region4: #{tpu_custom_call.1} parent=0 // pred_region
    _
  $region5: #{tpu_custom_call.1} parent=0 // pred_fallthru
    _
  // Predicated region
  $region6: #{tpu_custom_call.1} parent=0 // pred_check
    _
  $region7: #{tpu_custom_call.1} parent=0 // pred_check_branch
    %11 = sbr.rel (0) target = $region9
  $region8: #{tpu_custom_call.1} parent=0 // pred_region
    _
  $region9: #{tpu_custom_call.1} parent=0 // pred_fallthru
    _
  // Predicated region
  $region10: #{tpu_custom_call.1} parent=0 // pred_check
    _
  $region11: #{tpu_custom_call.1} parent=0 // pred_check_branch
    %13 = sbr.rel (0) target = $region13
  $region12: #{tpu_custom_call.1} parent=0 // pred_region
    _
  $region13: #{tpu_custom_call.1} parent=0 // pred_fallthru
    _
  %v15 = vld [vmem:[%s0] sm:$0xff]
  %v16 = vld [vmem:[%s0 + $0x8] sm:$0xff]
  %v17 = vld [vmem:[%s0 + $0x10] sm:$0xff]
  %v18 = vld [vmem:[%s0 + $0x18] sm:$0xff]
  %v19 = vld [vmem:[%s0 + $0x20] sm:$0xff]
  %v20 = vld [vmem:[%s0 + $0x28] sm:$0xff]
  %v21 = vld [vmem:[%s0 + $0x30] sm:$0xff]
  %v22 = vld [vmem:[%s0 + $0x38] sm:$0xff]
  %v23 = vld [vmem:[%s0 + $0x40] sm:$0xff]
  %v24 = vld [vmem:[%s0 + $0x48] sm:$0xff]
  %v25 = vld [vmem:[%s0 + $0x50] sm:$0xff]
  %v26 = vld [vmem:[%s0 + $0x58] sm:$0xff]
  %v27 = vld [vmem:[%s0 + $0x60] sm:$0xff]
  %v28 = vld [vmem:[%s0 + $0x68] sm:$0xff]
  %v29 = vld [vmem:[%s0 + $0x70] sm:$0xff]
  %v30 = vld [vmem:[%s0 + $0x78] sm:$0xff]
  %v31 = vld [vmem:[%s0 + $0x80] sm:$0xff]
  %v32 = vld [vmem:[%s0 + $0x88] sm:$0xff]
  %v33 = vld [vmem:[%s0 + $0x90] sm:$0xff]
  %v34 = vld [vmem:[%s0 + $0x98] sm:$0xff]
  %v35 = vld [vmem:[%s0 + $0xa0] sm:$0xff]
  %v36 = vld [vmem:[%s0 + $0xa8] sm:$0xff]
  %v37 = vld [vmem:[%s0 + $0xb0] sm:$0xff]
  %v38 = vld [vmem:[%s0 + $0xb8] sm:$0xff]
  %v39 = vld [vmem:[%s0 + $0xc0] sm:$0xff]
  %v40 = vld [vmem:[%s0 + $0xc8] sm:$0xff]
  %v41 = vld [vmem:[%s0 + $0xd0] sm:$0xff]
  %v42 = vld [vmem:[%s0 + $0xd8] sm:$0xff]
  %v43 = vld [vmem:[%s0 + $0xe0] sm:$0xff]
  %v44 = vld [vmem:[%s0 + $0xe8] sm:$0xff]
  %v45 = vld [vmem:[%s0 + $0xf0] sm:$0xff]
  %v46 = vld [vmem:[%s0 + $0xf8] sm:$0xff]
  %v47 = vld [vmem:[%s0 + $0x100] sm:$0xff]
  %v48 = vld [vmem:[%s0 + $0x108] sm:$0xff]
  %v49 = vld [vmem:[%s0 + $0x110] sm:$0xff]
  %v50 = vld [vmem:[%s0 + $0x118] sm:$0xff]
  %v51 = vld [vmem:[%s0 + $0x120] sm:$0xff]
  %v52 = vld [vmem:[%s0 + $0x128] sm:$0xff]
  %v53 = vld [vmem:[%s0 + $0x130] sm:$0xff]
  %v54 = vld [vmem:[%s0 + $0x138] sm:$0xff]
  %v55 = vld [vmem:[%s0 + $0x140] sm:$0xff]
  %v56 = vld [vmem:[%s0 + $0x148] sm:$0xff]
  %v57 = vld [vmem:[%s0 + $0x150] sm:$0xff]
  %v58 = vld [vmem:[%s0 + $0x158] sm:$0xff]
  %v59 = vld [vmem:[%s0 + $0x160] sm:$0xff]
  %v60 = vld [vmem:[%s0 + $0x168] sm:$0xff]
  %v61 = vld [vmem:[%s0 + $0x170] sm:$0xff]
  %v62 = vld [vmem:[%s0 + $0x178] sm:$0xff]
  %v63 = vld [vmem:[%s0 + $0x180] sm:$0xff]
  %v64 = vld [vmem:[%s0 + $0x188] sm:$0xff]
  %v65 = vld [vmem:[%s0 + $0x190] sm:$0xff]
  %v66 = vld [vmem:[%s0 + $0x198] sm:$0xff]
  %v67 = vld [vmem:[%s0 + $0x1a0] sm:$0xff]
  %v68 = vld [vmem:[%s0 + $0x1a8] sm:$0xff]
  %v69 = vld [vmem:[%s0 + $0x1b0] sm:$0xff]
  %v70 = vld [vmem:[%s0 + $0x1b8] sm:$0xff]
  %v71 = vld [vmem:[%s0 + $0x1c0] sm:$0xff]
  %v72 = vld [vmem:[%s0 + $0x1c8] sm:$0xff]
  %v73 = vld [vmem:[%s0 + $0x1d0] sm:$0xff]
  %v74 = vld [vmem:[%s0 + $0x1d8] sm:$0xff]
  %v75 = vld [vmem:[%s0 + $0x1e0] sm:$0xff]
  %v76 = vld [vmem:[%s0 + $0x1e8] sm:$0xff]
  %v77 = vld [vmem:[%s0 + $0x1f0] sm:$0xff]
  %v78 = vld [vmem:[%s0 + $0x1f8] sm:$0xff]
  %v79 = vld [vmem:[%s0 + $0x200] sm:$0xff]
  %v80 = vld [vmem:[%s0 + $0x208] sm:$0xff]
  %v81 = vld [vmem:[%s0 + $0x210] sm:$0xff]
  %v82 = vld [vmem:[%s0 + $0x218] sm:$0xff]
  %v83 = vld [vmem:[%s0 + $0x220] sm:$0xff]
  %v84 = vld [vmem:[%s0 + $0x228] sm:$0xff]
  %v85 = vld [vmem:[%s0 + $0x230] sm:$0xff]
  %v86 = vld [vmem:[%s0 + $0x238] sm:$0xff]
  %v87 = vld [vmem:[%s0 + $0x240] sm:$0xff]
  %v88 = vld [vmem:[%s0 + $0x248] sm:$0xff]
  %v89 = vld [vmem:[%s0 + $0x250] sm:$0xff]
  %v90 = vld [vmem:[%s0 + $0x258] sm:$0xff]
  %v91 = vld [vmem:[%s1] sm:$0xf]
  %v92 = vld [vmem:[%s1 + $0x4] sm:$0xf]
  %v93 = vld [vmem:[%s1 + $0x8] sm:$0xf]
  %v94 = vld [vmem:[%s1 + $0xc] sm:$0xf]
  %v95 = vld [vmem:[%s1 + $0x10] sm:$0xf]
  %v96 = vld [vmem:[%s1 + $0x14] sm:$0xf]
  %v97 = vld [vmem:[%s1 + $0x18] sm:$0xf]
  %v98 = vld [vmem:[%s1 + $0x1c] sm:$0xf]
  %v99 = vld [vmem:[%s1 + $0x20] sm:$0xf]
  %v100 = vld [vmem:[%s1 + $0x24] sm:$0xf]
  %v101 = vld [vmem:[%s1 + $0x28] sm:$0xf]
  %v102 = vld [vmem:[%s1 + $0x2c] sm:$0xf]
  %v103 = vld [vmem:[%s1 + $0x30] sm:$0xf]
  %v104 = vld [vmem:[%s1 + $0x34] sm:$0xf]
  %v105 = vld [vmem:[%s1 + $0x38] sm:$0xf]
  %v106 = vld [vmem:[%s1 + $0x3c] sm:$0xf]
  %v107 = vld [vmem:[%s1 + $0x40] sm:$0xf]
  %v108 = vld [vmem:[%s1 + $0x44] sm:$0xf]
  %v109 = vld [vmem:[%s1 + $0x48] sm:$0xf]
  %v110 = vld [vmem:[%s1 + $0x4c] sm:$0xf]
  %v111 = vld [vmem:[%s1 + $0x50] sm:$0xf]
  %v112 = vld [vmem:[%s1 + $0x54] sm:$0xf]
  %v113 = vld [vmem:[%s1 + $0x58] sm:$0xf]
  %v114 = vld [vmem:[%s1 + $0x5c] sm:$0xf]
  %v115 = vld [vmem:[%s1 + $0x60] sm:$0xf]
  %v116 = vld [vmem:[%s1 + $0x64] sm:$0xf]
  %v117 = vld [vmem:[%s1 + $0x68] sm:$0xf]
  %v118 = vld [vmem:[%s1 + $0x6c] sm:$0xf]
  %v119 = vld [vmem:[%s1 + $0x70] sm:$0xf]
  %v120 = vld [vmem:[%s1 + $0x74] sm:$0xf]
  %v121 = vld [vmem:[%s1 + $0x78] sm:$0xf]
  %v122 = vld [vmem:[%s1 + $0x7c] sm:$0xf]
  %v123 = vld [vmem:[%s1 + $0x80] sm:$0xf]
  %v124 = vld [vmem:[%s1 + $0x84] sm:$0xf]
  %v125 = vld [vmem:[%s1 + $0x88] sm:$0xf]
  %v126 = vld [vmem:[%s1 + $0x8c] sm:$0xf]
  %v127 = vld [vmem:[%s1 + $0x90] sm:$0xf]
  %v128 = vld [vmem:[%s1 + $0x94] sm:$0xf]
  %v129 = vld [vmem:[%s1 + $0x98] sm:$0xf]
  %v130 = vld [vmem:[%s1 + $0x9c] sm:$0xf]
  %v131 = vld [vmem:[%s1 + $0xa0] sm:$0xf]
  %v132 = vld [vmem:[%s1 + $0xa4] sm:$0xf]
  %v133 = vld [vmem:[%s1 + $0xa8] sm:$0xf]
  %v134 = vld [vmem:[%s1 + $0xac] sm:$0xf]
  %v135 = vld [vmem:[%s1 + $0xb0] sm:$0xf]
  %v136 = vld [vmem:[%s1 + $0xb4] sm:$0xf]
  %v137 = vld [vmem:[%s1 + $0xb8] sm:$0xf]
  %v138 = vld [vmem:[%s1 + $0xbc] sm:$0xf]
  %v139 = vld [vmem:[%s1 + $0xc0] sm:$0xf]
  %v140 = vld [vmem:[%s1 + $0xc4] sm:$0xf]
  %v141 = vld [vmem:[%s1 + $0xc8] sm:$0xf]
  %v142 = vld [vmem:[%s1 + $0xcc] sm:$0xf]
  %v143 = vld [vmem:[%s1 + $0xd0] sm:$0xf]
  %v144 = vld [vmem:[%s1 + $0xd4] sm:$0xf]
  %v145 = vld [vmem:[%s1 + $0xd8] sm:$0xf]
  %v146 = vld [vmem:[%s1 + $0xdc] sm:$0xf]
  %v147 = vld [vmem:[%s1 + $0xe0] sm:$0xf]
  %v148 = vld [vmem:[%s1 + $0xe4] sm:$0xf]
  %v149 = vld [vmem:[%s1 + $0xe8] sm:$0xf]
  %v150 = vld [vmem:[%s1 + $0xec] sm:$0xf]
  %v151 = vld [vmem:[%s1 + $0xf0] sm:$0xf]
  %v152 = vld [vmem:[%s1 + $0xf4] sm:$0xf]
  %v153 = vld [vmem:[%s1 + $0xf8] sm:$0xf]
  %v154 = vld [vmem:[%s1 + $0xfc] sm:$0xf]
  %v155 = vld [vmem:[%s1 + $0x100] sm:$0xf]
  %v156 = vld [vmem:[%s1 + $0x104] sm:$0xf]
  %v157 = vld [vmem:[%s1 + $0x108] sm:$0xf]
  %v158 = vld [vmem:[%s1 + $0x10c] sm:$0xf]
  %v159 = vld [vmem:[%s1 + $0x110] sm:$0xf]
  %v160 = vld [vmem:[%s1 + $0x114] sm:$0xf]
  %v161 = vld [vmem:[%s1 + $0x118] sm:$0xf]
  %v162 = vld [vmem:[%s1 + $0x11c] sm:$0xf]
  %v163 = vld [vmem:[%s1 + $0x120] sm:$0xf]
  %v164 = vld [vmem:[%s1 + $0x124] sm:$0xf]
  %v165 = vld [vmem:[%s1 + $0x128] sm:$0xf]
  %v166 = vld [vmem:[%s1 + $0x12c] sm:$0xf]
  %v167 = vld [vmem:[%s1 + $0x130] sm:$0xf]
  %v168 = vld [vmem:[%s1 + $0x134] sm:$0xf]
  %v169 = vld [vmem:[%s1 + $0x138] sm:$0xf]
  %v170 = vld [vmem:[%s1 + $0x13c] sm:$0xf]
  %v171 = vld [vmem:[%s1 + $0x140] sm:$0xf]
  %v172 = vld [vmem:[%s1 + $0x144] sm:$0xf]
  %v173 = vld [vmem:[%s1 + $0x148] sm:$0xf]
  %v174 = vld [vmem:[%s1 + $0x14c] sm:$0xf]
  %v175 = vld [vmem:[%s1 + $0x150] sm:$0xf]
  %v176 = vld [vmem:[%s1 + $0x154] sm:$0xf]
  %v177 = vld [vmem:[%s1 + $0x158] sm:$0xf]
  %v178 = vld [vmem:[%s1 + $0x15c] sm:$0xf]
  %v179 = vld [vmem:[%s1 + $0x160] sm:$0xf]
  %v180 = vld [vmem:[%s1 + $0x164] sm:$0xf]
  %v181 = vld [vmem:[%s1 + $0x168] sm:$0xf]
  %v182 = vld [vmem:[%s1 + $0x16c] sm:$0xf]
  %v183 = vld [vmem:[%s1 + $0x170] sm:$0xf]
  %v184 = vld [vmem:[%s1 + $0x174] sm:$0xf]
  %v185 = vld [vmem:[%s1 + $0x178] sm:$0xf]
  %v186 = vld [vmem:[%s1 + $0x17c] sm:$0xf]
  %v187 = vld [vmem:[%s1 + $0x180] sm:$0xf]
  %v188 = vld [vmem:[%s1 + $0x184] sm:$0xf]
  %v189 = vld [vmem:[%s1 + $0x188] sm:$0xf]
  %v190 = vld [vmem:[%s1 + $0x18c] sm:$0xf]
  %v191 = vld [vmem:[%s1 + $0x190] sm:$0xf]
  %v192 = vld [vmem:[%s1 + $0x194] sm:$0xf]
  %v193 = vld [vmem:[%s1 + $0x198] sm:$0xf]
  %v194 = vld [vmem:[%s1 + $0x19c] sm:$0xf]
  %v195 = vld [vmem:[%s1 + $0x1a0] sm:$0xf]
  %v196 = vld [vmem:[%s1 + $0x1a4] sm:$0xf]
  %v197 = vld [vmem:[%s1 + $0x1a8] sm:$0xf]
  %v198 = vld [vmem:[%s1 + $0x1ac] sm:$0xf]
  %v199 = vld [vmem:[%s1 + $0x1b0] sm:$0xf]
  %v200 = vld [vmem:[%s1 + $0x1b4] sm:$0xf]
  %v201 = vld [vmem:[%s1 + $0x1b8] sm:$0xf]
  %v202 = vld [vmem:[%s1 + $0x1bc] sm:$0xf]
  %v203 = vld [vmem:[%s1 + $0x1c0] sm:$0xf]
  %v204 = vld [vmem:[%s1 + $0x1c4] sm:$0xf]
  %v205 = vld [vmem:[%s1 + $0x1c8] sm:$0xf]
  %v206 = vld [vmem:[%s1 + $0x1cc] sm:$0xf]
  %v207 = vld [vmem:[%s1 + $0x1d0] sm:$0xf]
  %v208 = vld [vmem:[%s1 + $0x1d4] sm:$0xf]
  %v209 = vld [vmem:[%s1 + $0x1d8] sm:$0xf]
  %v210 = vld [vmem:[%s1 + $0x1dc] sm:$0xf]
  %v211 = vld [vmem:[%s1 + $0x1e0] sm:$0xf]
  %v212 = vld [vmem:[%s1 + $0x1e4] sm:$0xf]
  %v213 = vld [vmem:[%s1 + $0x1e8] sm:$0xf]
  %v214 = vld [vmem:[%s1 + $0x1ec] sm:$0xf]
  %v215 = vld [vmem:[%s1 + $0x1f0] sm:$0xf]
  %v216 = vld [vmem:[%s1 + $0x1f4] sm:$0xf]
  %v217 = vld [vmem:[%s1 + $0x1f8] sm:$0xf]
  %v218 = vld [vmem:[%s1 + $0x1fc] sm:$0xf]
  %v219 = vld [vmem:[%s1 + $0x200] sm:$0xf]
  %v220 = vld [vmem:[%s1 + $0x204] sm:$0xf]
  %v221 = vld [vmem:[%s1 + $0x208] sm:$0xf]
  %v222 = vld [vmem:[%s1 + $0x20c] sm:$0xf]
  %v223 = vld [vmem:[%s1 + $0x210] sm:$0xf]
  %v224 = vld [vmem:[%s1 + $0x214] sm:$0xf]
  %v225 = vld [vmem:[%s1 + $0x218] sm:$0xf]
  %v226 = vld [vmem:[%s1 + $0x21c] sm:$0xf]
  %v227 = vld [vmem:[%s1 + $0x220] sm:$0xf]
  %v228 = vld [vmem:[%s1 + $0x224] sm:$0xf]
  %v229 = vld [vmem:[%s1 + $0x228] sm:$0xf]
  %v230 = vld [vmem:[%s1 + $0x22c] sm:$0xf]
  %v231 = vld [vmem:[%s1 + $0x230] sm:$0xf]
  %v232 = vld [vmem:[%s1 + $0x234] sm:$0xf]
  %v233 = vld [vmem:[%s1 + $0x238] sm:$0xf]
  %v234 = vld [vmem:[%s1 + $0x23c] sm:$0xf]
  %v235 = vld [vmem:[%s1 + $0x240] sm:$0xf]
  %v236 = vld [vmem:[%s1 + $0x244] sm:$0xf]
  %v237 = vld [vmem:[%s1 + $0x248] sm:$0xf]
  %v238 = vld [vmem:[%s1 + $0x24c] sm:$0xf]
  %v239 = vld [vmem:[%s1 + $0x250] sm:$0xf]
  %v240 = vld [vmem:[%s1 + $0x254] sm:$0xf]
  %v241 = vld [vmem:[%s1 + $0x258] sm:$0xf]
  %v242 = vld [vmem:[%s1 + $0x25c] sm:$0xf]
  %v243 = vld [vmem:[%s1 + $0x260] sm:$0xf]
  %v244 = vld [vmem:[%s1 + $0x264] sm:$0xf]
  %v245 = vld [vmem:[%s1 + $0x268] sm:$0xf]
  %v246 = vld [vmem:[%s1 + $0x26c] sm:$0xf]
  %v247 = vld [vmem:[%s1 + $0x270] sm:$0xf]
  %v248 = vld [vmem:[%s1 + $0x274] sm:$0xf]
  %v249 = vld [vmem:[%s1 + $0x278] sm:$0xf]
  %v250 = vld [vmem:[%s1 + $0x27c] sm:$0xf]
  %v251 = vld [vmem:[%s1 + $0x280] sm:$0xf]
  %v252 = vld [vmem:[%s1 + $0x284] sm:$0xf]
  %v253 = vld [vmem:[%s1 + $0x288] sm:$0xf]
  %v254 = vld [vmem:[%s1 + $0x28c] sm:$0xf]
  %v255 = vld [vmem:[%s1 + $0x290] sm:$0xf]
  %v256 = vld [vmem:[%s1 + $0x294] sm:$0xf]
  %v257 = vld [vmem:[%s1 + $0x298] sm:$0xf]
  %v258 = vld [vmem:[%s1 + $0x29c] sm:$0xf]
  %v259 = vld [vmem:[%s1 + $0x2a0] sm:$0xf]
  %v260 = vld [vmem:[%s1 + $0x2a4] sm:$0xf]
  %v261 = vld [vmem:[%s1 + $0x2a8] sm:$0xf]
  %v262 = vld [vmem:[%s1 + $0x2ac] sm:$0xf]
  %v263 = vld [vmem:[%s1 + $0x2b0] sm:$0xf]
  %v264 = vld [vmem:[%s1 + $0x2b4] sm:$0xf]
  %v265 = vld [vmem:[%s1 + $0x2b8] sm:$0xf]
  %v266 = vld [vmem:[%s1 + $0x2bc] sm:$0xf]
  %v267 = vld [vmem:[%s1 + $0x2c0] sm:$0xf]
  %v268 = vld [vmem:[%s1 + $0x2c4] sm:$0xf]
  %v269 = vld [vmem:[%s1 + $0x2c8] sm:$0xf]
  %v270 = vld [vmem:[%s1 + $0x2cc] sm:$0xf]
  %v271 = vld [vmem:[%s1 + $0x2d0] sm:$0xf]
  %v272 = vld [vmem:[%s1 + $0x2d4] sm:$0xf]
  %v273 = vld [vmem:[%s1 + $0x2d8] sm:$0xf]
  %v274 = vld [vmem:[%s1 + $0x2dc] sm:$0xf]
  %v275 = vld [vmem:[%s1 + $0x2e0] sm:$0xf]
  %v276 = vld [vmem:[%s1 + $0x2e4] sm:$0xf]
  %v277 = vld [vmem:[%s1 + $0x2e8] sm:$0xf]
  %v278 = vld [vmem:[%s1 + $0x2ec] sm:$0xf]
  %v279 = vld [vmem:[%s1 + $0x2f0] sm:$0xf]
  %v280 = vld [vmem:[%s1 + $0x2f4] sm:$0xf]
  %v281 = vld [vmem:[%s1 + $0x2f8] sm:$0xf]
  %v282 = vld [vmem:[%s1 + $0x2fc] sm:$0xf]
  %v283 = vld [vmem:[%s1 + $0x300] sm:$0xf]
  %v284 = vld [vmem:[%s1 + $0x304] sm:$0xf]
  %v285 = vld [vmem:[%s1 + $0x308] sm:$0xf]
  %v286 = vld [vmem:[%s1 + $0x30c] sm:$0xf]
  %v287 = vld [vmem:[%s1 + $0x310] sm:$0xf]
  %v288 = vld [vmem:[%s1 + $0x314] sm:$0xf]
  %v289 = vld [vmem:[%s1 + $0x318] sm:$0xf]
  %v290 = vld [vmem:[%s1 + $0x31c] sm:$0xf]
  %v291 = vld [vmem:[%s1 + $0x320] sm:$0xf]
  %v292 = vld [vmem:[%s1 + $0x324] sm:$0xf]
  %v293 = vld [vmem:[%s1 + $0x328] sm:$0xf]
  %v294 = vld [vmem:[%s1 + $0x32c] sm:$0xf]
  %v295 = vld [vmem:[%s1 + $0x330] sm:$0xf]
  %v296 = vld [vmem:[%s1 + $0x334] sm:$0xf]
  %v297 = vld [vmem:[%s1 + $0x338] sm:$0xf]
  %v298 = vld [vmem:[%s1 + $0x33c] sm:$0xf]
  %v299 = vld [vmem:[%s1 + $0x340] sm:$0xf]
  %v300 = vld [vmem:[%s1 + $0x344] sm:$0xf]
  %v301 = vld [vmem:[%s1 + $0x348] sm:$0xf]
  %v302 = vld [vmem:[%s1 + $0x34c] sm:$0xf]
  %v303 = vld [vmem:[%s1 + $0x350] sm:$0xf]
  %v304 = vld [vmem:[%s1 + $0x354] sm:$0xf]
  %v305 = vld [vmem:[%s1 + $0x358] sm:$0xf]
  %v306 = vld [vmem:[%s1 + $0x35c] sm:$0xf]
  %v307 = vld [vmem:[%s1 + $0x360] sm:$0xf]
  %v308 = vld [vmem:[%s1 + $0x364] sm:$0xf]
  %v309 = vld [vmem:[%s1 + $0x368] sm:$0xf]
  %v310 = vld [vmem:[%s1 + $0x36c] sm:$0xf]
  %v311 = vld [vmem:[%s1 + $0x370] sm:$0xf]
  %v312 = vld [vmem:[%s1 + $0x374] sm:$0xf]
  %v313 = vld [vmem:[%s1 + $0x378] sm:$0xf]
  %v314 = vld [vmem:[%s1 + $0x37c] sm:$0xf]
  %v315 = vld [vmem:[%s1 + $0x380] sm:$0xf]
  %v316 = vld [vmem:[%s1 + $0x384] sm:$0xf]
  %v317 = vld [vmem:[%s1 + $0x388] sm:$0xf]
  %v318 = vld [vmem:[%s1 + $0x38c] sm:$0xf]
  %v319 = vld [vmem:[%s1 + $0x390] sm:$0xf]
  %v320 = vld [vmem:[%s1 + $0x394] sm:$0xf]
  %v321 = vld [vmem:[%s1 + $0x398] sm:$0xf]
  %v322 = vld [vmem:[%s1 + $0x39c] sm:$0xf]
  %v323 = vld [vmem:[%s1 + $0x3a0] sm:$0xf]
  %v324 = vld [vmem:[%s1 + $0x3a4] sm:$0xf]
  %v325 = vld [vmem:[%s1 + $0x3a8] sm:$0xf]
  %v326 = vld [vmem:[%s1 + $0x3ac] sm:$0xf]
  %v327 = vld [vmem:[%s1 + $0x3b0] sm:$0xf]
  %v328 = vld [vmem:[%s1 + $0x3b4] sm:$0xf]
  %v329 = vld [vmem:[%s1 + $0x3b8] sm:$0xf]
  %v330 = vld [vmem:[%s1 + $0x3bc] sm:$0xf]
  %v331 = vld [vmem:[%s1 + $0x3c0] sm:$0xf]
  %v332 = vld [vmem:[%s1 + $0x3c4] sm:$0xf]
  %v333 = vld [vmem:[%s1 + $0x3c8] sm:$0xf]
  %v334 = vld [vmem:[%s1 + $0x3cc] sm:$0xf]
  %v335 = vld [vmem:[%s1 + $0x3d0] sm:$0xf]
  %v336 = vld [vmem:[%s1 + $0x3d4] sm:$0xf]
  %v337 = vld [vmem:[%s1 + $0x3d8] sm:$0xf]
  %v338 = vld [vmem:[%s1 + $0x3dc] sm:$0xf]
  %v339 = vld [vmem:[%s1 + $0x3e0] sm:$0xf]
  %v340 = vld [vmem:[%s1 + $0x3e4] sm:$0xf]
  %v341 = vld [vmem:[%s1 + $0x3e8] sm:$0xf]
  %v342 = vld [vmem:[%s1 + $0x3ec] sm:$0xf]
  %v343 = vld [vmem:[%s1 + $0x3f0] sm:$0xf]
  %v344 = vld [vmem:[%s1 + $0x3f4] sm:$0xf]
  %v345 = vld [vmem:[%s1 + $0x3f8] sm:$0xf]
  %v346 = vld [vmem:[%s1 + $0x3fc] sm:$0xf]
  %v347 = vld [vmem:[%s1 + $0x400] sm:$0xf]
  %v348 = vld [vmem:[%s1 + $0x404] sm:$0xf]
  %v349 = vld [vmem:[%s1 + $0x408] sm:$0xf]
  %v350 = vld [vmem:[%s1 + $0x40c] sm:$0xf]
  %v351 = vld [vmem:[%s1 + $0x410] sm:$0xf]
  %v352 = vld [vmem:[%s1 + $0x414] sm:$0xf]
  %v353 = vld [vmem:[%s1 + $0x418] sm:$0xf]
  %v354 = vld [vmem:[%s1 + $0x41c] sm:$0xf]
  %v355 = vld [vmem:[%s1 + $0x420] sm:$0xf]
  %v356 = vld [vmem:[%s1 + $0x424] sm:$0xf]
  %v357 = vld [vmem:[%s1 + $0x428] sm:$0xf]
  %v358 = vld [vmem:[%s1 + $0x42c] sm:$0xf]
  %v359 = vld [vmem:[%s1 + $0x430] sm:$0xf]
  %v360 = vld [vmem:[%s1 + $0x434] sm:$0xf]
  %v361 = vld [vmem:[%s1 + $0x438] sm:$0xf]
  %v362 = vld [vmem:[%s1 + $0x43c] sm:$0xf]
  %v363 = vld [vmem:[%s1 + $0x440] sm:$0xf]
  %v364 = vld [vmem:[%s1 + $0x444] sm:$0xf]
  %v365 = vld [vmem:[%s1 + $0x448] sm:$0xf]
  %v366 = vld [vmem:[%s1 + $0x44c] sm:$0xf]
  %v367 = vld [vmem:[%s1 + $0x450] sm:$0xf]
  %v368 = vld [vmem:[%s1 + $0x454] sm:$0xf]
  %v369 = vld [vmem:[%s1 + $0x458] sm:$0xf]
  %v370 = vld [vmem:[%s1 + $0x45c] sm:$0xf]
  %v371 = vld [vmem:[%s1 + $0x460] sm:$0xf]
  %v372 = vld [vmem:[%s1 + $0x464] sm:$0xf]
  %v373 = vld [vmem:[%s1 + $0x468] sm:$0xf]
  %v374 = vld [vmem:[%s1 + $0x46c] sm:$0xf]
  %v375 = vld [vmem:[%s1 + $0x470] sm:$0xf]
  %v376 = vld [vmem:[%s1 + $0x474] sm:$0xf]
  %v377 = vld [vmem:[%s1 + $0x478] sm:$0xf]
  %v378 = vld [vmem:[%s1 + $0x47c] sm:$0xf]
  %v379 = vld [vmem:[%s1 + $0x480] sm:$0xf]
  %v380 = vld [vmem:[%s1 + $0x484] sm:$0xf]
  %v381 = vld [vmem:[%s1 + $0x488] sm:$0xf]
  %v382 = vld [vmem:[%s1 + $0x48c] sm:$0xf]
  %v383 = vld [vmem:[%s1 + $0x490] sm:$0xf]
  %v384 = vld [vmem:[%s1 + $0x494] sm:$0xf]
  %v385 = vld [vmem:[%s1 + $0x498] sm:$0xf]
  %v386 = vld [vmem:[%s1 + $0x49c] sm:$0xf]
  %v387 = vld [vmem:[%s1 + $0x4a0] sm:$0xf]
  %v388 = vld [vmem:[%s1 + $0x4a4] sm:$0xf]
  %v389 = vld [vmem:[%s1 + $0x4a8] sm:$0xf]
  %v390 = vld [vmem:[%s1 + $0x4ac] sm:$0xf]
  %v391 = vld [vmem:[%s1 + $0x4b0] sm:$0xf]
  %v392 = vld [vmem:[%s1 + $0x4b4] sm:$0xf]
  %v393 = vld [vmem:[%s1 + $0x4b8] sm:$0xf]
  %v394 = vld [vmem:[%s1 + $0x4bc] sm:$0xf]
  %v395 = vld [vmem:[%s1 + $0x4c0] sm:$0xf]
  %v396 = vld [vmem:[%s1 + $0x4c4] sm:$0xf]
  %v397 = vld [vmem:[%s1 + $0x4c8] sm:$0xf]
  %v398 = vld [vmem:[%s1 + $0x4cc] sm:$0xf]
  %v399 = vld [vmem:[%s1 + $0x4d0] sm:$0xf]
  %v400 = vld [vmem:[%s1 + $0x4d4] sm:$0xf]
  %v401 = vld [vmem:[%s1 + $0x4d8] sm:$0xf]
  %v402 = vld [vmem:[%s1 + $0x4dc] sm:$0xf]
  %v403 = vld [vmem:[%s1 + $0x4e0] sm:$0xf]
  %v404 = vld [vmem:[%s1 + $0x4e4] sm:$0xf]
  %v405 = vld [vmem:[%s1 + $0x4e8] sm:$0xf]
  %v406 = vld [vmem:[%s1 + $0x4ec] sm:$0xf]
  %v407 = vld [vmem:[%s1 + $0x4f0] sm:$0xf]
  %v408 = vld [vmem:[%s1 + $0x4f4] sm:$0xf]
  %v409 = vld [vmem:[%s1 + $0x4f8] sm:$0xf]
  %v410 = vld [vmem:[%s1 + $0x4fc] sm:$0xf]
  %v411 = vld [vmem:[%s1 + $0x500] sm:$0xf]
  %v412 = vld [vmem:[%s1 + $0x504] sm:$0xf]
  %v413 = vld [vmem:[%s1 + $0x508] sm:$0xf]
  %v414 = vld [vmem:[%s1 + $0x50c] sm:$0xf]
  %v415 = vld [vmem:[%s1 + $0x510] sm:$0xf]
  %v416 = vld [vmem:[%s1 + $0x514] sm:$0xf]
  %v417 = vld [vmem:[%s1 + $0x518] sm:$0xf]
  %v418 = vld [vmem:[%s1 + $0x51c] sm:$0xf]
  %v419 = vld [vmem:[%s1 + $0x520] sm:$0xf]
  %v420 = vld [vmem:[%s1 + $0x524] sm:$0xf]
  %v421 = vld [vmem:[%s1 + $0x528] sm:$0xf]
  %v422 = vld [vmem:[%s1 + $0x52c] sm:$0xf]
  %v423 = vld [vmem:[%s1 + $0x530] sm:$0xf]
  %v424 = vld [vmem:[%s1 + $0x534] sm:$0xf]
  %v425 = vld [vmem:[%s1 + $0x538] sm:$0xf]
  %v426 = vld [vmem:[%s1 + $0x53c] sm:$0xf]
  %v427 = vld [vmem:[%s1 + $0x540] sm:$0xf]
  %v428 = vld [vmem:[%s1 + $0x544] sm:$0xf]
  %v429 = vld [vmem:[%s1 + $0x548] sm:$0xf]
  %v430 = vld [vmem:[%s1 + $0x54c] sm:$0xf]
  %v431 = vld [vmem:[%s1 + $0x550] sm:$0xf]
  %v432 = vld [vmem:[%s1 + $0x554] sm:$0xf]
  %v433 = vld [vmem:[%s1 + $0x558] sm:$0xf]
  %v434 = vld [vmem:[%s1 + $0x55c] sm:$0xf]
  %v435 = vld [vmem:[%s1 + $0x560] sm:$0xf]
  %v436 = vld [vmem:[%s1 + $0x564] sm:$0xf]
  %v437 = vld [vmem:[%s1 + $0x568] sm:$0xf]
  %v438 = vld [vmem:[%s1 + $0x56c] sm:$0xf]
  %v439 = vld [vmem:[%s1 + $0x570] sm:$0xf]
  %v440 = vld [vmem:[%s1 + $0x574] sm:$0xf]
  %v441 = vld [vmem:[%s1 + $0x578] sm:$0xf]
  %v442 = vld [vmem:[%s1 + $0x57c] sm:$0xf]
  %v443 = vld [vmem:[%s1 + $0x580] sm:$0xf]
  %v444 = vld [vmem:[%s1 + $0x584] sm:$0xf]
  %v445 = vld [vmem:[%s1 + $0x588] sm:$0xf]
  %v446 = vld [vmem:[%s1 + $0x58c] sm:$0xf]
  %v447 = vld [vmem:[%s1 + $0x590] sm:$0xf]
  %v448 = vld [vmem:[%s1 + $0x594] sm:$0xf]
  %v449 = vld [vmem:[%s1 + $0x598] sm:$0xf]
  %v450 = vld [vmem:[%s1 + $0x59c] sm:$0xf]
  %v451 = vld [vmem:[%s1 + $0x5a0] sm:$0xf]
  %v452 = vld [vmem:[%s1 + $0x5a4] sm:$0xf]
  %v453 = vld [vmem:[%s1 + $0x5a8] sm:$0xf]
  %v454 = vld [vmem:[%s1 + $0x5ac] sm:$0xf]
  %v455 = vld [vmem:[%s1 + $0x5b0] sm:$0xf]
  %v456 = vld [vmem:[%s1 + $0x5b4] sm:$0xf]
  %v457 = vld [vmem:[%s1 + $0x5b8] sm:$0xf]
  %v458 = vld [vmem:[%s1 + $0x5bc] sm:$0xf]
  %v459 = vld [vmem:[%s1 + $0x5c0] sm:$0xf]
  %v460 = vld [vmem:[%s1 + $0x5c4] sm:$0xf]
  %v461 = vld [vmem:[%s1 + $0x5c8] sm:$0xf]
  %v462 = vld [vmem:[%s1 + $0x5cc] sm:$0xf]
  %v463 = vld [vmem:[%s1 + $0x5d0] sm:$0xf]
  %v464 = vld [vmem:[%s1 + $0x5d4] sm:$0xf]
  %v465 = vld [vmem:[%s1 + $0x5d8] sm:$0xf]
  %v466 = vld [vmem:[%s1 + $0x5dc] sm:$0xf]
  %v467 = vld [vmem:[%s1 + $0x5e0] sm:$0xf]
  %v468 = vld [vmem:[%s1 + $0x5e4] sm:$0xf]
  %v469 = vld [vmem:[%s1 + $0x5e8] sm:$0xf]
  %v470 = vld [vmem:[%s1 + $0x5ec] sm:$0xf]
  %v471 = vld [vmem:[%s1 + $0x5f0] sm:$0xf]
  %v472 = vld [vmem:[%s1 + $0x5f4] sm:$0xf]
  %v473 = vld [vmem:[%s1 + $0x5f8] sm:$0xf]
  %v474 = vld [vmem:[%s1 + $0x5fc] sm:$0xf]
  %v475 = vld [vmem:[%s1 + $0x600] sm:$0xf]
  %v476 = vld [vmem:[%s1 + $0x604] sm:$0xf]
  %v477 = vld [vmem:[%s1 + $0x608] sm:$0xf]
  %v478 = vld [vmem:[%s1 + $0x60c] sm:$0xf]
  %v479 = vld [vmem:[%s1 + $0x610] sm:$0xf]
  %v480 = vld [vmem:[%s1 + $0x614] sm:$0xf]
  %v481 = vld [vmem:[%s1 + $0x618] sm:$0xf]
  %v482 = vld [vmem:[%s1 + $0x61c] sm:$0xf]
  %v483 = vld [vmem:[%s1 + $0x620] sm:$0xf]
  %v484 = vld [vmem:[%s1 + $0x624] sm:$0xf]
  %v485 = vld [vmem:[%s1 + $0x628] sm:$0xf]
  %v486 = vld [vmem:[%s1 + $0x62c] sm:$0xf]
  %v487 = vld [vmem:[%s1 + $0x630] sm:$0xf]
  %v488 = vld [vmem:[%s1 + $0x634] sm:$0xf]
  %v489 = vld [vmem:[%s1 + $0x638] sm:$0xf]
  %v490 = vld [vmem:[%s1 + $0x63c] sm:$0xf]
  %v491 = vld [vmem:[%s1 + $0x640] sm:$0xf]
  %v492 = vld [vmem:[%s1 + $0x644] sm:$0xf]
  %v493 = vld [vmem:[%s1 + $0x648] sm:$0xf]
  %v494 = vld [vmem:[%s1 + $0x64c] sm:$0xf]
  %v495 = vld [vmem:[%s1 + $0x650] sm:$0xf]
  %v496 = vld [vmem:[%s1 + $0x654] sm:$0xf]
  %v497 = vld [vmem:[%s1 + $0x658] sm:$0xf]
  %v498 = vld [vmem:[%s1 + $0x65c] sm:$0xf]
  %v499 = vld [vmem:[%s1 + $0x660] sm:$0xf]
  %v500 = vld [vmem:[%s1 + $0x664] sm:$0xf]
  %v501 = vld [vmem:[%s1 + $0x668] sm:$0xf]
  %v502 = vld [vmem:[%s1 + $0x66c] sm:$0xf]
  %v503 = vld [vmem:[%s1 + $0x670] sm:$0xf]
  %v504 = vld [vmem:[%s1 + $0x674] sm:$0xf]
  %v505 = vld [vmem:[%s1 + $0x678] sm:$0xf]
  %v506 = vld [vmem:[%s1 + $0x67c] sm:$0xf]
  %v507 = vld [vmem:[%s1 + $0x680] sm:$0xf]
  %v508 = vld [vmem:[%s1 + $0x684] sm:$0xf]
  %v509 = vld [vmem:[%s1 + $0x688] sm:$0xf]
  %v510 = vld [vmem:[%s1 + $0x68c] sm:$0xf]
  %v511 = vld [vmem:[%s1 + $0x690] sm:$0xf]
  %v512 = vld [vmem:[%s1 + $0x694] sm:$0xf]
  %v513 = vld [vmem:[%s1 + $0x698] sm:$0xf]
  %v514 = vld [vmem:[%s1 + $0x69c] sm:$0xf]
  %v515 = vld [vmem:[%s1 + $0x6a0] sm:$0xf]
  %v516 = vld [vmem:[%s1 + $0x6a4] sm:$0xf]
  %v517 = vld [vmem:[%s1 + $0x6a8] sm:$0xf]
  %v518 = vld [vmem:[%s1 + $0x6ac] sm:$0xf]
  %v519 = vld [vmem:[%s1 + $0x6b0] sm:$0xf]
  %v520 = vld [vmem:[%s1 + $0x6b4] sm:$0xf]
  %v521 = vld [vmem:[%s1 + $0x6b8] sm:$0xf]
  %v522 = vld [vmem:[%s1 + $0x6bc] sm:$0xf]
  %v523 = vld [vmem:[%s1 + $0x6c0] sm:$0xf]
  %v524 = vld [vmem:[%s1 + $0x6c4] sm:$0xf]
  %v525 = vld [vmem:[%s1 + $0x6c8] sm:$0xf]
  %v526 = vld [vmem:[%s1 + $0x6cc] sm:$0xf]
  %v527 = vld [vmem:[%s1 + $0x6d0] sm:$0xf]
  %v528 = vld [vmem:[%s1 + $0x6d4] sm:$0xf]
  %v529 = vld [vmem:[%s1 + $0x6d8] sm:$0xf]
  %v530 = vld [vmem:[%s1 + $0x6dc] sm:$0xf]
  %v531 = vld [vmem:[%s1 + $0x6e0] sm:$0xf]
  %v532 = vld [vmem:[%s1 + $0x6e4] sm:$0xf]
  %v533 = vld [vmem:[%s1 + $0x6e8] sm:$0xf]
  %v534 = vld [vmem:[%s1 + $0x6ec] sm:$0xf]
  %v535 = vld [vmem:[%s1 + $0x6f0] sm:$0xf]
  %v536 = vld [vmem:[%s1 + $0x6f4] sm:$0xf]
  %v537 = vld [vmem:[%s1 + $0x6f8] sm:$0xf]
  %v538 = vld [vmem:[%s1 + $0x6fc] sm:$0xf]
  %v539 = vld [vmem:[%s1 + $0x700] sm:$0xf]
  %v540 = vld [vmem:[%s1 + $0x704] sm:$0xf]
  %v541 = vld [vmem:[%s1 + $0x708] sm:$0xf]
  %v542 = vld [vmem:[%s1 + $0x70c] sm:$0xf]
  %v543 = vld [vmem:[%s1 + $0x710] sm:$0xf]
  %v544 = vld [vmem:[%s1 + $0x714] sm:$0xf]
  %v545 = vld [vmem:[%s1 + $0x718] sm:$0xf]
  %v546 = vld [vmem:[%s1 + $0x71c] sm:$0xf]
  %v547 = vld [vmem:[%s1 + $0x720] sm:$0xf]
  %v548 = vld [vmem:[%s1 + $0x724] sm:$0xf]
  %v549 = vld [vmem:[%s1 + $0x728] sm:$0xf]
  %v550 = vld [vmem:[%s1 + $0x72c] sm:$0xf]
  %v551 = vld [vmem:[%s1 + $0x730] sm:$0xf]
  %v552 = vld [vmem:[%s1 + $0x734] sm:$0xf]
  %v553 = vld [vmem:[%s1 + $0x738] sm:$0xf]
  %v554 = vld [vmem:[%s1 + $0x73c] sm:$0xf]
  %v555 = vld [vmem:[%s1 + $0x740] sm:$0xf]
  %v556 = vld [vmem:[%s1 + $0x744] sm:$0xf]
  %v557 = vld [vmem:[%s1 + $0x748] sm:$0xf]
  %v558 = vld [vmem:[%s1 + $0x74c] sm:$0xf]
  %v559 = vld [vmem:[%s1 + $0x750] sm:$0xf]
  %v560 = vld [vmem:[%s1 + $0x754] sm:$0xf]
  %v561 = vld [vmem:[%s1 + $0x758] sm:$0xf]
  %v562 = vld [vmem:[%s1 + $0x75c] sm:$0xf]
  %v563 = vld [vmem:[%s1 + $0x760] sm:$0xf]
  %v564 = vld [vmem:[%s1 + $0x764] sm:$0xf]
  %v565 = vld [vmem:[%s1 + $0x768] sm:$0xf]
  %v566 = vld [vmem:[%s1 + $0x76c] sm:$0xf]
  %v567 = vld [vmem:[%s1 + $0x770] sm:$0xf]
  %v568 = vld [vmem:[%s1 + $0x774] sm:$0xf]
  %v569 = vld [vmem:[%s1 + $0x778] sm:$0xf]
  %v570 = vld [vmem:[%s1 + $0x77c] sm:$0xf]
  %v571 = vld [vmem:[%s1 + $0x780] sm:$0xf]
  %v572 = vld [vmem:[%s1 + $0x784] sm:$0xf]
  %v573 = vld [vmem:[%s1 + $0x788] sm:$0xf]
  %v574 = vld [vmem:[%s1 + $0x78c] sm:$0xf]
  %v575 = vld [vmem:[%s1 + $0x790] sm:$0xf]
  %v576 = vld [vmem:[%s1 + $0x794] sm:$0xf]
  %v577 = vld [vmem:[%s1 + $0x798] sm:$0xf]
  %v578 = vld [vmem:[%s1 + $0x79c] sm:$0xf]
  %v579 = vld [vmem:[%s1 + $0x7a0] sm:$0xf]
  %v580 = vld [vmem:[%s1 + $0x7a4] sm:$0xf]
  %v581 = vld [vmem:[%s1 + $0x7a8] sm:$0xf]
  %v582 = vld [vmem:[%s1 + $0x7ac] sm:$0xf]
  %v583 = vld [vmem:[%s1 + $0x7b0] sm:$0xf]
  %v584 = vld [vmem:[%s1 + $0x7b4] sm:$0xf]
  %v585 = vld [vmem:[%s1 + $0x7b8] sm:$0xf]
  %v586 = vld [vmem:[%s1 + $0x7bc] sm:$0xf]
  %v587 = vld [vmem:[%s1 + $0x7c0] sm:$0xf]
  %v588 = vld [vmem:[%s1 + $0x7c4] sm:$0xf]
  %v589 = vld [vmem:[%s1 + $0x7c8] sm:$0xf]
  %v590 = vld [vmem:[%s1 + $0x7cc] sm:$0xf]
  %v591 = vld [vmem:[%s1 + $0x7d0] sm:$0xf]
  %v592 = vld [vmem:[%s1 + $0x7d4] sm:$0xf]
  %v593 = vld [vmem:[%s1 + $0x7d8] sm:$0xf]
  %v594 = vld [vmem:[%s1 + $0x7dc] sm:$0xf]
  %v595 = vld [vmem:[%s1 + $0x7e0] sm:$0xf]
  %v596 = vld [vmem:[%s1 + $0x7e4] sm:$0xf]
  %v597 = vld [vmem:[%s1 + $0x7e8] sm:$0xf]
  %v598 = vld [vmem:[%s1 + $0x7ec] sm:$0xf]
  %v599 = vld [vmem:[%s1 + $0x7f0] sm:$0xf]
  %v600 = vld [vmem:[%s1 + $0x7f4] sm:$0xf]
  %v601 = vld [vmem:[%s1 + $0x7f8] sm:$0xf]
  %v602 = vld [vmem:[%s1 + $0x7fc] sm:$0xf]
  %v603 = vld [vmem:[%s1 + $0x800] sm:$0xf]
  %v604 = vld [vmem:[%s1 + $0x804] sm:$0xf]
  %v605 = vld [vmem:[%s1 + $0x808] sm:$0xf]
  %v606 = vld [vmem:[%s1 + $0x80c] sm:$0xf]
  %v607 = vld [vmem:[%s1 + $0x810] sm:$0xf]
  %v608 = vld [vmem:[%s1 + $0x814] sm:$0xf]
  %v609 = vld [vmem:[%s1 + $0x818] sm:$0xf]
  %v610 = vld [vmem:[%s1 + $0x81c] sm:$0xf]
  %v611 = vld [vmem:[%s1 + $0x820] sm:$0xf]
  %v612 = vld [vmem:[%s1 + $0x824] sm:$0xf]
  %v613 = vld [vmem:[%s1 + $0x828] sm:$0xf]
  %v614 = vld [vmem:[%s1 + $0x82c] sm:$0xf]
  %v615 = vld [vmem:[%s1 + $0x830] sm:$0xf]
  %v616 = vld [vmem:[%s1 + $0x834] sm:$0xf]
  %v617 = vld [vmem:[%s1 + $0x838] sm:$0xf]
  %v618 = vld [vmem:[%s1 + $0x83c] sm:$0xf]
  %v619 = vld [vmem:[%s1 + $0x840] sm:$0xf]
  %v620 = vld [vmem:[%s1 + $0x844] sm:$0xf]
  %v621 = vld [vmem:[%s1 + $0x848] sm:$0xf]
  %v622 = vld [vmem:[%s1 + $0x84c] sm:$0xf]
  %v623 = vld [vmem:[%s1 + $0x850] sm:$0xf]
  %v624 = vld [vmem:[%s1 + $0x854] sm:$0xf]
  %v625 = vld [vmem:[%s1 + $0x858] sm:$0xf]
  %v626 = vld [vmem:[%s1 + $0x85c] sm:$0xf]
  %v627 = vld [vmem:[%s1 + $0x860] sm:$0xf]
  %v628 = vld [vmem:[%s1 + $0x864] sm:$0xf]
  %v629 = vld [vmem:[%s1 + $0x868] sm:$0xf]
  %v630 = vld [vmem:[%s1 + $0x86c] sm:$0xf]
  %v631 = vld [vmem:[%s1 + $0x870] sm:$0xf]
  %v632 = vld [vmem:[%s1 + $0x874] sm:$0xf]
  %v633 = vld [vmem:[%s1 + $0x878] sm:$0xf]
  %v634 = vld [vmem:[%s1 + $0x87c] sm:$0xf]
  %v635 = vld [vmem:[%s1 + $0x880] sm:$0xf]
  %v636 = vld [vmem:[%s1 + $0x884] sm:$0xf]
  %v637 = vld [vmem:[%s1 + $0x888] sm:$0xf]
  %v638 = vld [vmem:[%s1 + $0x88c] sm:$0xf]
  %v639 = vld [vmem:[%s1 + $0x890] sm:$0xf]
  %v640 = vld [vmem:[%s1 + $0x894] sm:$0xf]
  %v641 = vld [vmem:[%s1 + $0x898] sm:$0xf]
  %v642 = vld [vmem:[%s1 + $0x89c] sm:$0xf]
  %v643 = vld [vmem:[%s1 + $0x8a0] sm:$0xf]
  %v644 = vld [vmem:[%s1 + $0x8a4] sm:$0xf]
  %v645 = vld [vmem:[%s1 + $0x8a8] sm:$0xf]
  %v646 = vld [vmem:[%s1 + $0x8ac] sm:$0xf]
  %v647 = vld [vmem:[%s1 + $0x8b0] sm:$0xf]
  %v648 = vld [vmem:[%s1 + $0x8b4] sm:$0xf]
  %v649 = vld [vmem:[%s1 + $0x8b8] sm:$0xf]
  %v650 = vld [vmem:[%s1 + $0x8bc] sm:$0xf]
  %v651 = vld [vmem:[%s1 + $0x8c0] sm:$0xf]
  %v652 = vld [vmem:[%s1 + $0x8c4] sm:$0xf]
  %v653 = vld [vmem:[%s1 + $0x8c8] sm:$0xf]
  %v654 = vld [vmem:[%s1 + $0x8cc] sm:$0xf]
  %v655 = vld [vmem:[%s1 + $0x8d0] sm:$0xf]
  %v656 = vld [vmem:[%s1 + $0x8d4] sm:$0xf]
  %v657 = vld [vmem:[%s1 + $0x8d8] sm:$0xf]
  %v658 = vld [vmem:[%s1 + $0x8dc] sm:$0xf]
  %v659 = vld [vmem:[%s1 + $0x8e0] sm:$0xf]
  %v660 = vld [vmem:[%s1 + $0x8e4] sm:$0xf]
  %v661 = vld [vmem:[%s1 + $0x8e8] sm:$0xf]
  %v662 = vld [vmem:[%s1 + $0x8ec] sm:$0xf]
  %v663 = vld [vmem:[%s1 + $0x8f0] sm:$0xf]
  %v664 = vld [vmem:[%s1 + $0x8f4] sm:$0xf]
  %v665 = vld [vmem:[%s1 + $0x8f8] sm:$0xf]
  %v666 = vld [vmem:[%s1 + $0x8fc] sm:$0xf]
  %v667 = vld [vmem:[%s1 + $0x900] sm:$0xf]
  %v668 = vld [vmem:[%s1 + $0x904] sm:$0xf]
  %v669 = vld [vmem:[%s1 + $0x908] sm:$0xf]
  %v670 = vld [vmem:[%s1 + $0x90c] sm:$0xf]
  %v671 = vld [vmem:[%s1 + $0x910] sm:$0xf]
  %v672 = vld [vmem:[%s1 + $0x914] sm:$0xf]
  %v673 = vld [vmem:[%s1 + $0x918] sm:$0xf]
  %v674 = vld [vmem:[%s1 + $0x91c] sm:$0xf]
  %v675 = vld [vmem:[%s1 + $0x920] sm:$0xf]
  %v676 = vld [vmem:[%s1 + $0x924] sm:$0xf]
  %v677 = vld [vmem:[%s1 + $0x928] sm:$0xf]
  %v678 = vld [vmem:[%s1 + $0x92c] sm:$0xf]
  %v679 = vld [vmem:[%s1 + $0x930] sm:$0xf]
  %v680 = vld [vmem:[%s1 + $0x934] sm:$0xf]
  %v681 = vld [vmem:[%s1 + $0x938] sm:$0xf]
  %v682 = vld [vmem:[%s1 + $0x93c] sm:$0xf]
  %v683 = vld [vmem:[%s1 + $0x940] sm:$0xf]
  %v684 = vld [vmem:[%s1 + $0x944] sm:$0xf]
  %v685 = vld [vmem:[%s1 + $0x948] sm:$0xf]
  %v686 = vld [vmem:[%s1 + $0x94c] sm:$0xf]
  %v687 = vld [vmem:[%s1 + $0x950] sm:$0xf]
  %v688 = vld [vmem:[%s1 + $0x954] sm:$0x3]
  %v689 = vld [vmem:[%s2] sm:$0x1]
  %v691 = vlaneseq
  %v692 = vshrl.u32 %v691, 7
  %v693 = vsub.s32 0, %v692
  %v694 = vrot.slane %v689, %v693
  %v772 = vunpack.c.l.b16 %v15
  %v773 = vunpack.c.h.b16 %v15
  %v774 = vunpack.c.l.b16 %v16
  %v775 = vunpack.c.h.b16 %v16
  %v776 = vunpack.c.l.b16 %v17
  %v777 = vunpack.c.h.b16 %v17
  %v778 = vunpack.c.l.b16 %v18
  %v779 = vunpack.c.h.b16 %v18
  %v780 = vunpack.c.l.b16 %v19
  %v781 = vunpack.c.h.b16 %v19
  %v782 = vunpack.c.l.b16 %v20
  %v783 = vunpack.c.h.b16 %v20
  %v784 = vunpack.c.l.b16 %v21
  %v785 = vunpack.c.h.b16 %v21
  %v786 = vunpack.c.l.b16 %v22
  %v787 = vunpack.c.h.b16 %v22
  %v788 = vunpack.c.l.b16 %v23
  %v789 = vunpack.c.h.b16 %v23
  %v790 = vunpack.c.l.b16 %v24
  %v791 = vunpack.c.h.b16 %v24
  %v792 = vunpack.c.l.b16 %v25
  %v793 = vunpack.c.h.b16 %v25
  %v794 = vunpack.c.l.b16 %v26
  %v795 = vunpack.c.h.b16 %v26
  %v796 = vunpack.c.l.b16 %v27
  %v797 = vunpack.c.h.b16 %v27
  %v798 = vunpack.c.l.b16 %v28
  %v799 = vunpack.c.h.b16 %v28
  %v800 = vunpack.c.l.b16 %v29
  %v801 = vunpack.c.h.b16 %v29
  %v802 = vunpack.c.l.b16 %v30
  %v803 = vunpack.c.h.b16 %v30
  %v804 = vunpack.c.l.b16 %v31
  %v805 = vunpack.c.h.b16 %v31
  %v806 = vunpack.c.l.b16 %v32
  %v807 = vunpack.c.h.b16 %v32
  %v808 = vunpack.c.l.b16 %v33
  %v809 = vunpack.c.h.b16 %v33
  %v810 = vunpack.c.l.b16 %v34
  %v811 = vunpack.c.h.b16 %v34
  %v812 = vunpack.c.l.b16 %v35
  %v813 = vunpack.c.h.b16 %v35
  %v814 = vunpack.c.l.b16 %v36
  %v815 = vunpack.c.h.b16 %v36
  %v816 = vunpack.c.l.b16 %v37
  %v817 = vunpack.c.h.b16 %v37
  %v818 = vunpack.c.l.b16 %v38
  %v819 = vunpack.c.h.b16 %v38
  %v820 = vunpack.c.l.b16 %v39
  %v821 = vunpack.c.h.b16 %v39
  %v822 = vunpack.c.l.b16 %v40
  %v823 = vunpack.c.h.b16 %v40
  %v824 = vunpack.c.l.b16 %v41
  %v825 = vunpack.c.h.b16 %v41
  %v826 = vunpack.c.l.b16 %v42
  %v827 = vunpack.c.h.b16 %v42
  %v828 = vunpack.c.l.b16 %v43
  %v829 = vunpack.c.h.b16 %v43
  %v830 = vunpack.c.l.b16 %v44
  %v831 = vunpack.c.h.b16 %v44
  %v832 = vunpack.c.l.b16 %v45
  %v833 = vunpack.c.h.b16 %v45
  %v834 = vunpack.c.l.b16 %v46
  %v835 = vunpack.c.h.b16 %v46
  %v836 = vunpack.c.l.b16 %v47
  %v837 = vunpack.c.h.b16 %v47
  %v838 = vunpack.c.l.b16 %v48
  %v839 = vunpack.c.h.b16 %v48
  %v840 = vunpack.c.l.b16 %v49
  %v841 = vunpack.c.h.b16 %v49
  %v842 = vunpack.c.l.b16 %v50
  %v843 = vunpack.c.h.b16 %v50
  %v844 = vunpack.c.l.b16 %v51
  %v845 = vunpack.c.h.b16 %v51
  %v846 = vunpack.c.l.b16 %v52
  %v847 = vunpack.c.h.b16 %v52
  %v848 = vunpack.c.l.b16 %v53
  %v849 = vunpack.c.h.b16 %v53
  %v850 = vunpack.c.l.b16 %v54
  %v851 = vunpack.c.h.b16 %v54
  %v852 = vunpack.c.l.b16 %v55
  %v853 = vunpack.c.h.b16 %v55
  %v854 = vunpack.c.l.b16 %v56
  %v855 = vunpack.c.h.b16 %v56
  %v856 = vunpack.c.l.b16 %v57
  %v857 = vunpack.c.h.b16 %v57
  %v858 = vunpack.c.l.b16 %v58
  %v859 = vunpack.c.h.b16 %v58
  %v860 = vunpack.c.l.b16 %v59
  %v861 = vunpack.c.h.b16 %v59
  %v862 = vunpack.c.l.b16 %v60
  %v863 = vunpack.c.h.b16 %v60
  %v864 = vunpack.c.l.b16 %v61
  %v865 = vunpack.c.h.b16 %v61
  %v866 = vunpack.c.l.b16 %v62
  %v867 = vunpack.c.h.b16 %v62
  %v868 = vunpack.c.l.b16 %v63
  %v869 = vunpack.c.h.b16 %v63
  %v870 = vunpack.c.l.b16 %v64
  %v871 = vunpack.c.h.b16 %v64
  %v872 = vunpack.c.l.b16 %v65
  %v873 = vunpack.c.h.b16 %v65
  %v874 = vunpack.c.l.b16 %v66
  %v875 = vunpack.c.h.b16 %v66
  %v876 = vunpack.c.l.b16 %v67
  %v877 = vunpack.c.h.b16 %v67
  %v878 = vunpack.c.l.b16 %v68
  %v879 = vunpack.c.h.b16 %v68
  %v880 = vunpack.c.l.b16 %v69
  %v881 = vunpack.c.h.b16 %v69
  %v882 = vunpack.c.l.b16 %v70
  %v883 = vunpack.c.h.b16 %v70
  %v884 = vunpack.c.l.b16 %v71
  %v885 = vunpack.c.h.b16 %v71
  %v886 = vunpack.c.l.b16 %v72
  %v887 = vunpack.c.h.b16 %v72
  %v888 = vunpack.c.l.b16 %v73
  %v889 = vunpack.c.h.b16 %v73
  %v890 = vunpack.c.l.b16 %v74
  %v891 = vunpack.c.h.b16 %v74
  %v892 = vunpack.c.l.b16 %v75
  %v893 = vunpack.c.h.b16 %v75
  %v894 = vunpack.c.l.b16 %v76
  %v895 = vunpack.c.h.b16 %v76
  %v896 = vunpack.c.l.b16 %v77
  %v897 = vunpack.c.h.b16 %v77
  %v898 = vunpack.c.l.b16 %v78
  %v899 = vunpack.c.h.b16 %v78
  %v900 = vunpack.c.l.b16 %v79
  %v901 = vunpack.c.h.b16 %v79
  %v902 = vunpack.c.l.b16 %v80
  %v903 = vunpack.c.h.b16 %v80
  %v904 = vunpack.c.l.b16 %v81
  %v905 = vunpack.c.h.b16 %v81
  %v906 = vunpack.c.l.b16 %v82
  %v907 = vunpack.c.h.b16 %v82
  %v908 = vunpack.c.l.b16 %v83
  %v909 = vunpack.c.h.b16 %v83
  %v910 = vunpack.c.l.b16 %v84
  %v911 = vunpack.c.h.b16 %v84
  %v912 = vunpack.c.l.b16 %v85
  %v913 = vunpack.c.h.b16 %v85
  %v914 = vunpack.c.l.b16 %v86
  %v915 = vunpack.c.h.b16 %v86
  %v916 = vunpack.c.l.b16 %v87
  %v917 = vunpack.c.h.b16 %v87
  %v918 = vunpack.c.l.b16 %v88
  %v919 = vunpack.c.h.b16 %v88
  %v920 = vunpack.c.l.b16 %v89
  %v921 = vunpack.c.h.b16 %v89
  %v922 = vunpack.c.l.b16 %v90
  %v923 = vunpack.c.h.b16 %v90
  %v924 = vpack.c.b16 %v810, %v772
  %v925 = vpack.c.b16 %v811, %v773
  %v926 = vpack.c.b16 %v812, %v774
  %v927 = vpack.c.b16 %v813, %v775
  %v928 = vpack.c.b16 %v814, %v776
  %v929 = vpack.c.b16 %v815, %v777
  %v930 = vpack.c.b16 %v816, %v778
  %v931 = vpack.c.b16 %v817, %v779
  %v932 = vpack.c.b16 %v818, %v780
  %v933 = vpack.c.b16 %v819, %v781
  %v934 = vpack.c.b16 %v820, %v782
  %v935 = vpack.c.b16 %v821, %v783
  %v936 = vpack.c.b16 %v822, %v784
  %v937 = vpack.c.b16 %v823, %v785
  %v938 = vpack.c.b16 %v824, %v786
  %v939 = vpack.c.b16 %v825, %v787
  %v940 = vpack.c.b16 %v826, %v788
  %v941 = vpack.c.b16 %v827, %v789
  %v942 = vpack.c.b16 %v828, %v790
  %v943 = vpack.c.b16 %v829, %v791
  %v944 = vpack.c.b16 %v830, %v792
  %v945 = vpack.c.b16 %v831, %v793
  %v946 = vpack.c.b16 %v832, %v794
  %v947 = vpack.c.b16 %v833, %v795
  %v948 = vpack.c.b16 %v834, %v796
  %v949 = vpack.c.b16 %v835, %v797
  %v950 = vpack.c.b16 %v836, %v798
  %v951 = vpack.c.b16 %v837, %v799
  %v952 = vpack.c.b16 %v838, %v800
  %v953 = vpack.c.b16 %v839, %v801
  %v954 = vpack.c.b16 %v840, %v802
  %v955 = vpack.c.b16 %v841, %v803
  %v956 = vpack.c.b16 %v842, %v804
  %v957 = vpack.c.b16 %v843, %v805
  %v958 = vpack.c.b16 %v844, %v806
  %v959 = vpack.c.b16 %v845, %v807
  %v960 = vpack.c.b16 %v846, %v808
  %v961 = vpack.c.b16 %v847, %v809
  %v962 = vpack.c.b16 %v886, %v848
  %v963 = vpack.c.b16 %v887, %v849
  %v964 = vpack.c.b16 %v888, %v850
  %v965 = vpack.c.b16 %v889, %v851
  %v966 = vpack.c.b16 %v890, %v852
  %v967 = vpack.c.b16 %v891, %v853
  %v968 = vpack.c.b16 %v892, %v854
  %v969 = vpack.c.b16 %v893, %v855
  %v970 = vpack.c.b16 %v894, %v856
  %v971 = vpack.c.b16 %v895, %v857
  %v972 = vpack.c.b16 %v896, %v858
  %v973 = vpack.c.b16 %v897, %v859
  %v974 = vpack.c.b16 %v898, %v860
  %v975 = vpack.c.b16 %v899, %v861
  %v976 = vpack.c.b16 %v900, %v862
  %v977 = vpack.c.b16 %v901, %v863
  %v978 = vpack.c.b16 %v902, %v864
  %v979 = vpack.c.b16 %v903, %v865
  %v980 = vpack.c.b16 %v904, %v866
  %v981 = vpack.c.b16 %v905, %v867
  %v982 = vpack.c.b16 %v906, %v868
  %v983 = vpack.c.b16 %v907, %v869
  %v984 = vpack.c.b16 %v908, %v870
  %v985 = vpack.c.b16 %v909, %v871
  %v986 = vpack.c.b16 %v910, %v872
  %v987 = vpack.c.b16 %v911, %v873
  %v988 = vpack.c.b16 %v912, %v874
  %v989 = vpack.c.b16 %v913, %v875
  %v990 = vpack.c.b16 %v914, %v876
  %v991 = vpack.c.b16 %v915, %v877
  %v992 = vpack.c.b16 %v916, %v878
  %v993 = vpack.c.b16 %v917, %v879
  %v994 = vpack.c.b16 %v918, %v880
  %v995 = vpack.c.b16 %v919, %v881
  %v996 = vpack.c.b16 %v920, %v882
  %v997 = vpack.c.b16 %v921, %v883
  %v998 = vpack.c.b16 %v922, %v884
  %v999 = vpack.c.b16 %v923, %v885
  %v1672 = vunpack.c.l.b16 %v91
  %v1673 = vunpack.c.l.b16 %v92
  %v1674 = vunpack.c.l.b16 %v93
  %v1675 = vunpack.c.l.b16 %v94
  %v1676 = vunpack.c.l.b16 %v95
  %v1677 = vunpack.c.l.b16 %v96
  %v1678 = vunpack.c.l.b16 %v97
  %v1679 = vunpack.c.l.b16 %v98
  %v1680 = vunpack.c.l.b16 %v99
  %v1681 = vunpack.c.l.b16 %v100
  %v1682 = vunpack.c.l.b16 %v101
  %v1683 = vunpack.c.l.b16 %v102
  %v1684 = vunpack.c.l.b16 %v103
  %v1685 = vunpack.c.l.b16 %v104
  %v1686 = vunpack.c.l.b16 %v105
  %v1687 = vunpack.c.l.b16 %v106
  %v1688 = vunpack.c.l.b16 %v107
  %v1689 = vunpack.c.l.b16 %v108
  %v1690 = vunpack.c.l.b16 %v109
  %v1691 = vunpack.c.l.b16 %v110
  %v1692 = vunpack.c.l.b16 %v111
  %v1693 = vunpack.c.l.b16 %v112
  %v1694 = vunpack.c.l.b16 %v113
  %v1695 = vunpack.c.l.b16 %v114
  %v1696 = vunpack.c.l.b16 %v115
  %v1697 = vunpack.c.l.b16 %v116
  %v1698 = vunpack.c.l.b16 %v117
  %v1699 = vunpack.c.l.b16 %v118
  %v1700 = vunpack.c.l.b16 %v119
  %v1701 = vunpack.c.l.b16 %v120
  %v1702 = vunpack.c.l.b16 %v121
  %v1703 = vunpack.c.l.b16 %v122
  %v1704 = vunpack.c.l.b16 %v123
  %v1705 = vunpack.c.l.b16 %v124
  %v1706 = vunpack.c.l.b16 %v125
  %v1707 = vunpack.c.l.b16 %v126
  %v1708 = vunpack.c.l.b16 %v127
  %v1709 = vunpack.c.l.b16 %v128
  %v1710 = vunpack.c.l.b16 %v129
  %v1711 = vunpack.c.l.b16 %v130
  %v1712 = vunpack.c.l.b16 %v131
  %v1713 = vunpack.c.l.b16 %v132
  %v1714 = vunpack.c.l.b16 %v133
  %v1715 = vunpack.c.l.b16 %v134
  %v1716 = vunpack.c.l.b16 %v135
  %v1717 = vunpack.c.l.b16 %v136
  %v1718 = vunpack.c.l.b16 %v137
  %v1719 = vunpack.c.l.b16 %v138
  %v1720 = vunpack.c.l.b16 %v139
  %v1721 = vunpack.c.l.b16 %v140
  %v1722 = vunpack.c.l.b16 %v141
  %v1723 = vunpack.c.l.b16 %v142
  %v1724 = vunpack.c.l.b16 %v143
  %v1725 = vunpack.c.l.b16 %v144
  %v1726 = vunpack.c.l.b16 %v145
  %v1727 = vunpack.c.l.b16 %v146
  %v1728 = vunpack.c.l.b16 %v147
  %v1729 = vunpack.c.l.b16 %v148
  %v1730 = vunpack.c.l.b16 %v149
  %v1731 = vunpack.c.l.b16 %v150
  %v1732 = vunpack.c.l.b16 %v151
  %v1733 = vunpack.c.l.b16 %v152
  %v1734 = vunpack.c.l.b16 %v153
  %v1735 = vunpack.c.l.b16 %v154
  %v1736 = vunpack.c.l.b16 %v155
  %v1737 = vunpack.c.l.b16 %v156
  %v1738 = vunpack.c.l.b16 %v157
  %v1739 = vunpack.c.l.b16 %v158
  %v1740 = vunpack.c.l.b16 %v159
  %v1741 = vunpack.c.l.b16 %v160
  %v1742 = vunpack.c.l.b16 %v161
  %v1743 = vunpack.c.l.b16 %v162
  %v1744 = vunpack.c.l.b16 %v163
  %v1745 = vunpack.c.l.b16 %v164
  %v1746 = vunpack.c.l.b16 %v165
  %v1747 = vunpack.c.l.b16 %v166
  %v1748 = vunpack.c.l.b16 %v167
  %v1749 = vunpack.c.l.b16 %v168
  %v1750 = vunpack.c.l.b16 %v169
  %v1751 = vunpack.c.l.b16 %v170
  %v1752 = vunpack.c.l.b16 %v171
  %v1753 = vunpack.c.l.b16 %v172
  %v1754 = vunpack.c.l.b16 %v173
  %v1755 = vunpack.c.l.b16 %v174
  %v1756 = vunpack.c.l.b16 %v175
  %v1757 = vunpack.c.l.b16 %v176
  %v1758 = vunpack.c.l.b16 %v177
  %v1759 = vunpack.c.l.b16 %v178
  %v1760 = vunpack.c.l.b16 %v179
  %v1761 = vunpack.c.l.b16 %v180
  %v1762 = vunpack.c.l.b16 %v181
  %v1763 = vunpack.c.l.b16 %v182
  %v1764 = vunpack.c.l.b16 %v183
  %v1765 = vunpack.c.l.b16 %v184
  %v1766 = vunpack.c.l.b16 %v185
  %v1767 = vunpack.c.l.b16 %v186
  %v1768 = vunpack.c.l.b16 %v187
  %v1769 = vunpack.c.l.b16 %v188
  %v1770 = vunpack.c.l.b16 %v189
  %v1771 = vunpack.c.l.b16 %v190
  %v1772 = vunpack.c.l.b16 %v191
  %v1773 = vunpack.c.l.b16 %v192
  %v1774 = vunpack.c.l.b16 %v193
  %v1775 = vunpack.c.l.b16 %v194
  %v1776 = vunpack.c.l.b16 %v195
  %v1777 = vunpack.c.l.b16 %v196
  %v1778 = vunpack.c.l.b16 %v197
  %v1779 = vunpack.c.l.b16 %v198
  %v1780 = vunpack.c.l.b16 %v199
  %v1781 = vunpack.c.l.b16 %v200
  %v1782 = vunpack.c.l.b16 %v201
  %v1783 = vunpack.c.l.b16 %v202
  %v1784 = vunpack.c.l.b16 %v203
  %v1785 = vunpack.c.l.b16 %v204
  %v1786 = vunpack.c.l.b16 %v205
  %v1787 = vunpack.c.l.b16 %v206
  %v1788 = vunpack.c.l.b16 %v207
  %v1789 = vunpack.c.l.b16 %v208
  %v1790 = vunpack.c.l.b16 %v209
  %v1791 = vunpack.c.l.b16 %v210
  %v1792 = vunpack.c.l.b16 %v211
  %v1793 = vunpack.c.l.b16 %v212
  %v1794 = vunpack.c.l.b16 %v213
  %v1795 = vunpack.c.l.b16 %v214
  %v1796 = vunpack.c.l.b16 %v215
  %v1797 = vunpack.c.l.b16 %v216
  %v1798 = vunpack.c.l.b16 %v217
  %v1799 = vunpack.c.l.b16 %v218
  %v1800 = vunpack.c.l.b16 %v219
  %v1801 = vunpack.c.l.b16 %v220
  %v1802 = vunpack.c.l.b16 %v221
  %v1803 = vunpack.c.l.b16 %v222
  %v1804 = vunpack.c.l.b16 %v223
  %v1805 = vunpack.c.l.b16 %v224
  %v1806 = vunpack.c.l.b16 %v225
  %v1807 = vunpack.c.l.b16 %v226
  %v1808 = vunpack.c.l.b16 %v227
  %v1809 = vunpack.c.l.b16 %v228
  %v1810 = vunpack.c.l.b16 %v229
  %v1811 = vunpack.c.l.b16 %v230
  %v1812 = vunpack.c.l.b16 %v231
  %v1813 = vunpack.c.l.b16 %v232
  %v1814 = vunpack.c.l.b16 %v233
  %v1815 = vunpack.c.l.b16 %v234
  %v1816 = vunpack.c.l.b16 %v235
  %v1817 = vunpack.c.l.b16 %v236
  %v1818 = vunpack.c.l.b16 %v237
  %v1819 = vunpack.c.l.b16 %v238
  %v1820 = vunpack.c.l.b16 %v239
  %v1821 = vunpack.c.l.b16 %v240
  %v1822 = vunpack.c.l.b16 %v241
  %v1823 = vunpack.c.l.b16 %v242
  %v1824 = vunpack.c.l.b16 %v243
  %v1825 = vunpack.c.l.b16 %v244
  %v1826 = vunpack.c.l.b16 %v245
  %v1827 = vunpack.c.l.b16 %v246
  %v1828 = vunpack.c.l.b16 %v247
  %v1829 = vunpack.c.l.b16 %v248
  %v1830 = vunpack.c.l.b16 %v249
  %v1831 = vunpack.c.l.b16 %v250
  %v1832 = vunpack.c.l.b16 %v251
  %v1833 = vunpack.c.l.b16 %v252
  %v1834 = vunpack.c.l.b16 %v253
  %v1835 = vunpack.c.l.b16 %v254
  %v1836 = vunpack.c.l.b16 %v255
  %v1837 = vunpack.c.l.b16 %v256
  %v1838 = vunpack.c.l.b16 %v257
  %v1839 = vunpack.c.l.b16 %v258
  %v1840 = vunpack.c.l.b16 %v259
  %v1841 = vunpack.c.l.b16 %v260
  %v1842 = vunpack.c.l.b16 %v261
  %v1843 = vunpack.c.l.b16 %v262
  %v1844 = vunpack.c.l.b16 %v263
  %v1845 = vunpack.c.l.b16 %v264
  %v1846 = vunpack.c.l.b16 %v265
  %v1847 = vunpack.c.l.b16 %v266
  %v1848 = vunpack.c.l.b16 %v267
  %v1849 = vunpack.c.l.b16 %v268
  %v1850 = vunpack.c.l.b16 %v269
  %v1851 = vunpack.c.l.b16 %v270
  %v1852 = vunpack.c.l.b16 %v271
  %v1853 = vunpack.c.l.b16 %v272
  %v1854 = vunpack.c.l.b16 %v273
  %v1855 = vunpack.c.l.b16 %v274
  %v1856 = vunpack.c.l.b16 %v275
  %v1857 = vunpack.c.l.b16 %v276
  %v1858 = vunpack.c.l.b16 %v277
  %v1859 = vunpack.c.l.b16 %v278
  %v1860 = vunpack.c.l.b16 %v279
  %v1861 = vunpack.c.l.b16 %v280
  %v1862 = vunpack.c.l.b16 %v281
  %v1863 = vunpack.c.l.b16 %v282
  %v1864 = vunpack.c.l.b16 %v283
  %v1865 = vunpack.c.l.b16 %v284
  %v1866 = vunpack.c.l.b16 %v285
  %v1867 = vunpack.c.l.b16 %v286
  %v1868 = vunpack.c.l.b16 %v287
  %v1869 = vunpack.c.l.b16 %v288
  %v1870 = vunpack.c.l.b16 %v289
  %v1871 = vunpack.c.l.b16 %v290
  %v1872 = vunpack.c.l.b16 %v291
  %v1873 = vunpack.c.l.b16 %v292
  %v1874 = vunpack.c.l.b16 %v293
  %v1875 = vunpack.c.l.b16 %v294
  %v1876 = vunpack.c.l.b16 %v295
  %v1877 = vunpack.c.l.b16 %v296
  %v1878 = vunpack.c.l.b16 %v297
  %v1879 = vunpack.c.l.b16 %v298
  %v1880 = vunpack.c.l.b16 %v299
  %v1881 = vunpack.c.l.b16 %v300
  %v1882 = vunpack.c.l.b16 %v301
  %v1883 = vunpack.c.l.b16 %v302
  %v1884 = vunpack.c.l.b16 %v303
  %v1885 = vunpack.c.l.b16 %v304
  %v1886 = vunpack.c.l.b16 %v305
  %v1887 = vunpack.c.l.b16 %v306
  %v1888 = vunpack.c.l.b16 %v307
  %v1889 = vunpack.c.l.b16 %v308
  %v1890 = vunpack.c.l.b16 %v309
  %v1891 = vunpack.c.l.b16 %v310
  %v1892 = vunpack.c.l.b16 %v311
  %v1893 = vunpack.c.l.b16 %v312
  %v1894 = vunpack.c.l.b16 %v313
  %v1895 = vunpack.c.l.b16 %v314
  %v1896 = vunpack.c.l.b16 %v315
  %v1897 = vunpack.c.l.b16 %v316
  %v1898 = vunpack.c.l.b16 %v317
  %v1899 = vunpack.c.l.b16 %v318
  %v1900 = vunpack.c.l.b16 %v319
  %v1901 = vunpack.c.l.b16 %v320
  %v1902 = vunpack.c.l.b16 %v321
  %v1903 = vunpack.c.l.b16 %v322
  %v1904 = vunpack.c.l.b16 %v323
  %v1905 = vunpack.c.l.b16 %v324
  %v1906 = vunpack.c.l.b16 %v325
  %v1907 = vunpack.c.l.b16 %v326
  %v1908 = vunpack.c.l.b16 %v327
  %v1909 = vunpack.c.l.b16 %v328
  %v1910 = vunpack.c.l.b16 %v329
  %v1911 = vunpack.c.l.b16 %v330
  %v1912 = vunpack.c.l.b16 %v331
  %v1913 = vunpack.c.l.b16 %v332
  %v1914 = vunpack.c.l.b16 %v333
  %v1915 = vunpack.c.l.b16 %v334
  %v1916 = vunpack.c.l.b16 %v335
  %v1917 = vunpack.c.l.b16 %v336
  %v1918 = vunpack.c.l.b16 %v337
  %v1919 = vunpack.c.l.b16 %v338
  %v1920 = vunpack.c.l.b16 %v339
  %v1921 = vunpack.c.l.b16 %v340
  %v1922 = vunpack.c.l.b16 %v341
  %v1923 = vunpack.c.l.b16 %v342
  %v1924 = vunpack.c.l.b16 %v343
  %v1925 = vunpack.c.l.b16 %v344
  %v1926 = vunpack.c.l.b16 %v345
  %v1927 = vunpack.c.l.b16 %v346
  %v1928 = vunpack.c.l.b16 %v347
  %v1929 = vunpack.c.l.b16 %v348
  %v1930 = vunpack.c.l.b16 %v349
  %v1931 = vunpack.c.l.b16 %v350
  %v1932 = vunpack.c.l.b16 %v351
  %v1933 = vunpack.c.l.b16 %v352
  %v1934 = vunpack.c.l.b16 %v353
  %v1935 = vunpack.c.l.b16 %v354
  %v1936 = vunpack.c.l.b16 %v355
  %v1937 = vunpack.c.l.b16 %v356
  %v1938 = vunpack.c.l.b16 %v357
  %v1939 = vunpack.c.l.b16 %v358
  %v1940 = vunpack.c.l.b16 %v359
  %v1941 = vunpack.c.l.b16 %v360
  %v1942 = vunpack.c.l.b16 %v361
  %v1943 = vunpack.c.l.b16 %v362
  %v1944 = vunpack.c.l.b16 %v363
  %v1945 = vunpack.c.l.b16 %v364
  %v1946 = vunpack.c.l.b16 %v365
  %v1947 = vunpack.c.l.b16 %v366
  %v1948 = vunpack.c.l.b16 %v367
  %v1949 = vunpack.c.l.b16 %v368
  %v1950 = vunpack.c.l.b16 %v369
  %v1951 = vunpack.c.l.b16 %v370
  %v1952 = vunpack.c.l.b16 %v371
  %v1953 = vunpack.c.l.b16 %v372
  %v1954 = vunpack.c.l.b16 %v373
  %v1955 = vunpack.c.l.b16 %v374
  %v1956 = vunpack.c.l.b16 %v375
  %v1957 = vunpack.c.l.b16 %v376
  %v1958 = vunpack.c.l.b16 %v377
  %v1959 = vunpack.c.l.b16 %v378
  %v1960 = vunpack.c.l.b16 %v379
  %v1961 = vunpack.c.l.b16 %v380
  %v1962 = vunpack.c.l.b16 %v381
  %v1963 = vunpack.c.l.b16 %v382
  %v1964 = vunpack.c.l.b16 %v383
  %v1965 = vunpack.c.l.b16 %v384
  %v1966 = vunpack.c.l.b16 %v385
  %v1967 = vunpack.c.l.b16 %v386
  %v1968 = vunpack.c.l.b16 %v387
  %v1969 = vunpack.c.l.b16 %v388
  %v1970 = vunpack.c.l.b16 %v389
  %v1971 = vunpack.c.l.b16 %v390
  %v1972 = vunpack.c.l.b16 %v391
  %v1973 = vunpack.c.l.b16 %v392
  %v1974 = vunpack.c.l.b16 %v393
  %v1975 = vunpack.c.l.b16 %v394
  %v1976 = vunpack.c.l.b16 %v395
  %v1977 = vunpack.c.l.b16 %v396
  %v1978 = vunpack.c.l.b16 %v397
  %v1979 = vunpack.c.l.b16 %v398
  %v1980 = vunpack.c.l.b16 %v399
  %v1981 = vunpack.c.l.b16 %v400
  %v1982 = vunpack.c.l.b16 %v401
  %v1983 = vunpack.c.l.b16 %v402
  %v1984 = vunpack.c.l.b16 %v403
  %v1985 = vunpack.c.l.b16 %v404
  %v1986 = vunpack.c.l.b16 %v405
  %v1987 = vunpack.c.l.b16 %v406
  %v1988 = vunpack.c.l.b16 %v407
  %v1989 = vunpack.c.l.b16 %v408
  %v1990 = vunpack.c.l.b16 %v409
  %v1991 = vunpack.c.l.b16 %v410
  %v1992 = vunpack.c.l.b16 %v411
  %v1993 = vunpack.c.l.b16 %v412
  %v1994 = vunpack.c.l.b16 %v413
  %v1995 = vunpack.c.l.b16 %v414
  %v1996 = vunpack.c.l.b16 %v415
  %v1997 = vunpack.c.l.b16 %v416
  %v1998 = vunpack.c.l.b16 %v417
  %v1999 = vunpack.c.l.b16 %v418
  %v2000 = vunpack.c.l.b16 %v419
  %v2001 = vunpack.c.l.b16 %v420
  %v2002 = vunpack.c.l.b16 %v421
  %v2003 = vunpack.c.l.b16 %v422
  %v2004 = vunpack.c.l.b16 %v423
  %v2005 = vunpack.c.l.b16 %v424
  %v2006 = vunpack.c.l.b16 %v425
  %v2007 = vunpack.c.l.b16 %v426
  %v2008 = vunpack.c.l.b16 %v427
  %v2009 = vunpack.c.l.b16 %v428
  %v2010 = vunpack.c.l.b16 %v429
  %v2011 = vunpack.c.l.b16 %v430
  %v2012 = vunpack.c.l.b16 %v431
  %v2013 = vunpack.c.l.b16 %v432
  %v2014 = vunpack.c.l.b16 %v433
  %v2015 = vunpack.c.l.b16 %v434
  %v2016 = vunpack.c.l.b16 %v435
  %v2017 = vunpack.c.l.b16 %v436
  %v2018 = vunpack.c.l.b16 %v437
  %v2019 = vunpack.c.l.b16 %v438
  %v2020 = vunpack.c.l.b16 %v439
  %v2021 = vunpack.c.l.b16 %v440
  %v2022 = vunpack.c.l.b16 %v441
  %v2023 = vunpack.c.l.b16 %v442
  %v2024 = vunpack.c.l.b16 %v443
  %v2025 = vunpack.c.l.b16 %v444
  %v2026 = vunpack.c.l.b16 %v445
  %v2027 = vunpack.c.l.b16 %v446
  %v2028 = vunpack.c.l.b16 %v447
  %v2029 = vunpack.c.l.b16 %v448
  %v2030 = vunpack.c.l.b16 %v449
  %v2031 = vunpack.c.l.b16 %v450
  %v2032 = vunpack.c.l.b16 %v451
  %v2033 = vunpack.c.l.b16 %v452
  %v2034 = vunpack.c.l.b16 %v453
  %v2035 = vunpack.c.l.b16 %v454
  %v2036 = vunpack.c.l.b16 %v455
  %v2037 = vunpack.c.l.b16 %v456
  %v2038 = vunpack.c.l.b16 %v457
  %v2039 = vunpack.c.l.b16 %v458
  %v2040 = vunpack.c.l.b16 %v459
  %v2041 = vunpack.c.l.b16 %v460
  %v2042 = vunpack.c.l.b16 %v461
  %v2043 = vunpack.c.l.b16 %v462
  %v2044 = vunpack.c.l.b16 %v463
  %v2045 = vunpack.c.l.b16 %v464
  %v2046 = vunpack.c.l.b16 %v465
  %v2047 = vunpack.c.l.b16 %v466
  %v2048 = vunpack.c.l.b16 %v467
  %v2049 = vunpack.c.l.b16 %v468
  %v2050 = vunpack.c.l.b16 %v469
  %v2051 = vunpack.c.l.b16 %v470
  %v2052 = vunpack.c.l.b16 %v471
  %v2053 = vunpack.c.l.b16 %v472
  %v2054 = vunpack.c.l.b16 %v473
  %v2055 = vunpack.c.l.b16 %v474
  %v2056 = vunpack.c.l.b16 %v475
  %v2057 = vunpack.c.l.b16 %v476
  %v2058 = vunpack.c.l.b16 %v477
  %v2059 = vunpack.c.l.b16 %v478
  %v2060 = vunpack.c.l.b16 %v479
  %v2061 = vunpack.c.l.b16 %v480
  %v2062 = vunpack.c.l.b16 %v481
  %v2063 = vunpack.c.l.b16 %v482
  %v2064 = vunpack.c.l.b16 %v483
  %v2065 = vunpack.c.l.b16 %v484
  %v2066 = vunpack.c.l.b16 %v485
  %v2067 = vunpack.c.l.b16 %v486
  %v2068 = vunpack.c.l.b16 %v487
  %v2069 = vunpack.c.l.b16 %v488
  %v2070 = vunpack.c.l.b16 %v489
  %v2071 = vunpack.c.l.b16 %v490
  %v2072 = vunpack.c.l.b16 %v491
  %v2073 = vunpack.c.l.b16 %v492
  %v2074 = vunpack.c.l.b16 %v493
  %v2075 = vunpack.c.l.b16 %v494
  %v2076 = vunpack.c.l.b16 %v495
  %v2077 = vunpack.c.l.b16 %v496
  %v2078 = vunpack.c.l.b16 %v497
  %v2079 = vunpack.c.l.b16 %v498
  %v2080 = vunpack.c.l.b16 %v499
  %v2081 = vunpack.c.l.b16 %v500
  %v2082 = vunpack.c.l.b16 %v501
  %v2083 = vunpack.c.l.b16 %v502
  %v2084 = vunpack.c.l.b16 %v503
  %v2085 = vunpack.c.l.b16 %v504
  %v2086 = vunpack.c.l.b16 %v505
  %v2087 = vunpack.c.l.b16 %v506
  %v2088 = vunpack.c.l.b16 %v507
  %v2089 = vunpack.c.l.b16 %v508
  %v2090 = vunpack.c.l.b16 %v509
  %v2091 = vunpack.c.l.b16 %v510
  %v2092 = vunpack.c.l.b16 %v511
  %v2093 = vunpack.c.l.b16 %v512
  %v2094 = vunpack.c.l.b16 %v513
  %v2095 = vunpack.c.l.b16 %v514
  %v2096 = vunpack.c.l.b16 %v515
  %v2097 = vunpack.c.l.b16 %v516
  %v2098 = vunpack.c.l.b16 %v517
  %v2099 = vunpack.c.l.b16 %v518
  %v2100 = vunpack.c.l.b16 %v519
  %v2101 = vunpack.c.l.b16 %v520
  %v2102 = vunpack.c.l.b16 %v521
  %v2103 = vunpack.c.l.b16 %v522
  %v2104 = vunpack.c.l.b16 %v523
  %v2105 = vunpack.c.l.b16 %v524
  %v2106 = vunpack.c.l.b16 %v525
  %v2107 = vunpack.c.l.b16 %v526
  %v2108 = vunpack.c.l.b16 %v527
  %v2109 = vunpack.c.l.b16 %v528
  %v2110 = vunpack.c.l.b16 %v529
  %v2111 = vunpack.c.l.b16 %v530
  %v2112 = vunpack.c.l.b16 %v531
  %v2113 = vunpack.c.l.b16 %v532
  %v2114 = vunpack.c.l.b16 %v533
  %v2115 = vunpack.c.l.b16 %v534
  %v2116 = vunpack.c.l.b16 %v535
  %v2117 = vunpack.c.l.b16 %v536
  %v2118 = vunpack.c.l.b16 %v537
  %v2119 = vunpack.c.l.b16 %v538
  %v2120 = vunpack.c.l.b16 %v539
  %v2121 = vunpack.c.l.b16 %v540
  %v2122 = vunpack.c.l.b16 %v541
  %v2123 = vunpack.c.l.b16 %v542
  %v2124 = vunpack.c.l.b16 %v543
  %v2125 = vunpack.c.l.b16 %v544
  %v2126 = vunpack.c.l.b16 %v545
  %v2127 = vunpack.c.l.b16 %v546
  %v2128 = vunpack.c.l.b16 %v547
  %v2129 = vunpack.c.l.b16 %v548
  %v2130 = vunpack.c.l.b16 %v549
  %v2131 = vunpack.c.l.b16 %v550
  %v2132 = vunpack.c.l.b16 %v551
  %v2133 = vunpack.c.l.b16 %v552
  %v2134 = vunpack.c.l.b16 %v553
  %v2135 = vunpack.c.l.b16 %v554
  %v2136 = vunpack.c.l.b16 %v555
  %v2137 = vunpack.c.l.b16 %v556
  %v2138 = vunpack.c.l.b16 %v557
  %v2139 = vunpack.c.l.b16 %v558
  %v2140 = vunpack.c.l.b16 %v559
  %v2141 = vunpack.c.l.b16 %v560
  %v2142 = vunpack.c.l.b16 %v561
  %v2143 = vunpack.c.l.b16 %v562
  %v2144 = vunpack.c.l.b16 %v563
  %v2145 = vunpack.c.l.b16 %v564
  %v2146 = vunpack.c.l.b16 %v565
  %v2147 = vunpack.c.l.b16 %v566
  %v2148 = vunpack.c.l.b16 %v567
  %v2149 = vunpack.c.l.b16 %v568
  %v2150 = vunpack.c.l.b16 %v569
  %v2151 = vunpack.c.l.b16 %v570
  %v2152 = vunpack.c.l.b16 %v571
  %v2153 = vunpack.c.l.b16 %v572
  %v2154 = vunpack.c.l.b16 %v573
  %v2155 = vunpack.c.l.b16 %v574
  %v2156 = vunpack.c.l.b16 %v575
  %v2157 = vunpack.c.l.b16 %v576
  %v2158 = vunpack.c.l.b16 %v577
  %v2159 = vunpack.c.l.b16 %v578
  %v2160 = vunpack.c.l.b16 %v579
  %v2161 = vunpack.c.l.b16 %v580
  %v2162 = vunpack.c.l.b16 %v581
  %v2163 = vunpack.c.l.b16 %v582
  %v2164 = vunpack.c.l.b16 %v583
  %v2165 = vunpack.c.l.b16 %v584
  %v2166 = vunpack.c.l.b16 %v585
  %v2167 = vunpack.c.l.b16 %v586
  %v2168 = vunpack.c.l.b16 %v587
  %v2169 = vunpack.c.l.b16 %v588
  %v2170 = vunpack.c.l.b16 %v589
  %v2171 = vunpack.c.l.b16 %v590
  %v2172 = vunpack.c.l.b16 %v591
  %v2173 = vunpack.c.l.b16 %v592
  %v2174 = vunpack.c.l.b16 %v593
  %v2175 = vunpack.c.l.b16 %v594
  %v2176 = vunpack.c.l.b16 %v595
  %v2177 = vunpack.c.l.b16 %v596
  %v2178 = vunpack.c.l.b16 %v597
  %v2179 = vunpack.c.l.b16 %v598
  %v2180 = vunpack.c.l.b16 %v599
  %v2181 = vunpack.c.l.b16 %v600
  %v2182 = vunpack.c.l.b16 %v601
  %v2183 = vunpack.c.l.b16 %v602
  %v2184 = vunpack.c.l.b16 %v603
  %v2185 = vunpack.c.l.b16 %v604
  %v2186 = vunpack.c.l.b16 %v605
  %v2187 = vunpack.c.l.b16 %v606
  %v2188 = vunpack.c.l.b16 %v607
  %v2189 = vunpack.c.l.b16 %v608
  %v2190 = vunpack.c.l.b16 %v609
  %v2191 = vunpack.c.l.b16 %v610
  %v2192 = vunpack.c.l.b16 %v611
  %v2193 = vunpack.c.l.b16 %v612
  %v2194 = vunpack.c.l.b16 %v613
  %v2195 = vunpack.c.l.b16 %v614
  %v2196 = vunpack.c.l.b16 %v615
  %v2197 = vunpack.c.l.b16 %v616
  %v2198 = vunpack.c.l.b16 %v617
  %v2199 = vunpack.c.l.b16 %v618
  %v2200 = vunpack.c.l.b16 %v619
  %v2201 = vunpack.c.l.b16 %v620
  %v2202 = vunpack.c.l.b16 %v621
  %v2203 = vunpack.c.l.b16 %v622
  %v2204 = vunpack.c.l.b16 %v623
  %v2205 = vunpack.c.l.b16 %v624
  %v2206 = vunpack.c.l.b16 %v625
  %v2207 = vunpack.c.l.b16 %v626
  %v2208 = vunpack.c.l.b16 %v627
  %v2209 = vunpack.c.l.b16 %v628
  %v2210 = vunpack.c.l.b16 %v629
  %v2211 = vunpack.c.l.b16 %v630
  %v2212 = vunpack.c.l.b16 %v631
  %v2213 = vunpack.c.l.b16 %v632
  %v2214 = vunpack.c.l.b16 %v633
  %v2215 = vunpack.c.l.b16 %v634
  %v2216 = vunpack.c.l.b16 %v635
  %v2217 = vunpack.c.l.b16 %v636
  %v2218 = vunpack.c.l.b16 %v637
  %v2219 = vunpack.c.l.b16 %v638
  %v2220 = vunpack.c.l.b16 %v639
  %v2221 = vunpack.c.l.b16 %v640
  %v2222 = vunpack.c.l.b16 %v641
  %v2223 = vunpack.c.l.b16 %v642
  %v2224 = vunpack.c.l.b16 %v643
  %v2225 = vunpack.c.l.b16 %v644
  %v2226 = vunpack.c.l.b16 %v645
  %v2227 = vunpack.c.l.b16 %v646
  %v2228 = vunpack.c.l.b16 %v647
  %v2229 = vunpack.c.l.b16 %v648
  %v2230 = vunpack.c.l.b16 %v649
  %v2231 = vunpack.c.l.b16 %v650
  %v2232 = vunpack.c.l.b16 %v651
  %v2233 = vunpack.c.l.b16 %v652
  %v2234 = vunpack.c.l.b16 %v653
  %v2235 = vunpack.c.l.b16 %v654
  %v2236 = vunpack.c.l.b16 %v655
  %v2237 = vunpack.c.l.b16 %v656
  %v2238 = vunpack.c.l.b16 %v657
  %v2239 = vunpack.c.l.b16 %v658
  %v2240 = vunpack.c.l.b16 %v659
  %v2241 = vunpack.c.l.b16 %v660
  %v2242 = vunpack.c.l.b16 %v661
  %v2243 = vunpack.c.l.b16 %v662
  %v2244 = vunpack.c.l.b16 %v663
  %v2245 = vunpack.c.l.b16 %v664
  %v2246 = vunpack.c.l.b16 %v665
  %v2247 = vunpack.c.l.b16 %v666
  %v2248 = vunpack.c.l.b16 %v667
  %v2249 = vunpack.c.l.b16 %v668
  %v2250 = vunpack.c.l.b16 %v669
  %v2251 = vunpack.c.l.b16 %v670
  %v2252 = vunpack.c.l.b16 %v671
  %v2253 = vunpack.c.l.b16 %v672
  %v2254 = vunpack.c.l.b16 %v673
  %v2255 = vunpack.c.l.b16 %v674
  %v2256 = vunpack.c.l.b16 %v675
  %v2257 = vunpack.c.l.b16 %v676
  %v2258 = vunpack.c.l.b16 %v677
  %v2259 = vunpack.c.l.b16 %v678
  %v2260 = vunpack.c.l.b16 %v679
  %v2261 = vunpack.c.l.b16 %v680
  %v2262 = vunpack.c.l.b16 %v681
  %v2263 = vunpack.c.l.b16 %v682
  %v2264 = vunpack.c.l.b16 %v683
  %v2265 = vunpack.c.l.b16 %v684
  %v2266 = vunpack.c.l.b16 %v685
  %v2267 = vunpack.c.l.b16 %v686
  %v2268 = vunpack.c.l.b16 %v687
  %v2269 = vunpack.c.l.b16 %v688
  %v2270 = vpack.c.b16 %v1673, %v1672
  %v2271 = vpack.c.b16 %v1675, %v1674
  %v2272 = vpack.c.b16 %v1677, %v1676
  %v2273 = vpack.c.b16 %v1679, %v1678
  %v2274 = vpack.c.b16 %v1681, %v1680
  %v2275 = vpack.c.b16 %v1683, %v1682
  %v2276 = vpack.c.b16 %v1685, %v1684
  %v2277 = vpack.c.b16 %v1687, %v1686
  %v2278 = vpack.c.b16 %v1689, %v1688
  %v2279 = vpack.c.b16 %v1691, %v1690
  %v2280 = vpack.c.b16 %v1693, %v1692
  %v2281 = vpack.c.b16 %v1695, %v1694
  %v2282 = vpack.c.b16 %v1697, %v1696
  %v2283 = vpack.c.b16 %v1699, %v1698
  %v2284 = vpack.c.b16 %v1701, %v1700
  %v2285 = vpack.c.b16 %v1703, %v1702
  %v2286 = vpack.c.b16 %v1705, %v1704
  %v2287 = vpack.c.b16 %v1707, %v1706
  %v2288 = vpack.c.b16 %v1709, %v1708
  %v2289 = vpack.c.b16 %v1711, %v1710
  %v2290 = vpack.c.b16 %v1713, %v1712
  %v2291 = vpack.c.b16 %v1715, %v1714
  %v2292 = vpack.c.b16 %v1717, %v1716
  %v2293 = vpack.c.b16 %v1719, %v1718
  %v2294 = vpack.c.b16 %v1721, %v1720
  %v2295 = vpack.c.b16 %v1723, %v1722
  %v2296 = vpack.c.b16 %v1725, %v1724
  %v2297 = vpack.c.b16 %v1727, %v1726
  %v2298 = vpack.c.b16 %v1729, %v1728
  %v2299 = vpack.c.b16 %v1731, %v1730
  %v2300 = vpack.c.b16 %v1733, %v1732
  %v2301 = vpack.c.b16 %v1735, %v1734
  %v2302 = vpack.c.b16 %v1737, %v1736
  %v2303 = vpack.c.b16 %v1739, %v1738
  %v2304 = vpack.c.b16 %v1741, %v1740
  %v2305 = vpack.c.b16 %v1743, %v1742
  %v2306 = vpack.c.b16 %v1745, %v1744
  %v2307 = vpack.c.b16 %v1747, %v1746
  %v2308 = vpack.c.b16 %v1749, %v1748
  %v2309 = vpack.c.b16 %v1751, %v1750
  %v2310 = vpack.c.b16 %v1753, %v1752
  %v2311 = vpack.c.b16 %v1755, %v1754
  %v2312 = vpack.c.b16 %v1757, %v1756
  %v2313 = vpack.c.b16 %v1759, %v1758
  %v2314 = vpack.c.b16 %v1761, %v1760
  %v2315 = vpack.c.b16 %v1763, %v1762
  %v2316 = vpack.c.b16 %v1765, %v1764
  %v2317 = vpack.c.b16 %v1767, %v1766
  %v2318 = vpack.c.b16 %v1769, %v1768
  %v2319 = vpack.c.b16 %v1771, %v1770
  %v2320 = vpack.c.b16 %v1773, %v1772
  %v2321 = vpack.c.b16 %v1775, %v1774
  %v2322 = vpack.c.b16 %v1777, %v1776
  %v2323 = vpack.c.b16 %v1779, %v1778
  %v2324 = vpack.c.b16 %v1781, %v1780
  %v2325 = vpack.c.b16 %v1783, %v1782
  %v2326 = vpack.c.b16 %v1785, %v1784
  %v2327 = vpack.c.b16 %v1787, %v1786
  %v2328 = vpack.c.b16 %v1789, %v1788
  %v2329 = vpack.c.b16 %v1791, %v1790
  %v2330 = vpack.c.b16 %v1793, %v1792
  %v2331 = vpack.c.b16 %v1795, %v1794
  %v2332 = vpack.c.b16 %v1797, %v1796
  %v2333 = vpack.c.b16 %v1799, %v1798
  %v2334 = vpack.c.b16 %v1801, %v1800
  %v2335 = vpack.c.b16 %v1803, %v1802
  %v2336 = vpack.c.b16 %v1805, %v1804
  %v2337 = vpack.c.b16 %v1807, %v1806
  %v2338 = vpack.c.b16 %v1809, %v1808
  %v2339 = vpack.c.b16 %v1811, %v1810
  %v2340 = vpack.c.b16 %v1813, %v1812
  %v2341 = vpack.c.b16 %v1815, %v1814
  %v2342 = vpack.c.b16 %v1817, %v1816
  %v2343 = vpack.c.b16 %v1819, %v1818
  %v2344 = vpack.c.b16 %v1821, %v1820
  %v2345 = vpack.c.b16 %v1823, %v1822
  %v2346 = vpack.c.b16 %v1825, %v1824
  %v2347 = vpack.c.b16 %v1827, %v1826
  %v2348 = vpack.c.b16 %v1829, %v1828
  %v2349 = vpack.c.b16 %v1831, %v1830
  %v2350 = vpack.c.b16 %v1833, %v1832
  %v2351 = vpack.c.b16 %v1835, %v1834
  %v2352 = vpack.c.b16 %v1837, %v1836
  %v2353 = vpack.c.b16 %v1839, %v1838
  %v2354 = vpack.c.b16 %v1841, %v1840
  %v2355 = vpack.c.b16 %v1843, %v1842
  %v2356 = vpack.c.b16 %v1845, %v1844
  %v2357 = vpack.c.b16 %v1847, %v1846
  %v2358 = vpack.c.b16 %v1849, %v1848
  %v2359 = vpack.c.b16 %v1851, %v1850
  %v2360 = vpack.c.b16 %v1853, %v1852
  %v2361 = vpack.c.b16 %v1855, %v1854
  %v2362 = vpack.c.b16 %v1857, %v1856
  %v2363 = vpack.c.b16 %v1859, %v1858
  %v2364 = vpack.c.b16 %v1861, %v1860
  %v2365 = vpack.c.b16 %v1863, %v1862
  %v2366 = vpack.c.b16 %v1865, %v1864
  %v2367 = vpack.c.b16 %v1867, %v1866
  %v2368 = vpack.c.b16 %v1869, %v1868
  %v2369 = vpack.c.b16 %v1871, %v1870
  %v2370 = vpack.c.b16 %v1873, %v1872
  %v2371 = vpack.c.b16 %v1875, %v1874
  %v2372 = vpack.c.b16 %v1877, %v1876
  %v2373 = vpack.c.b16 %v1879, %v1878
  %v2374 = vpack.c.b16 %v1881, %v1880
  %v2375 = vpack.c.b16 %v1883, %v1882
  %v2376 = vpack.c.b16 %v1885, %v1884
  %v2377 = vpack.c.b16 %v1887, %v1886
  %v2378 = vpack.c.b16 %v1889, %v1888
  %v2379 = vpack.c.b16 %v1891, %v1890
  %v2380 = vpack.c.b16 %v1893, %v1892
  %v2381 = vpack.c.b16 %v1895, %v1894
  %v2382 = vpack.c.b16 %v1897, %v1896
  %v2383 = vpack.c.b16 %v1899, %v1898
  %v2384 = vpack.c.b16 %v1901, %v1900
  %v2385 = vpack.c.b16 %v1903, %v1902
  %v2386 = vpack.c.b16 %v1905, %v1904
  %v2387 = vpack.c.b16 %v1907, %v1906
  %v2388 = vpack.c.b16 %v1909, %v1908
  %v2389 = vpack.c.b16 %v1911, %v1910
  %v2390 = vpack.c.b16 %v1913, %v1912
  %v2391 = vpack.c.b16 %v1915, %v1914
  %v2392 = vpack.c.b16 %v1917, %v1916
  %v2393 = vpack.c.b16 %v1919, %v1918
  %v2394 = vpack.c.b16 %v1921, %v1920
  %v2395 = vpack.c.b16 %v1923, %v1922
  %v2396 = vpack.c.b16 %v1925, %v1924
  %v2397 = vpack.c.b16 %v1927, %v1926
  %v2398 = vpack.c.b16 %v1929, %v1928
  %v2399 = vpack.c.b16 %v1931, %v1930
  %v2400 = vpack.c.b16 %v1933, %v1932
  %v2401 = vpack.c.b16 %v1935, %v1934
  %v2402 = vpack.c.b16 %v1937, %v1936
  %v2403 = vpack.c.b16 %v1939, %v1938
  %v2404 = vpack.c.b16 %v1941, %v1940
  %v2405 = vpack.c.b16 %v1943, %v1942
  %v2406 = vpack.c.b16 %v1945, %v1944
  %v2407 = vpack.c.b16 %v1947, %v1946
  %v2408 = vpack.c.b16 %v1949, %v1948
  %v2409 = vpack.c.b16 %v1951, %v1950
  %v2410 = vpack.c.b16 %v1953, %v1952
  %v2411 = vpack.c.b16 %v1955, %v1954
  %v2412 = vpack.c.b16 %v1957, %v1956
  %v2413 = vpack.c.b16 %v1959, %v1958
  %v2414 = vpack.c.b16 %v1961, %v1960
  %v2415 = vpack.c.b16 %v1963, %v1962
  %v2416 = vpack.c.b16 %v1965, %v1964
  %v2417 = vpack.c.b16 %v1967, %v1966
  %v2418 = vpack.c.b16 %v1969, %v1968
  %v2419 = vpack.c.b16 %v1971, %v1970
  %v2420 = vpack.c.b16 %v1973, %v1972
  %v2421 = vpack.c.b16 %v1975, %v1974
  %v2422 = vpack.c.b16 %v1977, %v1976
  %v2423 = vpack.c.b16 %v1979, %v1978
  %v2424 = vpack.c.b16 %v1981, %v1980
  %v2425 = vpack.c.b16 %v1983, %v1982
  %v2426 = vpack.c.b16 %v1985, %v1984
  %v2427 = vpack.c.b16 %v1987, %v1986
  %v2428 = vpack.c.b16 %v1989, %v1988
  %v2429 = vpack.c.b16 %v1991, %v1990
  %v2430 = vpack.c.b16 %v1993, %v1992
  %v2431 = vpack.c.b16 %v1995, %v1994
  %v2432 = vpack.c.b16 %v1997, %v1996
  %v2433 = vpack.c.b16 %v1999, %v1998
  %v2434 = vpack.c.b16 %v2001, %v2000
  %v2435 = vpack.c.b16 %v2003, %v2002
  %v2436 = vpack.c.b16 %v2005, %v2004
  %v2437 = vpack.c.b16 %v2007, %v2006
  %v2438 = vpack.c.b16 %v2009, %v2008
  %v2439 = vpack.c.b16 %v2011, %v2010
  %v2440 = vpack.c.b16 %v2013, %v2012
  %v2441 = vpack.c.b16 %v2015, %v2014
  %v2442 = vpack.c.b16 %v2017, %v2016
  %v2443 = vpack.c.b16 %v2019, %v2018
  %v2444 = vpack.c.b16 %v2021, %v2020
  %v2445 = vpack.c.b16 %v2023, %v2022
  %v2446 = vpack.c.b16 %v2025, %v2024
  %v2447 = vpack.c.b16 %v2027, %v2026
  %v2448 = vpack.c.b16 %v2029, %v2028
  %v2449 = vpack.c.b16 %v2031, %v2030
  %v2450 = vpack.c.b16 %v2033, %v2032
  %v2451 = vpack.c.b16 %v2035, %v2034
  %v2452 = vpack.c.b16 %v2037, %v2036
  %v2453 = vpack.c.b16 %v2039, %v2038
  %v2454 = vpack.c.b16 %v2041, %v2040
  %v2455 = vpack.c.b16 %v2043, %v2042
  %v2456 = vpack.c.b16 %v2045, %v2044
  %v2457 = vpack.c.b16 %v2047, %v2046
  %v2458 = vpack.c.b16 %v2049, %v2048
  %v2459 = vpack.c.b16 %v2051, %v2050
  %v2460 = vpack.c.b16 %v2053, %v2052
  %v2461 = vpack.c.b16 %v2055, %v2054
  %v2462 = vpack.c.b16 %v2057, %v2056
  %v2463 = vpack.c.b16 %v2059, %v2058
  %v2464 = vpack.c.b16 %v2061, %v2060
  %v2465 = vpack.c.b16 %v2063, %v2062
  %v2466 = vpack.c.b16 %v2065, %v2064
  %v2467 = vpack.c.b16 %v2067, %v2066
  %v2468 = vpack.c.b16 %v2069, %v2068
  %v2469 = vpack.c.b16 %v2071, %v2070
  %v2470 = vpack.c.b16 %v2073, %v2072
  %v2471 = vpack.c.b16 %v2075, %v2074
  %v2472 = vpack.c.b16 %v2077, %v2076
  %v2473 = vpack.c.b16 %v2079, %v2078
  %v2474 = vpack.c.b16 %v2081, %v2080
  %v2475 = vpack.c.b16 %v2083, %v2082
  %v2476 = vpack.c.b16 %v2085, %v2084
  %v2477 = vpack.c.b16 %v2087, %v2086
  %v2478 = vpack.c.b16 %v2089, %v2088
  %v2479 = vpack.c.b16 %v2091, %v2090
  %v2480 = vpack.c.b16 %v2093, %v2092
  %v2481 = vpack.c.b16 %v2095, %v2094
  %v2482 = vpack.c.b16 %v2097, %v2096
  %v2483 = vpack.c.b16 %v2099, %v2098
  %v2484 = vpack.c.b16 %v2101, %v2100
  %v2485 = vpack.c.b16 %v2103, %v2102
  %v2486 = vpack.c.b16 %v2105, %v2104
  %v2487 = vpack.c.b16 %v2107, %v2106
  %v2488 = vpack.c.b16 %v2109, %v2108
  %v2489 = vpack.c.b16 %v2111, %v2110
  %v2490 = vpack.c.b16 %v2113, %v2112
  %v2491 = vpack.c.b16 %v2115, %v2114
  %v2492 = vpack.c.b16 %v2117, %v2116
  %v2493 = vpack.c.b16 %v2119, %v2118
  %v2494 = vpack.c.b16 %v2121, %v2120
  %v2495 = vpack.c.b16 %v2123, %v2122
  %v2496 = vpack.c.b16 %v2125, %v2124
  %v2497 = vpack.c.b16 %v2127, %v2126
  %v2498 = vpack.c.b16 %v2129, %v2128
  %v2499 = vpack.c.b16 %v2131, %v2130
  %v2500 = vpack.c.b16 %v2133, %v2132
  %v2501 = vpack.c.b16 %v2135, %v2134
  %v2502 = vpack.c.b16 %v2137, %v2136
  %v2503 = vpack.c.b16 %v2139, %v2138
  %v2504 = vpack.c.b16 %v2141, %v2140
  %v2505 = vpack.c.b16 %v2143, %v2142
  %v2506 = vpack.c.b16 %v2145, %v2144
  %v2507 = vpack.c.b16 %v2147, %v2146
  %v2508 = vpack.c.b16 %v2149, %v2148
  %v2509 = vpack.c.b16 %v2151, %v2150
  %v2510 = vpack.c.b16 %v2153, %v2152
  %v2511 = vpack.c.b16 %v2155, %v2154
  %v2512 = vpack.c.b16 %v2157, %v2156
  %v2513 = vpack.c.b16 %v2159, %v2158
  %v2514 = vpack.c.b16 %v2161, %v2160
  %v2515 = vpack.c.b16 %v2163, %v2162
  %v2516 = vpack.c.b16 %v2165, %v2164
  %v2517 = vpack.c.b16 %v2167, %v2166
  %v2518 = vpack.c.b16 %v2169, %v2168
  %v2519 = vpack.c.b16 %v2171, %v2170
  %v2520 = vpack.c.b16 %v2173, %v2172
  %v2521 = vpack.c.b16 %v2175, %v2174
  %v2522 = vpack.c.b16 %v2177, %v2176
  %v2523 = vpack.c.b16 %v2179, %v2178
  %v2524 = vpack.c.b16 %v2181, %v2180
  %v2525 = vpack.c.b16 %v2183, %v2182
  %v2526 = vpack.c.b16 %v2185, %v2184
  %v2527 = vpack.c.b16 %v2187, %v2186
  %v2528 = vpack.c.b16 %v2189, %v2188
  %v2529 = vpack.c.b16 %v2191, %v2190
  %v2530 = vpack.c.b16 %v2193, %v2192
  %v2531 = vpack.c.b16 %v2195, %v2194
  %v2532 = vpack.c.b16 %v2197, %v2196
  %v2533 = vpack.c.b16 %v2199, %v2198
  %v2534 = vpack.c.b16 %v2201, %v2200
  %v2535 = vpack.c.b16 %v2203, %v2202
  %v2536 = vpack.c.b16 %v2205, %v2204
  %v2537 = vpack.c.b16 %v2207, %v2206
  %v2538 = vpack.c.b16 %v2209, %v2208
  %v2539 = vpack.c.b16 %v2211, %v2210
  %v2540 = vpack.c.b16 %v2213, %v2212
  %v2541 = vpack.c.b16 %v2215, %v2214
  %v2542 = vpack.c.b16 %v2217, %v2216
  %v2543 = vpack.c.b16 %v2219, %v2218
  %v2544 = vpack.c.b16 %v2221, %v2220
  %v2545 = vpack.c.b16 %v2223, %v2222
  %v2546 = vpack.c.b16 %v2225, %v2224
  %v2547 = vpack.c.b16 %v2227, %v2226
  %v2548 = vpack.c.b16 %v2229, %v2228
  %v2549 = vpack.c.b16 %v2231, %v2230
  %v2550 = vpack.c.b16 %v2233, %v2232
  %v2551 = vpack.c.b16 %v2235, %v2234
  %v2552 = vpack.c.b16 %v2237, %v2236
  %v2553 = vpack.c.b16 %v2239, %v2238
  %v2554 = vpack.c.b16 %v2241, %v2240
  %v2555 = vpack.c.b16 %v2243, %v2242
  %v2556 = vpack.c.b16 %v2245, %v2244
  %v2557 = vpack.c.b16 %v2247, %v2246
  %v2558 = vpack.c.b16 %v2249, %v2248
  %v2559 = vpack.c.b16 %v2251, %v2250
  %v2560 = vpack.c.b16 %v2253, %v2252
  %v2561 = vpack.c.b16 %v2255, %v2254
  %v2562 = vpack.c.b16 %v2257, %v2256
  %v2563 = vpack.c.b16 %v2259, %v2258
  %v2564 = vpack.c.b16 %v2261, %v2260
  %v2565 = vpack.c.b16 %v2263, %v2262
  %v2566 = vpack.c.b16 %v2265, %v2264
  %v2567 = vpack.c.b16 %v2267, %v2266
  %v2568 = vpack.c.b16 %v2269, %v2268
  %vm2867 = vcmask 351232
  %v2869 = vsel %vm2867, %v961, 0
  %v2872 = vsel %vm2867, %v999, 0
  %vm2874 = vcmask 1044480
  %vm2875 = vcmask 1045504
  %v2876 = vsel %vm2874, 4294967295, 65535
  %v2877 = vsel %vm2875, %v2876, 0
  %v2879 = vand.u32 %v2568, %v2877
  %2881 = vmatprep.subr.bf16.mxu0 0
  %2882 = vmatpush1.bf16.msra.mxu0 %v2270
  %2883 = vmatprep.subr.bf16.mxu0 0
  %2884 = vmatpush1.bf16.msra.mxu0 %v2271
  %2885 = vmatprep.subr.bf16.mxu0 0
  %2886 = vmatpush1.bf16.msra.mxu0 %v2272
  %2887 = vmatprep.subr.bf16.mxu0 0
  %2888 = vmatpush1.bf16.msra.mxu0 %v2273
  %2889 = vmatprep.subr.bf16.mxu0 0
  %2890 = vmatpush1.bf16.msra.mxu0 %v2274
  %2891 = vmatprep.subr.bf16.mxu0 0
  %2892 = vmatpush1.bf16.msra.mxu0 %v2275
  %2893 = vmatprep.subr.bf16.mxu0 0
  %2894 = vmatpush1.bf16.msra.mxu0 %v2276
  %2895 = vmatprep.subr.bf16.mxu0 0
  %2896 = vmatpush1.bf16.msra.mxu0 %v2277
  %2897 = vmatprep.subr.bf16.mxu0 0
  %2898 = vmatpush1.bf16.msra.mxu0 %v2278
  %2899 = vmatprep.subr.bf16.mxu0 0
  %2900 = vmatpush1.bf16.msra.mxu0 %v2279
  %2901 = vmatprep.subr.bf16.mxu0 0
  %2902 = vmatpush1.bf16.msra.mxu0 %v2280
  %2903 = vmatprep.subr.bf16.mxu0 0
  %2904 = vmatpush1.bf16.msra.mxu0 %v2281
  %2905 = vmatprep.subr.bf16.mxu0 0
  %2906 = vmatpush1.bf16.msra.mxu0 %v2282
  %2907 = vmatprep.subr.bf16.mxu0 0
  %2908 = vmatpush1.bf16.msra.mxu0 %v2283
  %2909 = vmatprep.subr.bf16.mxu0 0
  %2910 = vmatpush1.bf16.msra.mxu0 %v2284
  %2911 = vmatprep.subr.bf16.mxu0 0
  %2912 = vmatpush1.bf16.msra.mxu0 %v2285
  %2913 = vmatprep.mubr.bf16.mxu0 %v925
  %2914 = vmatmul.mubr.bf16.gmra.mrb[0].mxu0 %v924
  %v2915 = vpop.f32.mrb[0].mxu0
  %v2916 = vadd.f32 %v694, %v2915
  %v2917 = vpop.f32.mrb[0].mxu0
  %v2918 = vpop.f32.mrb[0].mxu0
  %v2919 = vadd.f32 %v694, %v2918
  %v2920 = vpop.f32.mrb[0].mxu0
  %2921 = vmatprep.mubr.bf16.mxu0 %v963
  %2922 = vmatmul.mubr.bf16.gmra.mrb[0].mxu0 %v962
  %v2923 = vpop.f32.mrb[0].mxu0
  %v2924 = vadd.f32 %v694, %v2923
  %v2925 = vpop.f32.mrb[0].mxu0
  %v2926 = vpop.f32.mrb[0].mxu0
  %v2927 = vadd.f32 %v694, %v2926
  %v2928 = vpop.f32.mrb[0].mxu0
  %2929 = vdwg.mxu0
  %2930 = vmatprep.subr.bf16.mxu0 0
  %2931 = vmatpush1.bf16.msra.mxu0 %v2286
  %2932 = vmatprep.subr.bf16.mxu0 0
  %2933 = vmatpush1.bf16.msra.mxu0 %v2287
  %2934 = vmatprep.subr.bf16.mxu0 0
  %2935 = vmatpush1.bf16.msra.mxu0 %v2288
  %2936 = vmatprep.subr.bf16.mxu0 0
  %2937 = vmatpush1.bf16.msra.mxu0 %v2289
  %2938 = vmatprep.subr.bf16.mxu0 0
  %2939 = vmatpush1.bf16.msra.mxu0 %v2290
  %2940 = vmatprep.subr.bf16.mxu0 0
  %2941 = vmatpush1.bf16.msra.mxu0 %v2291
  %2942 = vmatprep.subr.bf16.mxu0 0
  %2943 = vmatpush1.bf16.msra.mxu0 %v2292
  %2944 = vmatprep.subr.bf16.mxu0 0
  %2945 = vmatpush1.bf16.msra.mxu0 %v2293
  %2946 = vmatprep.subr.bf16.mxu0 0
  %2947 = vmatpush1.bf16.msra.mxu0 %v2294
  %2948 = vmatprep.subr.bf16.mxu0 0
  %2949 = vmatpush1.bf16.msra.mxu0 %v2295
  %2950 = vmatprep.subr.bf16.mxu0 0
  %2951 = vmatpush1.bf16.msra.mxu0 %v2296
  %2952 = vmatprep.subr.bf16.mxu0 0
  %2953 = vmatpush1.bf16.msra.mxu0 %v2297
  %2954 = vmatprep.subr.bf16.mxu0 0
  %2955 = vmatpush1.bf16.msra.mxu0 %v2298
  %2956 = vmatprep.subr.bf16.mxu0 0
  %2957 = vmatpush1.bf16.msra.mxu0 %v2299
  %2958 = vmatprep.subr.bf16.mxu0 0
  %2959 = vmatpush1.bf16.msra.mxu0 %v2300
  %2960 = vmatprep.subr.bf16.mxu0 0
  %2961 = vmatpush1.bf16.msra.mxu0 %v2301
  %2962 = vmatprep.mubr.bf16.mxu0 %v927
  %2963 = vmatmul.mubr.bf16.gmra.mrb[0].mxu0 %v926
  %v2964 = vpop.f32.mrb[0].mxu0
  %v2965 = vadd.f32 %v2916, %v2964
  %v2966 = vpop.f32.mrb[0].mxu0
  %v2967 = vpop.f32.mrb[0].mxu0
  %v2968 = vadd.f32 %v2919, %v2967
  %v2969 = vpop.f32.mrb[0].mxu0
  %2970 = vmatprep.mubr.bf16.mxu0 %v965
  %2971 = vmatmul.mubr.bf16.gmra.mrb[0].mxu0 %v964
  %v2972 = vpop.f32.mrb[0].mxu0
  %v2973 = vadd.f32 %v2924, %v2972
  %v2974 = vpop.f32.mrb[0].mxu0
  %v2975 = vpop.f32.mrb[0].mxu0
  %v2976 = vadd.f32 %v2927, %v2975
  %v2977 = vpop.f32.mrb[0].mxu0
  %2978 = vdwg.mxu0
  %2979 = vmatprep.subr.bf16.mxu0 0
  %2980 = vmatpush1.bf16.msra.mxu0 %v2302
  %2981 = vmatprep.subr.bf16.mxu0 0
  %2982 = vmatpush1.bf16.msra.mxu0 %v2303
  %2983 = vmatprep.subr.bf16.mxu0 0
  %2984 = vmatpush1.bf16.msra.mxu0 %v2304
  %2985 = vmatprep.subr.bf16.mxu0 0
  %2986 = vmatpush1.bf16.msra.mxu0 %v2305
  %2987 = vmatprep.subr.bf16.mxu0 0
  %2988 = vmatpush1.bf16.msra.mxu0 %v2306
  %2989 = vmatprep.subr.bf16.mxu0 0
  %2990 = vmatpush1.bf16.msra.mxu0 %v2307
  %2991 = vmatprep.subr.bf16.mxu0 0
  %2992 = vmatpush1.bf16.msra.mxu0 %v2308
  %2993 = vmatprep.subr.bf16.mxu0 0
  %2994 = vmatpush1.bf16.msra.mxu0 %v2309
  %2995 = vmatprep.subr.bf16.mxu0 0
  %2996 = vmatpush1.bf16.msra.mxu0 %v2310
  %2997 = vmatprep.subr.bf16.mxu0 0
  %2998 = vmatpush1.bf16.msra.mxu0 %v2311
  %2999 = vmatprep.subr.bf16.mxu0 0
  %3000 = vmatpush1.bf16.msra.mxu0 %v2312
  %3001 = vmatprep.subr.bf16.mxu0 0
  %3002 = vmatpush1.bf16.msra.mxu0 %v2313
  %3003 = vmatprep.subr.bf16.mxu0 0
  %3004 = vmatpush1.bf16.msra.mxu0 %v2314
  %3005 = vmatprep.subr.bf16.mxu0 0
  %3006 = vmatpush1.bf16.msra.mxu0 %v2315
  %3007 = vmatprep.subr.bf16.mxu0 0
  %3008 = vmatpush1.bf16.msra.mxu0 %v2316
  %3009 = vmatprep.subr.bf16.mxu0 0
  %3010 = vmatpush1.bf16.msra.mxu0 %v2317
  %3011 = vmatprep.mubr.bf16.mxu0 %v929
  %3012 = vmatmul.mubr.bf16.gmra.mrb[0].mxu0 %v928
  %v3013 = vpop.f32.mrb[0].mxu0
  %v3014 = vadd.f32 %v2965, %v3013
  %v3015 = vpop.f32.mrb[0].mxu0
  %v3016 = vpop.f32.mrb[0].mxu0
  %v3017 = vadd.f32 %v2968, %v3016
  %v3018 = vpop.f32.mrb[0].mxu0
  %3019 = vmatprep.mubr.bf16.mxu0 %v967
  %3020 = vmatmul.mubr.bf16.gmra.mrb[0].mxu0 %v966
  %v3021 = vpop.f32.mrb[0].mxu0
  %v3022 = vadd.f32 %v2973, %v3021
  %v3023 = vpop.f32.mrb[0].mxu0
  %v3024 = vpop.f32.mrb[0].mxu0
  %v3025 = vadd.f32 %v2976, %v3024
  %v3026 = vpop.f32.mrb[0].mxu0
  %3027 = vdwg.mxu0
  %3028 = vmatprep.subr.bf16.mxu0 0
  %3029 = vmatpush1.bf16.msra.mxu0 %v2318
  %3030 = vmatprep.subr.bf16.mxu0 0
  %3031 = vmatpush1.bf16.msra.mxu0 %v2319
  %3032 = vmatprep.subr.bf16.mxu0 0
  %3033 = vmatpush1.bf16.msra.mxu0 %v2320
  %3034 = vmatprep.subr.bf16.mxu0 0
  %3035 = vmatpush1.bf16.msra.mxu0 %v2321
  %3036 = vmatprep.subr.bf16.mxu0 0
  %3037 = vmatpush1.bf16.msra.mxu0 %v2322
  %3038 = vmatprep.subr.bf16.mxu0 0
  %3039 = vmatpush1.bf16.msra.mxu0 %v2323
  %3040 = vmatprep.subr.bf16.mxu0 0
  %3041 = vmatpush1.bf16.msra.mxu0 %v2324
  %3042 = vmatprep.subr.bf16.mxu0 0
  %3043 = vmatpush1.bf16.msra.mxu0 %v2325
  %3044 = vmatprep.subr.bf16.mxu0 0
  %3045 = vmatpush1.bf16.msra.mxu0 %v2326
  %3046 = vmatprep.subr.bf16.mxu0 0
  %3047 = vmatpush1.bf16.msra.mxu0 %v2327
  %3048 = vmatprep.subr.bf16.mxu0 0
  %3049 = vmatpush1.bf16.msra.mxu0 %v2328
  %3050 = vmatprep.subr.bf16.mxu0 0
  %3051 = vmatpush1.bf16.msra.mxu0 %v2329
  %3052 = vmatprep.subr.bf16.mxu0 0
  %3053 = vmatpush1.bf16.msra.mxu0 %v2330
  %3054 = vmatprep.subr.bf16.mxu0 0
  %3055 = vmatpush1.bf16.msra.mxu0 %v2331
  %3056 = vmatprep.subr.bf16.mxu0 0
  %3057 = vmatpush1.bf16.msra.mxu0 %v2332
  %3058 = vmatprep.subr.bf16.mxu0 0
  %3059 = vmatpush1.bf16.msra.mxu0 %v2333
  %3060 = vmatprep.mubr.bf16.mxu0 %v931
  %3061 = vmatmul.mubr.bf16.gmra.mrb[0].mxu0 %v930
  %v3062 = vpop.f32.mrb[0].mxu0
  %v3063 = vadd.f32 %v3014, %v3062
  %v3064 = vpop.f32.mrb[0].mxu0
  %v3065 = vpop.f32.mrb[0].mxu0
  %v3066 = vadd.f32 %v3017, %v3065
  %v3067 = vpop.f32.mrb[0].mxu0
  %3068 = vmatprep.mubr.bf16.mxu0 %v969
  %3069 = vmatmul.mubr.bf16.gmra.mrb[0].mxu0 %v968
  %v3070 = vpop.f32.mrb[0].mxu0
  %v3071 = vadd.f32 %v3022, %v3070
  %v3072 = vpop.f32.mrb[0].mxu0
  %v3073 = vpop.f32.mrb[0].mxu0
  %v3074 = vadd.f32 %v3025, %v3073
  %v3075 = vpop.f32.mrb[0].mxu0
  %3076 = vdwg.mxu0
  %3077 = vmatprep.subr.bf16.mxu0 0
  %3078 = vmatpush1.bf16.msra.mxu0 %v2334
  %3079 = vmatprep.subr.bf16.mxu0 0
  %3080 = vmatpush1.bf16.msra.mxu0 %v2335
  %3081 = vmatprep.subr.bf16.mxu0 0
  %3082 = vmatpush1.bf16.msra.mxu0 %v2336
  %3083 = vmatprep.subr.bf16.mxu0 0
  %3084 = vmatpush1.bf16.msra.mxu0 %v2337
  %3085 = vmatprep.subr.bf16.mxu0 0
  %3086 = vmatpush1.bf16.msra.mxu0 %v2338
  %3087 = vmatprep.subr.bf16.mxu0 0
  %3088 = vmatpush1.bf16.msra.mxu0 %v2339
  %3089 = vmatprep.subr.bf16.mxu0 0
  %3090 = vmatpush1.bf16.msra.mxu0 %v2340
  %3091 = vmatprep.subr.bf16.mxu0 0
  %3092 = vmatpush1.bf16.msra.mxu0 %v2341
  %3093 = vmatprep.subr.bf16.mxu0 0
  %3094 = vmatpush1.bf16.msra.mxu0 %v2342
  %3095 = vmatprep.subr.bf16.mxu0 0
  %3096 = vmatpush1.bf16.msra.mxu0 %v2343
  %3097 = vmatprep.subr.bf16.mxu0 0
  %3098 = vmatpush1.bf16.msra.mxu0 %v2344
  %3099 = vmatprep.subr.bf16.mxu0 0
  %3100 = vmatpush1.bf16.msra.mxu0 %v2345
  %3101 = vmatprep.subr.bf16.mxu0 0
  %3102 = vmatpush1.bf16.msra.mxu0 %v2346
  %3103 = vmatprep.subr.bf16.mxu0 0
  %3104 = vmatpush1.bf16.msra.mxu0 %v2347
  %3105 = vmatprep.subr.bf16.mxu0 0
  %3106 = vmatpush1.bf16.msra.mxu0 %v2348
  %3107 = vmatprep.subr.bf16.mxu0 0
  %3108 = vmatpush1.bf16.msra.mxu0 %v2349
  %3109 = vmatprep.mubr.bf16.mxu0 %v933
  %3110 = vmatmul.mubr.bf16.gmra.mrb[0].mxu0 %v932
  %v3111 = vpop.f32.mrb[0].mxu0
  %v3112 = vadd.f32 %v3063, %v3111
  %v3113 = vpop.f32.mrb[0].mxu0
  %v3114 = vpop.f32.mrb[0].mxu0
  %v3115 = vadd.f32 %v3066, %v3114
  %v3116 = vpop.f32.mrb[0].mxu0
  %3117 = vmatprep.mubr.bf16.mxu0 %v971
  %3118 = vmatmul.mubr.bf16.gmra.mrb[0].mxu0 %v970
  %v3119 = vpop.f32.mrb[0].mxu0
  %v3120 = vadd.f32 %v3071, %v3119
  %v3121 = vpop.f32.mrb[0].mxu0
  %v3122 = vpop.f32.mrb[0].mxu0
  %v3123 = vadd.f32 %v3074, %v3122
  %v3124 = vpop.f32.mrb[0].mxu0
  %3125 = vdwg.mxu0
  %3126 = vmatprep.subr.bf16.mxu0 0
  %3127 = vmatpush1.bf16.msra.mxu0 %v2350
  %3128 = vmatprep.subr.bf16.mxu0 0
  %3129 = vmatpush1.bf16.msra.mxu0 %v2351
  %3130 = vmatprep.subr.bf16.mxu0 0
  %3131 = vmatpush1.bf16.msra.mxu0 %v2352
  %3132 = vmatprep.subr.bf16.mxu0 0
  %3133 = vmatpush1.bf16.msra.mxu0 %v2353
  %3134 = vmatprep.subr.bf16.mxu0 0
  %3135 = vmatpush1.bf16.msra.mxu0 %v2354
  %3136 = vmatprep.subr.bf16.mxu0 0
  %3137 = vmatpush1.bf16.msra.mxu0 %v2355
  %3138 = vmatprep.subr.bf16.mxu0 0
  %3139 = vmatpush1.bf16.msra.mxu0 %v2356
  %3140 = vmatprep.subr.bf16.mxu0 0
  %3141 = vmatpush1.bf16.msra.mxu0 %v2357
  %3142 = vmatprep.subr.bf16.mxu0 0
  %3143 = vmatpush1.bf16.msra.mxu0 %v2358
  %3144 = vmatprep.subr.bf16.mxu0 0
  %3145 = vmatpush1.bf16.msra.mxu0 %v2359
  %3146 = vmatprep.subr.bf16.mxu0 0
  %3147 = vmatpush1.bf16.msra.mxu0 %v2360
  %3148 = vmatprep.subr.bf16.mxu0 0
  %3149 = vmatpush1.bf16.msra.mxu0 %v2361
  %3150 = vmatprep.subr.bf16.mxu0 0
  %3151 = vmatpush1.bf16.msra.mxu0 %v2362
  %3152 = vmatprep.subr.bf16.mxu0 0
  %3153 = vmatpush1.bf16.msra.mxu0 %v2363
  %3154 = vmatprep.subr.bf16.mxu0 0
  %3155 = vmatpush1.bf16.msra.mxu0 %v2364
  %3156 = vmatprep.subr.bf16.mxu0 0
  %3157 = vmatpush1.bf16.msra.mxu0 %v2365
  %3158 = vmatprep.mubr.bf16.mxu0 %v935
  %3159 = vmatmul.mubr.bf16.gmra.mrb[0].mxu0 %v934
  %v3160 = vpop.f32.mrb[0].mxu0
  %v3161 = vadd.f32 %v3112, %v3160
  %v3162 = vpop.f32.mrb[0].mxu0
  %v3163 = vpop.f32.mrb[0].mxu0
  %v3164 = vadd.f32 %v3115, %v3163
  %v3165 = vpop.f32.mrb[0].mxu0
  %3166 = vmatprep.mubr.bf16.mxu0 %v973
  %3167 = vmatmul.mubr.bf16.gmra.mrb[0].mxu0 %v972
  %v3168 = vpop.f32.mrb[0].mxu0
  %v3169 = vadd.f32 %v3120, %v3168
  %v3170 = vpop.f32.mrb[0].mxu0
  %v3171 = vpop.f32.mrb[0].mxu0
  %v3172 = vadd.f32 %v3123, %v3171
  %v3173 = vpop.f32.mrb[0].mxu0
  %3174 = vdwg.mxu0
  %3175 = vmatprep.subr.bf16.mxu0 0
  %3176 = vmatpush1.bf16.msra.mxu0 %v2366
  %3177 = vmatprep.subr.bf16.mxu0 0
  %3178 = vmatpush1.bf16.msra.mxu0 %v2367
  %3179 = vmatprep.subr.bf16.mxu0 0
  %3180 = vmatpush1.bf16.msra.mxu0 %v2368
  %3181 = vmatprep.subr.bf16.mxu0 0
  %3182 = vmatpush1.bf16.msra.mxu0 %v2369
  %3183 = vmatprep.subr.bf16.mxu0 0
  %3184 = vmatpush1.bf16.msra.mxu0 %v2370
  %3185 = vmatprep.subr.bf16.mxu0 0
  %3186 = vmatpush1.bf16.msra.mxu0 %v2371
  %3187 = vmatprep.subr.bf16.mxu0 0
  %3188 = vmatpush1.bf16.msra.mxu0 %v2372
  %3189 = vmatprep.subr.bf16.mxu0 0
  %3190 = vmatpush1.bf16.msra.mxu0 %v2373
  %3191 = vmatprep.subr.bf16.mxu0 0
  %3192 = vmatpush1.bf16.msra.mxu0 %v2374
  %3193 = vmatprep.subr.bf16.mxu0 0
  %3194 = vmatpush1.bf16.msra.mxu0 %v2375
  %3195 = vmatprep.subr.bf16.mxu0 0
  %3196 = vmatpush1.bf16.msra.mxu0 %v2376
  %3197 = vmatprep.subr.bf16.mxu0 0
  %3198 = vmatpush1.bf16.msra.mxu0 %v2377
  %3199 = vmatprep.subr.bf16.mxu0 0
  %3200 = vmatpush1.bf16.msra.mxu0 %v2378
  %3201 = vmatprep.subr.bf16.mxu0 0
  %3202 = vmatpush1.bf16.msra.mxu0 %v2379
  %3203 = vmatprep.subr.bf16.mxu0 0
  %3204 = vmatpush1.bf16.msra.mxu0 %v2380
  %3205 = vmatprep.subr.bf16.mxu0 0
  %3206 = vmatpush1.bf16.msra.mxu0 %v2381
  %3207 = vmatprep.mubr.bf16.mxu0 %v937
  %3208 = vmatmul.mubr.bf16.gmra.mrb[0].mxu0 %v936
  %v3209 = vpop.f32.mrb[0].mxu0
  %v3210 = vadd.f32 %v3161, %v3209
  %v3211 = vpop.f32.mrb[0].mxu0
  %v3212 = vpop.f32.mrb[0].mxu0
  %v3213 = vadd.f32 %v3164, %v3212
  %v3214 = vpop.f32.mrb[0].mxu0
  %3215 = vmatprep.mubr.bf16.mxu0 %v975
  %3216 = vmatmul.mubr.bf16.gmra.mrb[0].mxu0 %v974
  %v3217 = vpop.f32.mrb[0].mxu0
  %v3218 = vadd.f32 %v3169, %v3217
  %v3219 = vpop.f32.mrb[0].mxu0
  %v3220 = vpop.f32.mrb[0].mxu0
  %v3221 = vadd.f32 %v3172, %v3220
  %v3222 = vpop.f32.mrb[0].mxu0
  %3223 = vdwg.mxu0
  %3224 = vmatprep.subr.bf16.mxu0 0
  %3225 = vmatpush1.bf16.msra.mxu0 %v2382
  %3226 = vmatprep.subr.bf16.mxu0 0
  %3227 = vmatpush1.bf16.msra.mxu0 %v2383
  %3228 = vmatprep.subr.bf16.mxu0 0
  %3229 = vmatpush1.bf16.msra.mxu0 %v2384
  %3230 = vmatprep.subr.bf16.mxu0 0
  %3231 = vmatpush1.bf16.msra.mxu0 %v2385
  %3232 = vmatprep.subr.bf16.mxu0 0
  %3233 = vmatpush1.bf16.msra.mxu0 %v2386
  %3234 = vmatprep.subr.bf16.mxu0 0
  %3235 = vmatpush1.bf16.msra.mxu0 %v2387
  %3236 = vmatprep.subr.bf16.mxu0 0
  %3237 = vmatpush1.bf16.msra.mxu0 %v2388
  %3238 = vmatprep.subr.bf16.mxu0 0
  %3239 = vmatpush1.bf16.msra.mxu0 %v2389
  %3240 = vmatprep.subr.bf16.mxu0 0
  %3241 = vmatpush1.bf16.msra.mxu0 %v2390
  %3242 = vmatprep.subr.bf16.mxu0 0
  %3243 = vmatpush1.bf16.msra.mxu0 %v2391
  %3244 = vmatprep.subr.bf16.mxu0 0
  %3245 = vmatpush1.bf16.msra.mxu0 %v2392
  %3246 = vmatprep.subr.bf16.mxu0 0
  %3247 = vmatpush1.bf16.msra.mxu0 %v2393
  %3248 = vmatprep.subr.bf16.mxu0 0
  %3249 = vmatpush1.bf16.msra.mxu0 %v2394
  %3250 = vmatprep.subr.bf16.mxu0 0
  %3251 = vmatpush1.bf16.msra.mxu0 %v2395
  %3252 = vmatprep.subr.bf16.mxu0 0
  %3253 = vmatpush1.bf16.msra.mxu0 %v2396
  %3254 = vmatprep.subr.bf16.mxu0 0
  %3255 = vmatpush1.bf16.msra.mxu0 %v2397
  %3256 = vmatprep.mubr.bf16.mxu0 %v939
  %3257 = vmatmul.mubr.bf16.gmra.mrb[0].mxu0 %v938
  %v3258 = vpop.f32.mrb[0].mxu0
  %v3259 = vadd.f32 %v3210, %v3258
  %v3260 = vpop.f32.mrb[0].mxu0
  %v3261 = vpop.f32.mrb[0].mxu0
  %v3262 = vadd.f32 %v3213, %v3261
  %v3263 = vpop.f32.mrb[0].mxu0
  %3264 = vmatprep.mubr.bf16.mxu0 %v977
  %3265 = vmatmul.mubr.bf16.gmra.mrb[0].mxu0 %v976
  %v3266 = vpop.f32.mrb[0].mxu0
  %v3267 = vadd.f32 %v3218, %v3266
  %v3268 = vpop.f32.mrb[0].mxu0
  %v3269 = vpop.f32.mrb[0].mxu0
  %v3270 = vadd.f32 %v3221, %v3269
  %v3271 = vpop.f32.mrb[0].mxu0
  %3272 = vdwg.mxu0
  %3273 = vmatprep.subr.bf16.mxu0 0
  %3274 = vmatpush1.bf16.msra.mxu0 %v2398
  %3275 = vmatprep.subr.bf16.mxu0 0
  %3276 = vmatpush1.bf16.msra.mxu0 %v2399
  %3277 = vmatprep.subr.bf16.mxu0 0
  %3278 = vmatpush1.bf16.msra.mxu0 %v2400
  %3279 = vmatprep.subr.bf16.mxu0 0
  %3280 = vmatpush1.bf16.msra.mxu0 %v2401
  %3281 = vmatprep.subr.bf16.mxu0 0
  %3282 = vmatpush1.bf16.msra.mxu0 %v2402
  %3283 = vmatprep.subr.bf16.mxu0 0
  %3284 = vmatpush1.bf16.msra.mxu0 %v2403
  %3285 = vmatprep.subr.bf16.mxu0 0
  %3286 = vmatpush1.bf16.msra.mxu0 %v2404
  %3287 = vmatprep.subr.bf16.mxu0 0
  %3288 = vmatpush1.bf16.msra.mxu0 %v2405
  %3289 = vmatprep.subr.bf16.mxu0 0
  %3290 = vmatpush1.bf16.msra.mxu0 %v2406
  %3291 = vmatprep.subr.bf16.mxu0 0
  %3292 = vmatpush1.bf16.msra.mxu0 %v2407
  %3293 = vmatprep.subr.bf16.mxu0 0
  %3294 = vmatpush1.bf16.msra.mxu0 %v2408
  %3295 = vmatprep.subr.bf16.mxu0 0
  %3296 = vmatpush1.bf16.msra.mxu0 %v2409
  %3297 = vmatprep.subr.bf16.mxu0 0
  %3298 = vmatpush1.bf16.msra.mxu0 %v2410
  %3299 = vmatprep.subr.bf16.mxu0 0
  %3300 = vmatpush1.bf16.msra.mxu0 %v2411
  %3301 = vmatprep.subr.bf16.mxu0 0
  %3302 = vmatpush1.bf16.msra.mxu0 %v2412
  %3303 = vmatprep.subr.bf16.mxu0 0
  %3304 = vmatpush1.bf16.msra.mxu0 %v2413
  %3305 = vmatprep.mubr.bf16.mxu0 %v941
  %3306 = vmatmul.mubr.bf16.gmra.mrb[0].mxu0 %v940
  %v3307 = vpop.f32.mrb[0].mxu0
  %v3308 = vadd.f32 %v3259, %v3307
  %v3309 = vpop.f32.mrb[0].mxu0
  %v3310 = vpop.f32.mrb[0].mxu0
  %v3311 = vadd.f32 %v3262, %v3310
  %v3312 = vpop.f32.mrb[0].mxu0
  %3313 = vmatprep.mubr.bf16.mxu0 %v979
  %3314 = vmatmul.mubr.bf16.gmra.mrb[0].mxu0 %v978
  %v3315 = vpop.f32.mrb[0].mxu0
  %v3316 = vadd.f32 %v3267, %v3315
  %v3317 = vpop.f32.mrb[0].mxu0
  %v3318 = vpop.f32.mrb[0].mxu0
  %v3319 = vadd.f32 %v3270, %v3318
  %v3320 = vpop.f32.mrb[0].mxu0
  %3321 = vdwg.mxu0
  %3322 = vmatprep.subr.bf16.mxu0 0
  %3323 = vmatpush1.bf16.msra.mxu0 %v2414
  %3324 = vmatprep.subr.bf16.mxu0 0
  %3325 = vmatpush1.bf16.msra.mxu0 %v2415
  %3326 = vmatprep.subr.bf16.mxu0 0
  %3327 = vmatpush1.bf16.msra.mxu0 %v2416
  %3328 = vmatprep.subr.bf16.mxu0 0
  %3329 = vmatpush1.bf16.msra.mxu0 %v2417
  %3330 = vmatprep.subr.bf16.mxu0 0
  %3331 = vmatpush1.bf16.msra.mxu0 %v2418
  %3332 = vmatprep.subr.bf16.mxu0 0
  %3333 = vmatpush1.bf16.msra.mxu0 %v2419
  %3334 = vmatprep.subr.bf16.mxu0 0
  %3335 = vmatpush1.bf16.msra.mxu0 %v2420
  %3336 = vmatprep.subr.bf16.mxu0 0
  %3337 = vmatpush1.bf16.msra.mxu0 %v2421
  %3338 = vmatprep.subr.bf16.mxu0 0
  %3339 = vmatpush1.bf16.msra.mxu0 %v2422
  %3340 = vmatprep.subr.bf16.mxu0 0
  %3341 = vmatpush1.bf16.msra.mxu0 %v2423
  %3342 = vmatprep.subr.bf16.mxu0 0
  %3343 = vmatpush1.bf16.msra.mxu0 %v2424
  %3344 = vmatprep.subr.bf16.mxu0 0
  %3345 = vmatpush1.bf16.msra.mxu0 %v2425
  %3346 = vmatprep.subr.bf16.mxu0 0
  %3347 = vmatpush1.bf16.msra.mxu0 %v2426
  %3348 = vmatprep.subr.bf16.mxu0 0
  %3349 = vmatpush1.bf16.msra.mxu0 %v2427
  %3350 = vmatprep.subr.bf16.mxu0 0
  %3351 = vmatpush1.bf16.msra.mxu0 %v2428
  %3352 = vmatprep.subr.bf16.mxu0 0
  %3353 = vmatpush1.bf16.msra.mxu0 %v2429
  %3354 = vmatprep.mubr.bf16.mxu0 %v943
  %3355 = vmatmul.mubr.bf16.gmra.mrb[0].mxu0 %v942
  %v3356 = vpop.f32.mrb[0].mxu0
  %v3357 = vadd.f32 %v3308, %v3356
  %v3358 = vpop.f32.mrb[0].mxu0
  %v3359 = vpop.f32.mrb[0].mxu0
  %v3360 = vadd.f32 %v3311, %v3359
  %v3361 = vpop.f32.mrb[0].mxu0
  %3362 = vmatprep.mubr.bf16.mxu0 %v981
  %3363 = vmatmul.mubr.bf16.gmra.mrb[0].mxu0 %v980
  %v3364 = vpop.f32.mrb[0].mxu0
  %v3365 = vadd.f32 %v3316, %v3364
  %v3366 = vpop.f32.mrb[0].mxu0
  %v3367 = vpop.f32.mrb[0].mxu0
  %v3368 = vadd.f32 %v3319, %v3367
  %v3369 = vpop.f32.mrb[0].mxu0
  %3370 = vdwg.mxu0
  %3371 = vmatprep.subr.bf16.mxu0 0
  %3372 = vmatpush1.bf16.msra.mxu0 %v2430
  %3373 = vmatprep.subr.bf16.mxu0 0
  %3374 = vmatpush1.bf16.msra.mxu0 %v2431
  %3375 = vmatprep.subr.bf16.mxu0 0
  %3376 = vmatpush1.bf16.msra.mxu0 %v2432
  %3377 = vmatprep.subr.bf16.mxu0 0
  %3378 = vmatpush1.bf16.msra.mxu0 %v2433
  %3379 = vmatprep.subr.bf16.mxu0 0
  %3380 = vmatpush1.bf16.msra.mxu0 %v2434
  %3381 = vmatprep.subr.bf16.mxu0 0
  %3382 = vmatpush1.bf16.msra.mxu0 %v2435
  %3383 = vmatprep.subr.bf16.mxu0 0
  %3384 = vmatpush1.bf16.msra.mxu0 %v2436
  %3385 = vmatprep.subr.bf16.mxu0 0
  %3386 = vmatpush1.bf16.msra.mxu0 %v2437
  %3387 = vmatprep.subr.bf16.mxu0 0
  %3388 = vmatpush1.bf16.msra.mxu0 %v2438
  %3389 = vmatprep.subr.bf16.mxu0 0
  %3390 = vmatpush1.bf16.msra.mxu0 %v2439
  %3391 = vmatprep.subr.bf16.mxu0 0
  %3392 = vmatpush1.bf16.msra.mxu0 %v2440
  %3393 = vmatprep.subr.bf16.mxu0 0
  %3394 = vmatpush1.bf16.msra.mxu0 %v2441
  %3395 = vmatprep.subr.bf16.mxu0 0
  %3396 = vmatpush1.bf16.msra.mxu0 %v2442
  %3397 = vmatprep.subr.bf16.mxu0 0
  %3398 = vmatpush1.bf16.msra.mxu0 %v2443
  %3399 = vmatprep.subr.bf16.mxu0 0
  %3400 = vmatpush1.bf16.msra.mxu0 %v2444
  %3401 = vmatprep.subr.bf16.mxu0 0
  %3402 = vmatpush1.bf16.msra.mxu0 %v2445
  %3403 = vmatprep.mubr.bf16.mxu0 %v945
  %3404 = vmatmul.mubr.bf16.gmra.mrb[0].mxu0 %v944
  %v3405 = vpop.f32.mrb[0].mxu0
  %v3406 = vadd.f32 %v3357, %v3405
  %v3407 = vpop.f32.mrb[0].mxu0
  %v3408 = vpop.f32.mrb[0].mxu0
  %v3409 = vadd.f32 %v3360, %v3408
  %v3410 = vpop.f32.mrb[0].mxu0
  %3411 = vmatprep.mubr.bf16.mxu0 %v983
  %3412 = vmatmul.mubr.bf16.gmra.mrb[0].mxu0 %v982
  %v3413 = vpop.f32.mrb[0].mxu0
  %v3414 = vadd.f32 %v3365, %v3413
  %v3415 = vpop.f32.mrb[0].mxu0
  %v3416 = vpop.f32.mrb[0].mxu0
  %v3417 = vadd.f32 %v3368, %v3416
  %v3418 = vpop.f32.mrb[0].mxu0
  %3419 = vdwg.mxu0
  %3420 = vmatprep.subr.bf16.mxu0 0
  %3421 = vmatpush1.bf16.msra.mxu0 %v2446
  %3422 = vmatprep.subr.bf16.mxu0 0
  %3423 = vmatpush1.bf16.msra.mxu0 %v2447
  %3424 = vmatprep.subr.bf16.mxu0 0
  %3425 = vmatpush1.bf16.msra.mxu0 %v2448
  %3426 = vmatprep.subr.bf16.mxu0 0
  %3427 = vmatpush1.bf16.msra.mxu0 %v2449
  %3428 = vmatprep.subr.bf16.mxu0 0
  %3429 = vmatpush1.bf16.msra.mxu0 %v2450
  %3430 = vmatprep.subr.bf16.mxu0 0
  %3431 = vmatpush1.bf16.msra.mxu0 %v2451
  %3432 = vmatprep.subr.bf16.mxu0 0
  %3433 = vmatpush1.bf16.msra.mxu0 %v2452
  %3434 = vmatprep.subr.bf16.mxu0 0
  %3435 = vmatpush1.bf16.msra.mxu0 %v2453
  %3436 = vmatprep.subr.bf16.mxu0 0
  %3437 = vmatpush1.bf16.msra.mxu0 %v2454
  %3438 = vmatprep.subr.bf16.mxu0 0
  %3439 = vmatpush1.bf16.msra.mxu0 %v2455
  %3440 = vmatprep.subr.bf16.mxu0 0
  %3441 = vmatpush1.bf16.msra.mxu0 %v2456
  %3442 = vmatprep.subr.bf16.mxu0 0
  %3443 = vmatpush1.bf16.msra.mxu0 %v2457
  %3444 = vmatprep.subr.bf16.mxu0 0
  %3445 = vmatpush1.bf16.msra.mxu0 %v2458
  %3446 = vmatprep.subr.bf16.mxu0 0
  %3447 = vmatpush1.bf16.msra.mxu0 %v2459
  %3448 = vmatprep.subr.bf16.mxu0 0
  %3449 = vmatpush1.bf16.msra.mxu0 %v2460
  %3450 = vmatprep.subr.bf16.mxu0 0
  %3451 = vmatpush1.bf16.msra.mxu0 %v2461
  %3452 = vmatprep.mubr.bf16.mxu0 %v947
  %3453 = vmatmul.mubr.bf16.gmra.mrb[0].mxu0 %v946
  %v3454 = vpop.f32.mrb[0].mxu0
  %v3455 = vadd.f32 %v3406, %v3454
  %v3456 = vpop.f32.mrb[0].mxu0
  %v3457 = vpop.f32.mrb[0].mxu0
  %v3458 = vadd.f32 %v3409, %v3457
  %v3459 = vpop.f32.mrb[0].mxu0
  %3460 = vmatprep.mubr.bf16.mxu0 %v985
  %3461 = vmatmul.mubr.bf16.gmra.mrb[0].mxu0 %v984
  %v3462 = vpop.f32.mrb[0].mxu0
  %v3463 = vadd.f32 %v3414, %v3462
  %v3464 = vpop.f32.mrb[0].mxu0
  %v3465 = vpop.f32.mrb[0].mxu0
  %v3466 = vadd.f32 %v3417, %v3465
  %v3467 = vpop.f32.mrb[0].mxu0
  %3468 = vdwg.mxu0
  %3469 = vmatprep.subr.bf16.mxu0 0
  %3470 = vmatpush1.bf16.msra.mxu0 %v2462
  %3471 = vmatprep.subr.bf16.mxu0 0
  %3472 = vmatpush1.bf16.msra.mxu0 %v2463
  %3473 = vmatprep.subr.bf16.mxu0 0
  %3474 = vmatpush1.bf16.msra.mxu0 %v2464
  %3475 = vmatprep.subr.bf16.mxu0 0
  %3476 = vmatpush1.bf16.msra.mxu0 %v2465
  %3477 = vmatprep.subr.bf16.mxu0 0
  %3478 = vmatpush1.bf16.msra.mxu0 %v2466
  %3479 = vmatprep.subr.bf16.mxu0 0
  %3480 = vmatpush1.bf16.msra.mxu0 %v2467
  %3481 = vmatprep.subr.bf16.mxu0 0
  %3482 = vmatpush1.bf16.msra.mxu0 %v2468
  %3483 = vmatprep.subr.bf16.mxu0 0
  %3484 = vmatpush1.bf16.msra.mxu0 %v2469
  %3485 = vmatprep.subr.bf16.mxu0 0
  %3486 = vmatpush1.bf16.msra.mxu0 %v2470
  %3487 = vmatprep.subr.bf16.mxu0 0
  %3488 = vmatpush1.bf16.msra.mxu0 %v2471
  %3489 = vmatprep.subr.bf16.mxu0 0
  %3490 = vmatpush1.bf16.msra.mxu0 %v2472
  %3491 = vmatprep.subr.bf16.mxu0 0
  %3492 = vmatpush1.bf16.msra.mxu0 %v2473
  %3493 = vmatprep.subr.bf16.mxu0 0
  %3494 = vmatpush1.bf16.msra.mxu0 %v2474
  %3495 = vmatprep.subr.bf16.mxu0 0
  %3496 = vmatpush1.bf16.msra.mxu0 %v2475
  %3497 = vmatprep.subr.bf16.mxu0 0
  %3498 = vmatpush1.bf16.msra.mxu0 %v2476
  %3499 = vmatprep.subr.bf16.mxu0 0
  %3500 = vmatpush1.bf16.msra.mxu0 %v2477
  %3501 = vmatprep.mubr.bf16.mxu0 %v949
  %3502 = vmatmul.mubr.bf16.gmra.mrb[0].mxu0 %v948
  %v3503 = vpop.f32.mrb[0].mxu0
  %v3504 = vadd.f32 %v3455, %v3503
  %v3505 = vpop.f32.mrb[0].mxu0
  %v3506 = vpop.f32.mrb[0].mxu0
  %v3507 = vadd.f32 %v3458, %v3506
  %v3508 = vpop.f32.mrb[0].mxu0
  %3509 = vmatprep.mubr.bf16.mxu0 %v987
  %3510 = vmatmul.mubr.bf16.gmra.mrb[0].mxu0 %v986
  %v3511 = vpop.f32.mrb[0].mxu0
  %v3512 = vadd.f32 %v3463, %v3511
  %v3513 = vpop.f32.mrb[0].mxu0
  %v3514 = vpop.f32.mrb[0].mxu0
  %v3515 = vadd.f32 %v3466, %v3514
  %v3516 = vpop.f32.mrb[0].mxu0
  %3517 = vdwg.mxu0
  %3518 = vmatprep.subr.bf16.mxu0 0
  %3519 = vmatpush1.bf16.msra.mxu0 %v2478
  %3520 = vmatprep.subr.bf16.mxu0 0
  %3521 = vmatpush1.bf16.msra.mxu0 %v2479
  %3522 = vmatprep.subr.bf16.mxu0 0
  %3523 = vmatpush1.bf16.msra.mxu0 %v2480
  %3524 = vmatprep.subr.bf16.mxu0 0
  %3525 = vmatpush1.bf16.msra.mxu0 %v2481
  %3526 = vmatprep.subr.bf16.mxu0 0
  %3527 = vmatpush1.bf16.msra.mxu0 %v2482
  %3528 = vmatprep.subr.bf16.mxu0 0
  %3529 = vmatpush1.bf16.msra.mxu0 %v2483
  %3530 = vmatprep.subr.bf16.mxu0 0
  %3531 = vmatpush1.bf16.msra.mxu0 %v2484
  %3532 = vmatprep.subr.bf16.mxu0 0
  %3533 = vmatpush1.bf16.msra.mxu0 %v2485
  %3534 = vmatprep.subr.bf16.mxu0 0
  %3535 = vmatpush1.bf16.msra.mxu0 %v2486
  %3536 = vmatprep.subr.bf16.mxu0 0
  %3537 = vmatpush1.bf16.msra.mxu0 %v2487
  %3538 = vmatprep.subr.bf16.mxu0 0
  %3539 = vmatpush1.bf16.msra.mxu0 %v2488
  %3540 = vmatprep.subr.bf16.mxu0 0
  %3541 = vmatpush1.bf16.msra.mxu0 %v2489
  %3542 = vmatprep.subr.bf16.mxu0 0
  %3543 = vmatpush1.bf16.msra.mxu0 %v2490
  %3544 = vmatprep.subr.bf16.mxu0 0
  %3545 = vmatpush1.bf16.msra.mxu0 %v2491
  %3546 = vmatprep.subr.bf16.mxu0 0
  %3547 = vmatpush1.bf16.msra.mxu0 %v2492
  %3548 = vmatprep.subr.bf16.mxu0 0
  %3549 = vmatpush1.bf16.msra.mxu0 %v2493
  %3550 = vmatprep.mubr.bf16.mxu0 %v951
  %3551 = vmatmul.mubr.bf16.gmra.mrb[0].mxu0 %v950
  %v3552 = vpop.f32.mrb[0].mxu0
  %v3553 = vadd.f32 %v3504, %v3552
  %v3554 = vpop.f32.mrb[0].mxu0
  %v3555 = vpop.f32.mrb[0].mxu0
  %v3556 = vadd.f32 %v3507, %v3555
  %v3557 = vpop.f32.mrb[0].mxu0
  %3558 = vmatprep.mubr.bf16.mxu0 %v989
  %3559 = vmatmul.mubr.bf16.gmra.mrb[0].mxu0 %v988
  %v3560 = vpop.f32.mrb[0].mxu0
  %v3561 = vadd.f32 %v3512, %v3560
  %v3562 = vpop.f32.mrb[0].mxu0
  %v3563 = vpop.f32.mrb[0].mxu0
  %v3564 = vadd.f32 %v3515, %v3563
  %v3565 = vpop.f32.mrb[0].mxu0
  %3566 = vdwg.mxu0
  %3567 = vmatprep.subr.bf16.mxu0 0
  %3568 = vmatpush1.bf16.msra.mxu0 %v2494
  %3569 = vmatprep.subr.bf16.mxu0 0
  %3570 = vmatpush1.bf16.msra.mxu0 %v2495
  %3571 = vmatprep.subr.bf16.mxu0 0
  %3572 = vmatpush1.bf16.msra.mxu0 %v2496
  %3573 = vmatprep.subr.bf16.mxu0 0
  %3574 = vmatpush1.bf16.msra.mxu0 %v2497
  %3575 = vmatprep.subr.bf16.mxu0 0
  %3576 = vmatpush1.bf16.msra.mxu0 %v2498
  %3577 = vmatprep.subr.bf16.mxu0 0
  %3578 = vmatpush1.bf16.msra.mxu0 %v2499
  %3579 = vmatprep.subr.bf16.mxu0 0
  %3580 = vmatpush1.bf16.msra.mxu0 %v2500
  %3581 = vmatprep.subr.bf16.mxu0 0
  %3582 = vmatpush1.bf16.msra.mxu0 %v2501
  %3583 = vmatprep.subr.bf16.mxu0 0
  %3584 = vmatpush1.bf16.msra.mxu0 %v2502
  %3585 = vmatprep.subr.bf16.mxu0 0
  %3586 = vmatpush1.bf16.msra.mxu0 %v2503
  %3587 = vmatprep.subr.bf16.mxu0 0
  %3588 = vmatpush1.bf16.msra.mxu0 %v2504
  %3589 = vmatprep.subr.bf16.mxu0 0
  %3590 = vmatpush1.bf16.msra.mxu0 %v2505
  %3591 = vmatprep.subr.bf16.mxu0 0
  %3592 = vmatpush1.bf16.msra.mxu0 %v2506
  %3593 = vmatprep.subr.bf16.mxu0 0
  %3594 = vmatpush1.bf16.msra.mxu0 %v2507
  %3595 = vmatprep.subr.bf16.mxu0 0
  %3596 = vmatpush1.bf16.msra.mxu0 %v2508
  %3597 = vmatprep.subr.bf16.mxu0 0
  %3598 = vmatpush1.bf16.msra.mxu0 %v2509
  %3599 = vmatprep.mubr.bf16.mxu0 %v953
  %3600 = vmatmul.mubr.bf16.gmra.mrb[0].mxu0 %v952
  %v3601 = vpop.f32.mrb[0].mxu0
  %v3602 = vadd.f32 %v3553, %v3601
  %v3603 = vpop.f32.mrb[0].mxu0
  %v3604 = vpop.f32.mrb[0].mxu0
  %v3605 = vadd.f32 %v3556, %v3604
  %v3606 = vpop.f32.mrb[0].mxu0
  %3607 = vmatprep.mubr.bf16.mxu0 %v991
  %3608 = vmatmul.mubr.bf16.gmra.mrb[0].mxu0 %v990
  %v3609 = vpop.f32.mrb[0].mxu0
  %v3610 = vadd.f32 %v3561, %v3609
  %v3611 = vpop.f32.mrb[0].mxu0
  %v3612 = vpop.f32.mrb[0].mxu0
  %v3613 = vadd.f32 %v3564, %v3612
  %v3614 = vpop.f32.mrb[0].mxu0
  %3615 = vdwg.mxu0
  %3616 = vmatprep.subr.bf16.mxu0 0
  %3617 = vmatpush1.bf16.msra.mxu0 %v2510
  %3618 = vmatprep.subr.bf16.mxu0 0
  %3619 = vmatpush1.bf16.msra.mxu0 %v2511
  %3620 = vmatprep.subr.bf16.mxu0 0
  %3621 = vmatpush1.bf16.msra.mxu0 %v2512
  %3622 = vmatprep.subr.bf16.mxu0 0
  %3623 = vmatpush1.bf16.msra.mxu0 %v2513
  %3624 = vmatprep.subr.bf16.mxu0 0
  %3625 = vmatpush1.bf16.msra.mxu0 %v2514
  %3626 = vmatprep.subr.bf16.mxu0 0
  %3627 = vmatpush1.bf16.msra.mxu0 %v2515
  %3628 = vmatprep.subr.bf16.mxu0 0
  %3629 = vmatpush1.bf16.msra.mxu0 %v2516
  %3630 = vmatprep.subr.bf16.mxu0 0
  %3631 = vmatpush1.bf16.msra.mxu0 %v2517
  %3632 = vmatprep.subr.bf16.mxu0 0
  %3633 = vmatpush1.bf16.msra.mxu0 %v2518
  %3634 = vmatprep.subr.bf16.mxu0 0
  %3635 = vmatpush1.bf16.msra.mxu0 %v2519
  %3636 = vmatprep.subr.bf16.mxu0 0
  %3637 = vmatpush1.bf16.msra.mxu0 %v2520
  %3638 = vmatprep.subr.bf16.mxu0 0
  %3639 = vmatpush1.bf16.msra.mxu0 %v2521
  %3640 = vmatprep.subr.bf16.mxu0 0
  %3641 = vmatpush1.bf16.msra.mxu0 %v2522
  %3642 = vmatprep.subr.bf16.mxu0 0
  %3643 = vmatpush1.bf16.msra.mxu0 %v2523
  %3644 = vmatprep.subr.bf16.mxu0 0
  %3645 = vmatpush1.bf16.msra.mxu0 %v2524
  %3646 = vmatprep.subr.bf16.mxu0 0
  %3647 = vmatpush1.bf16.msra.mxu0 %v2525
  %3648 = vmatprep.mubr.bf16.mxu0 %v955
  %3649 = vmatmul.mubr.bf16.gmra.mrb[0].mxu0 %v954
  %v3650 = vpop.f32.mrb[0].mxu0
  %v3651 = vadd.f32 %v3602, %v3650
  %v3652 = vpop.f32.mrb[0].mxu0
  %v3653 = vpop.f32.mrb[0].mxu0
  %v3654 = vadd.f32 %v3605, %v3653
  %v3655 = vpop.f32.mrb[0].mxu0
  %3656 = vmatprep.mubr.bf16.mxu0 %v993
  %3657 = vmatmul.mubr.bf16.gmra.mrb[0].mxu0 %v992
  %v3658 = vpop.f32.mrb[0].mxu0
  %v3659 = vadd.f32 %v3610, %v3658
  %v3660 = vpop.f32.mrb[0].mxu0
  %v3661 = vpop.f32.mrb[0].mxu0
  %v3662 = vadd.f32 %v3613, %v3661
  %v3663 = vpop.f32.mrb[0].mxu0
  %3664 = vdwg.mxu0
  %3665 = vmatprep.subr.bf16.mxu0 0
  %3666 = vmatpush1.bf16.msra.mxu0 %v2526
  %3667 = vmatprep.subr.bf16.mxu0 0
  %3668 = vmatpush1.bf16.msra.mxu0 %v2527
  %3669 = vmatprep.subr.bf16.mxu0 0
  %3670 = vmatpush1.bf16.msra.mxu0 %v2528
  %3671 = vmatprep.subr.bf16.mxu0 0
  %3672 = vmatpush1.bf16.msra.mxu0 %v2529
  %3673 = vmatprep.subr.bf16.mxu0 0
  %3674 = vmatpush1.bf16.msra.mxu0 %v2530
  %3675 = vmatprep.subr.bf16.mxu0 0
  %3676 = vmatpush1.bf16.msra.mxu0 %v2531
  %3677 = vmatprep.subr.bf16.mxu0 0
  %3678 = vmatpush1.bf16.msra.mxu0 %v2532
  %3679 = vmatprep.subr.bf16.mxu0 0
  %3680 = vmatpush1.bf16.msra.mxu0 %v2533
  %3681 = vmatprep.subr.bf16.mxu0 0
  %3682 = vmatpush1.bf16.msra.mxu0 %v2534
  %3683 = vmatprep.subr.bf16.mxu0 0
  %3684 = vmatpush1.bf16.msra.mxu0 %v2535
  %3685 = vmatprep.subr.bf16.mxu0 0
  %3686 = vmatpush1.bf16.msra.mxu0 %v2536
  %3687 = vmatprep.subr.bf16.mxu0 0
  %3688 = vmatpush1.bf16.msra.mxu0 %v2537
  %3689 = vmatprep.subr.bf16.mxu0 0
  %3690 = vmatpush1.bf16.msra.mxu0 %v2538
  %3691 = vmatprep.subr.bf16.mxu0 0
  %3692 = vmatpush1.bf16.msra.mxu0 %v2539
  %3693 = vmatprep.subr.bf16.mxu0 0
  %3694 = vmatpush1.bf16.msra.mxu0 %v2540
  %3695 = vmatprep.subr.bf16.mxu0 0
  %3696 = vmatpush1.bf16.msra.mxu0 %v2541
  %3697 = vmatprep.mubr.bf16.mxu0 %v957
  %3698 = vmatmul.mubr.bf16.gmra.mrb[0].mxu0 %v956
  %v3699 = vpop.f32.mrb[0].mxu0
  %v3700 = vadd.f32 %v3651, %v3699
  %v3701 = vpop.f32.mrb[0].mxu0
  %v3702 = vpop.f32.mrb[0].mxu0
  %v3703 = vadd.f32 %v3654, %v3702
  %v3704 = vpop.f32.mrb[0].mxu0
  %3705 = vmatprep.mubr.bf16.mxu0 %v995
  %3706 = vmatmul.mubr.bf16.gmra.mrb[0].mxu0 %v994
  %v3707 = vpop.f32.mrb[0].mxu0
  %v3708 = vadd.f32 %v3659, %v3707
  %v3709 = vpop.f32.mrb[0].mxu0
  %v3710 = vpop.f32.mrb[0].mxu0
  %v3711 = vadd.f32 %v3662, %v3710
  %v3712 = vpop.f32.mrb[0].mxu0
  %3713 = vdwg.mxu0
  %3714 = vmatprep.subr.bf16.mxu0 0
  %3715 = vmatpush1.bf16.msra.mxu0 %v2542
  %3716 = vmatprep.subr.bf16.mxu0 0
  %3717 = vmatpush1.bf16.msra.mxu0 %v2543
  %3718 = vmatprep.subr.bf16.mxu0 0
  %3719 = vmatpush1.bf16.msra.mxu0 %v2544
  %3720 = vmatprep.subr.bf16.mxu0 0
  %3721 = vmatpush1.bf16.msra.mxu0 %v2545
  %3722 = vmatprep.subr.bf16.mxu0 0
  %3723 = vmatpush1.bf16.msra.mxu0 %v2546
  %3724 = vmatprep.subr.bf16.mxu0 0
  %3725 = vmatpush1.bf16.msra.mxu0 %v2547
  %3726 = vmatprep.subr.bf16.mxu0 0
  %3727 = vmatpush1.bf16.msra.mxu0 %v2548
  %3728 = vmatprep.subr.bf16.mxu0 0
  %3729 = vmatpush1.bf16.msra.mxu0 %v2549
  %3730 = vmatprep.subr.bf16.mxu0 0
  %3731 = vmatpush1.bf16.msra.mxu0 %v2550
  %3732 = vmatprep.subr.bf16.mxu0 0
  %3733 = vmatpush1.bf16.msra.mxu0 %v2551
  %3734 = vmatprep.subr.bf16.mxu0 0
  %3735 = vmatpush1.bf16.msra.mxu0 %v2552
  %3736 = vmatprep.subr.bf16.mxu0 0
  %3737 = vmatpush1.bf16.msra.mxu0 %v2553
  %3738 = vmatprep.subr.bf16.mxu0 0
  %3739 = vmatpush1.bf16.msra.mxu0 %v2554
  %3740 = vmatprep.subr.bf16.mxu0 0
  %3741 = vmatpush1.bf16.msra.mxu0 %v2555
  %3742 = vmatprep.subr.bf16.mxu0 0
  %3743 = vmatpush1.bf16.msra.mxu0 %v2556
  %3744 = vmatprep.subr.bf16.mxu0 0
  %3745 = vmatpush1.bf16.msra.mxu0 %v2557
  %3746 = vmatprep.mubr.bf16.mxu0 %v959
  %3747 = vmatmul.mubr.bf16.gmra.mrb[0].mxu0 %v958
  %v3748 = vpop.f32.mrb[0].mxu0
  %v3749 = vadd.f32 %v3700, %v3748
  %v3750 = vpop.f32.mrb[0].mxu0
  %v3751 = vpop.f32.mrb[0].mxu0
  %v3752 = vadd.f32 %v3703, %v3751
  %v3753 = vpop.f32.mrb[0].mxu0
  %3754 = vmatprep.mubr.bf16.mxu0 %v997
  %3755 = vmatmul.mubr.bf16.gmra.mrb[0].mxu0 %v996
  %v3756 = vpop.f32.mrb[0].mxu0
  %v3757 = vadd.f32 %v3708, %v3756
  %v3758 = vpop.f32.mrb[0].mxu0
  %v3759 = vpop.f32.mrb[0].mxu0
  %v3760 = vadd.f32 %v3711, %v3759
  %v3761 = vpop.f32.mrb[0].mxu0
  %3762 = vdwg.mxu0
  %3763 = vmatprep.subr.bf16.mxu0 0
  %3764 = vmatpush1.bf16.msra.mxu0 %v2558
  %3765 = vmatprep.subr.bf16.mxu0 0
  %3766 = vmatpush1.bf16.msra.mxu0 %v2559
  %3767 = vmatprep.subr.bf16.mxu0 0
  %3768 = vmatpush1.bf16.msra.mxu0 %v2560
  %3769 = vmatprep.subr.bf16.mxu0 0
  %3770 = vmatpush1.bf16.msra.mxu0 %v2561
  %3771 = vmatprep.subr.bf16.mxu0 0
  %3772 = vmatpush1.bf16.msra.mxu0 %v2562
  %3773 = vmatprep.subr.bf16.mxu0 0
  %3774 = vmatpush1.bf16.msra.mxu0 %v2563
  %3775 = vmatprep.subr.bf16.mxu0 0
  %3776 = vmatpush1.bf16.msra.mxu0 %v2564
  %3777 = vmatprep.subr.bf16.mxu0 0
  %3778 = vmatpush1.bf16.msra.mxu0 %v2565
  %3779 = vmatprep.subr.bf16.mxu0 0
  %3780 = vmatpush1.bf16.msra.mxu0 %v2566
  %3781 = vmatprep.subr.bf16.mxu0 0
  %3782 = vmatpush1.bf16.msra.mxu0 %v2567
  %3783 = vmatprep.subr.bf16.mxu0 0
  %3784 = vmatpush1.bf16.msra.mxu0 %v2879
  %3785 = vmatprep.subr.bf16.mxu0 0
  %3786 = vmatpush1.bf16.msra.mxu0 0
  %3787 = vmatprep.subr.bf16.mxu0 0
  %3788 = vmatpush1.bf16.msra.mxu0 0
  %3789 = vmatprep.subr.bf16.mxu0 0
  %3790 = vmatpush1.bf16.msra.mxu0 0
  %3791 = vmatprep.subr.bf16.mxu0 0
  %3792 = vmatpush1.bf16.msra.mxu0 0
  %3793 = vmatprep.subr.bf16.mxu0 0
  %3794 = vmatpush1.bf16.msra.mxu0 0
  %3795 = vmatprep.mubr.bf16.mxu0 %v2869
  %3796 = vmatmul.mubr.bf16.gmra.mrb[0].mxu0 %v960
  %v3797 = vpop.f32.mrb[0].mxu0
  %v3798 = vadd.f32 %v3749, %v3797
  %v3799 = vpop.f32.mrb[0].mxu0
  %v3800 = vpop.f32.mrb[0].mxu0
  %v3801 = vadd.f32 %v3752, %v3800
  %v3802 = vpop.f32.mrb[0].mxu0
  %3803 = vmatprep.mubr.bf16.mxu0 %v2872
  %3804 = vmatmul.mubr.bf16.gmra.mrb[0].mxu0 %v998
  %v3805 = vpop.f32.mrb[0].mxu0
  %v3806 = vadd.f32 %v3757, %v3805
  %v3807 = vpop.f32.mrb[0].mxu0
  %v3808 = vpop.f32.mrb[0].mxu0
  %v3809 = vadd.f32 %v3760, %v3808
  %v3810 = vpop.f32.mrb[0].mxu0
  %3811 = vdwg.mxu0
  %vm3812 = vcmask 130048
  %3813 = vst.msk [vmem:[%s3] sm:$0xff] %vm3812, %v3798
  %3814 = vst.msk [vmem:[%s3 + $0x8] sm:$0xff] %vm3812, %v3801
  %3815 = vst.msk [vmem:[%s3 + $0x10] sm:$0xff] %vm3812, %v3806
  %3816 = vst.msk [vmem:[%s3 + $0x18] sm:$0xff] %vm3812, %v3809
  // Predicated region
  $region14: #{tpu_custom_call.1} parent=0 // pred_check
    _
  $region15: #{tpu_custom_call.1} parent=0 // pred_check_branch
    %3818 = sbr.rel (0) target = $region17
  $region16: #{tpu_custom_call.1} parent=0 // pred_region
    _
  $region17: #{tpu_custom_call.1} parent=0 // pred_fallthru
    _
  // Predicated region
  $region18: #{tpu_custom_call.1} parent=0 // pred_check
    _
  $region19: #{tpu_custom_call.1} parent=0 // pred_check_branch
    %3820 = sbr.rel (0) target = $region21
  $region20: #{tpu_custom_call.1} parent=0 // pred_region
    _
  $region21: #{tpu_custom_call.1} parent=0 // pred_fallthru
    _

</llo_original>
